<compile_context>
chip_gen: v7x
topology: tpu7x:2x2x1
jax: 0.10.0
libtpu: 0.0.40
codegen_flags: <defaults>
</compile_context>

<pallas_src>
import functools

import jax
import jax.numpy as jnp
from jax.experimental import pallas as pl
from jax.experimental.pallas import tpu as pltpu

BN_EPS = 1e-5
LANE = 128
# Scoped-VMEM cap: comfortably below v7x's 64 MiB physical, generous for v5e/v6e.
VMEM_LIMIT = 48 * 1024 * 1024


def _round_up(v, m):
    return (v + m - 1) // m * m


# ----------------------------- Pallas kernels ------------------------------ #

def _mm_stats_kernel(a_ref, w_ref, y_ref, sum_ref, sq_ref, acc_ref):
    """Conv+BN pass 1: acc += a @ w over the K grid axis (f32 accumulator scratch).
    At the last K step, store y in bf16 and this M-tile's per-column sum /
    sum-of-squares (replicated across an 8-row band so the output block stays
    sublane-aligned).  No cross-tile sequential accumulation -> M axis is parallel."""
    k = pl.program_id(1)

    @pl.when(k == 0)
    def _init():
        acc_ref[...] = jnp.zeros_like(acc_ref)

    acc_ref[...] += jnp.dot(a_ref[...], w_ref[...],
                            preferred_element_type=jnp.float32)

    @pl.when(k == pl.num_programs(1) - 1)
    def _finalize():
        y = acc_ref[...]
        y_ref[...] = y.astype(y_ref.dtype)
        s = jnp.sum(y, axis=0, keepdims=True)
        q = jnp.sum(y * y, axis=0, keepdims=True)
        sum_ref[...] = jnp.broadcast_to(s, sum_ref.shape)
        sq_ref[...] = jnp.broadcast_to(q, sq_ref.shape)


def _bn_relu_kernel(y_ref, scale_ref, shift_ref, o_ref):
    """Conv+BN pass 2 (pure streaming): o = relu(y * scale + shift) in bf16."""
    z = y_ref[...].astype(jnp.float32) * scale_ref[...] + shift_ref[...]
    o_ref[...] = jnp.maximum(z, 0.0).astype(o_ref.dtype)


def _mm_tanh_kernel(a_ref, w_ref, o_ref):
    """Final layer: o = tanh(a @ w), stored in bf16."""
    y = jnp.dot(a_ref[...], w_ref[...], preferred_element_type=jnp.float32)
    o_ref[...] = jnp.tanh(y).astype(o_ref.dtype)


# --------------------------- pallas_call wrappers --------------------------- #

def _gemm_stats(P, W, tm, tk):
    Mp, Kp = P.shape
    Np = W.shape[1]
    nm, nk = Mp // tm, Kp // tk
    return pl.pallas_call(
        _mm_stats_kernel,
        out_shape=(jax.ShapeDtypeStruct((Mp, Np), jnp.bfloat16),
                   jax.ShapeDtypeStruct((nm * 8, Np), jnp.float32),
                   jax.ShapeDtypeStruct((nm * 8, Np), jnp.float32)),
        grid=(nm, nk),
        in_specs=[pl.BlockSpec((tm, tk), lambda i, k: (i, k)),
                  pl.BlockSpec((tk, Np), lambda i, k: (k, 0))],
        out_specs=(pl.BlockSpec((tm, Np), lambda i, k: (i, 0)),
                   pl.BlockSpec((8, Np), lambda i, k: (i, 0)),
                   pl.BlockSpec((8, Np), lambda i, k: (i, 0))),
        scratch_shapes=[pltpu.VMEM((tm, Np), jnp.float32)],
        compiler_params=pltpu.CompilerParams(
            dimension_semantics=("parallel", "arbitrary"),  # M shards across cores
            vmem_limit_bytes=VMEM_LIMIT),
        cost_estimate=pl.CostEstimate(
            flops=2 * Mp * Kp * Np, transcendentals=0,
            bytes_accessed=Mp * Kp * 2 + Kp * Np * 2 + Mp * Np * 2),
    )(P, W)


def _bn_relu_apply(y, scale, shift, tm_bn):
    Mp, Np = y.shape
    return pl.pallas_call(
        _bn_relu_kernel,
        out_shape=jax.ShapeDtypeStruct((Mp, Np), jnp.bfloat16),
        grid=(Mp // tm_bn,),
        in_specs=[pl.BlockSpec((tm_bn, Np), lambda i: (i, 0)),
                  pl.BlockSpec((1, Np), lambda i: (0, 0)),
                  pl.BlockSpec((1, Np), lambda i: (0, 0))],
        out_specs=pl.BlockSpec((tm_bn, Np), lambda i: (i, 0)),
        compiler_params=pltpu.CompilerParams(
            dimension_semantics=("parallel",),
            vmem_limit_bytes=VMEM_LIMIT),
    )(y, scale, shift)


def _gemm_tanh(P, W, tm):
    # Final layer only: K = 9*ngf is small by construction, so no K tiling needed.
    Mp, Kp = P.shape
    Np = W.shape[1]
    return pl.pallas_call(
        _mm_tanh_kernel,
        out_shape=jax.ShapeDtypeStruct((Mp, Np), jnp.bfloat16),
        grid=(Mp // tm,),
        in_specs=[pl.BlockSpec((tm, Kp), lambda i: (i, 0)),
                  pl.BlockSpec((Kp, Np), lambda i: (0, 0))],
        out_specs=pl.BlockSpec((tm, Np), lambda i: (i, 0)),
        compiler_params=pltpu.CompilerParams(
            dimension_semantics=("parallel",),
            vmem_limit_bytes=VMEM_LIMIT),
        cost_estimate=pl.CostEstimate(
            flops=2 * Mp * Kp * Np, transcendentals=Mp * Np,
            bytes_accessed=Mp * Kp * 2 + Kp * Np * 2 + Mp * Np * 2),
    )(P, W)


# --------------------------------- Glue ------------------------------------ #

def _pad2(a, rows, cols):
    return jnp.pad(a, ((0, rows - a.shape[0]), (0, cols - a.shape[1])))


def _im2col_s1(xp, k):
    """Stride-1 im2col: (B,Hp,Wp,C) -> (B*Ho*Wo, k*k*C), tap-major / channel-minor."""
    B, Hp, Wp, C = xp.shape
    Ho, Wo = Hp - k + 1, Wp - k + 1
    cols = []
    for dh in range(k):
        for dw in range(k):
            cols.append(xp[:, dh:dh + Ho, dw:dw + Wo, :])
    patches = jnp.stack(cols, axis=3)              # (B, Ho, Wo, k*k, C)
    return patches.reshape(B * Ho * Wo, k * k * C), Ho, Wo


def _subpixel_weight(w_ct):
    """ConvTranspose2d(k=4, s=2, p=1) weight (Cin,Cout,4,4) -> (9*Cin, 4*Cout) for the
    4-phase sub-pixel decomposition: output phase (ph,pw) of macro-pixel (oy,ox) is a
    2x2-tap stride-1 conv over the 1-padded input, taps living inside a shared 3x3
    window with kernel indices kh = 3-ph-2a, kw = 3-pw-2b."""
    Cin, Cout, _, _ = w_ct.shape
    Wc = jnp.zeros((3, 3, Cin, 2, 2, Cout), w_ct.dtype)
    for ph in range(2):
        for pw in range(2):
            for a in range(2):
                for b in range(2):
                    Wc = Wc.at[ph + a, pw + b, :, ph, pw, :].set(
                        w_ct[:, :, 3 - ph - 2 * a, 3 - pw - 2 * b])
    return Wc.reshape(9 * Cin, 4 * Cout)


def _gemm_shapes(M, K, N, tm, tk_max):
    tm_eff = min(_round_up(max(tm, 8), 64), _round_up(M, 64))
    Mp = _round_up(M, tm_eff)
    Kp = _round_up(K, LANE)
    tk_cap = _round_up(max(tk_max, LANE), LANE)
    nk = max(1, -(-Kp // tk_cap))
    tk = _round_up(-(-Kp // nk), LANE)
    Kp = nk * tk
    Np = _round_up(N, LANE)
    return Mp, Kp, Np, tm_eff, tk


def _pick_bn_tile(Mp, tm, Np, max_bytes=8 * 1024 * 1024):
    """Largest multiple of tm dividing Mp with rows <= 2048 and a bf16 block under
    max_bytes: pass 2 is pure streaming, so bigger blocks -> better HBM roofline."""
    n = Mp // tm
    cap_rows = max(tm, min(2048, max_bytes // max(1, 2 * Np)))
    for k in range(n, 0, -1):
        if n % k == 0 and k * tm <= cap_rows:
            return k * tm
    return tm


def _conv_bn_relu_gemm(P, Wm, gamma, beta, groups, tm, tk_max):
    """P (M,K) @ Wm (K, groups*Cout) + per-channel training-mode BatchNorm (biased
    variance, eps=1e-5) + ReLU, where each channel occupies `groups` output columns
    (phase / kernel-tap groups sharing the channel's statistics)."""
    M, K = P.shape
    N = Wm.shape[1]
    cout = N // groups
    Mp, Kp, Np, tm_eff, tk = _gemm_shapes(M, K, N, tm, tk_max)
    Pb = _pad2(P, Mp, Kp).astype(jnp.bfloat16)
    Wb = _pad2(Wm, Kp, Np).astype(jnp.bfloat16)
    y, sums, sqs = _gemm_stats(Pb, Wb, tm_eff, tk)

    # Tiny cross-tile / cross-group stats combine + scale/shift (plain JAX, O(N) work).
    col_sum = jnp.sum(sums[::8, :N], axis=0)
    col_sq = jnp.sum(sqs[::8, :N], axis=0)
    count = float(M * groups)                               # real elements per channel
    mean = col_sum.reshape(groups, cout).sum(0) / count
    ex2 = col_sq.reshape(groups, cout).sum(0) / count
    var = jnp.maximum(ex2 - mean * mean, 0.0)               # biased var (PyTorch BN)
    scale_c = gamma.astype(jnp.float32) * jax.lax.rsqrt(var + BN_EPS)
    shift_c = beta.astype(jnp.float32) - mean * scale_c
    scale = _pad2(jnp.tile(scale_c, groups).reshape(1, N), 1, Np)
    shift = _pad2(jnp.tile(shift_c, groups).reshape(1, N), 1, Np)

    a = _bn_relu_apply(y, scale, shift, _pick_bn_tile(Mp, tm_eff, Np))
    if Mp == M and Np == N:
        return a
    return a[:M, :N]


# ------------------------------- Layer types -------------------------------- #

def _initial_convT_bn_relu(x, w_ct, gamma, beta, tm, tk_max):
    """ConvTranspose2d(nz, cngf, 4, stride=1, padding=0) on a 1x1 input == one matmul
    X (B,nz) @ W (nz, 4*4*cngf); the 16 spatial taps act as channel-stat groups."""
    B = x.shape[0]
    nz, cout = w_ct.shape[0], w_ct.shape[1]
    X = x.reshape(B, nz)
    Wm = jnp.transpose(w_ct, (0, 2, 3, 1)).reshape(nz, 16 * cout)
    y = _conv_bn_relu_gemm(X, Wm, gamma, beta, groups=16, tm=tm, tk_max=tk_max)
    return y.reshape(B, 4, 4, cout)


def _convT_s2_bn_relu(x, w_ct, gamma, beta, tm, tk_max):
    """ConvTranspose2d(k=4, s=2, p=1) + BN + ReLU via 4-phase sub-pixel GEMM."""
    B, H, W, _ = x.shape
    cout = w_ct.shape[1]
    xp = jnp.pad(x, ((0, 0), (1, 1), (1, 1), (0, 0)))
    P, _, _ = _im2col_s1(xp, 3)                    # (B*H*W, 9*Cin)
    Wm = _subpixel_weight(w_ct)                    # (9*Cin, 4*Cout)
    y = _conv_bn_relu_gemm(P, Wm, gamma, beta, groups=4, tm=tm, tk_max=tk_max)
    y = y.reshape(B, H, W, 2, 2, cout)             # depth-to-space
    return jnp.transpose(y, (0, 1, 3, 2, 4, 5)).reshape(B, 2 * H, 2 * W, cout)


def _conv3x3_bn_relu(x, w, gamma, beta, tm, tk_max):
    """Regular Conv2d(3, stride=1, pad=1) + BN + ReLU (the optional 'extra layers')."""
    B, H, W, cin = x.shape
    cout = w.shape[0]
    xp = jnp.pad(x, ((0, 0), (1, 1), (1, 1), (0, 0)))
    P, _, _ = _im2col_s1(xp, 3)
    Wm = jnp.transpose(w, (2, 3, 1, 0)).reshape(9 * cin, cout)
    y = _conv_bn_relu_gemm(P, Wm, gamma, beta, groups=1, tm=tm, tk_max=tk_max)
    return y.reshape(B, H, W, cout)


def _convT_s2_tanh(x, w_ct, tm):
    """Final ConvTranspose2d(k=4, s=2, p=1) + tanh via the same 4-phase GEMM."""
    B, H, W, _ = x.shape
    cout = w_ct.shape[1]
    xp = jnp.pad(x, ((0, 0), (1, 1), (1, 1), (0, 0)))
    P, _, _ = _im2col_s1(xp, 3)
    Wm = _subpixel_weight(w_ct)
    M, K = P.shape
    N = Wm.shape[1]
    Mp, Kp, Np, tm_eff, _ = _gemm_shapes(M, K, N, tm, tk_max=1 << 30)
    Pb = _pad2(P, Mp, Kp).astype(jnp.bfloat16)
    Wb = _pad2(Wm, Kp, Np).astype(jnp.bfloat16)
    y = _gemm_tanh(Pb, Wb, tm_eff)[:M, :N]
    y = y.reshape(B, H, W, 2, 2, cout)
    return jnp.transpose(y, (0, 1, 3, 2, 4, 5)).reshape(B, 2 * H, 2 * W, cout)


# ------------------------------ Decoder model ------------------------------ #

def init_decoder_params(key, isize, nz, nc, ngf, n_extra_layers=0):
    """Deterministic DCGAN-style init (normal std=0.02); BN gamma=1, beta=0."""
    assert isize % 16 == 0, "isize has to be a multiple of 16"
    cngf, tisize = ngf // 2, 4
    while tisize != isize:
        cngf *= 2
        tisize *= 2

    keys = iter(jax.random.split(key, 64))
    norm = lambda k_, s: 0.02 * jax.random.normal(k_, s, jnp.float32)

    params = {
        "initial": {"w": norm(next(keys), (nz, cngf, 4, 4)),
                    "gamma": jnp.ones((cngf,), jnp.float32),
                    "beta": jnp.zeros((cngf,), jnp.float32)},
        "pyramid": [],
        "extra": [],
    }
    csize, c = 4, cngf
    while csize < isize // 2:
        params["pyramid"].append(
            {"w": norm(next(keys), (c, c // 2, 4, 4)),
             "gamma": jnp.ones((c // 2,), jnp.float32),
             "beta": jnp.zeros((c // 2,), jnp.float32)})
        c //= 2
        csize *= 2
    for _ in range(n_extra_layers):
        params["extra"].append(
            {"w": norm(next(keys), (c, c, 3, 3)),
             "gamma": jnp.ones((c,), jnp.float32),
             "beta": jnp.zeros((c,), jnp.float32)})
    params["final"] = {"w": norm(next(keys), (c, nc, 4, 4))}
    return params


def decoder_forward(x_nchw, params, tm=256, tk_max=2048):
    """DCGAN Decoder forward: (B, nz, 1, 1) -> (B, nc, isize, isize), tanh output.

    BatchNorm uses PyTorch-default training-mode batch statistics (biased variance,
    eps=1e-5).  MXU matmul operands are bf16; accumulation / statistics are f32.
    """
    # TODO(synk): the ngpu>1 nn.parallel.data_parallel branch is a multi-GPU dispatch
    # detail with no Pallas equivalent; single-device path implemented.
    x = jnp.transpose(x_nchw, (0, 2, 3, 1)).astype(jnp.bfloat16)    # NCHW -> NHWC

    p = params["initial"]
    x = _initial_convT_bn_relu(x, p["w"], p["gamma"], p["beta"], tm, tk_max)
    for p in params["pyramid"]:
        x = _convT_s2_bn_relu(x, p["w"], p["gamma"], p["beta"], tm, tk_max)
    for p in params["extra"]:
        x = _conv3x3_bn_relu(x, p["w"], p["gamma"], p["beta"], tm, tk_max)
    y = _convT_s2_tanh(x, params["final"]["w"], tm)
    return jnp.transpose(y, (0, 3, 1, 2)).astype(jnp.float32)       # NHWC -> NCHW


# --------------------------------- Main ------------------------------------ #

if __name__ == "__main__":
    B, isize, nz, nc, ngf = 2, 16, 8, 3, 8

    key = jax.random.PRNGKey(0)
    kx, kp = jax.random.split(key)
    x = jax.random.normal(kx, (B, nz, 1, 1), jnp.float32)
    params = init_decoder_params(kp, isize, nz, nc, ngf, n_extra_layers=1)

    # Small tm / tk_max so the multi-M-tile and K-tiled (multi-step accumulator) GEMM
    # paths are exercised at these toy shapes; use tm=256-512, tk_max=1024-2048 for
    # realistic sizes.
    fwd = jax.jit(functools.partial(decoder_forward, params=params, tm=64, tk_max=128))
    out = fwd(x)
    jax.block_until_ready(out)

    assert out.shape == (B, nc, isize, isize), out.shape
    assert out.dtype == jnp.float32, out.dtype
    assert bool(jnp.all(jnp.isfinite(out)))
    assert bool(jnp.all(jnp.abs(out) <= 1.0))
    print("KERNEL_OK")
</pallas_src>

<mosaic_0001>
module attributes {stable_mosaic.version = 11 : i64} {
  func.func @_mm_stats_kernel(%arg0: i32, %arg1: i32, %arg2: memref<64x128xbf16, #tpu.memory_space<vmem>>, %arg3: memref<128x256xbf16, #tpu.memory_space<vmem>>, %arg4: memref<64x256xbf16, #tpu.memory_space<vmem>>, %arg5: memref<8x256xf32, #tpu.memory_space<vmem>>, %arg6: memref<8x256xf32, #tpu.memory_space<vmem>>, %arg7: memref<64x256xf32, #tpu.memory_space<vmem>>) attributes {dimension_semantics = [#tpu.dimension_semantics<parallel>, #tpu.dimension_semantics<arbitrary>], iteration_bounds = array<i64: 1, 1>, scalar_prefetch = 0 : i64, scratch_operands = 1 : i64, tpu.core_type = #tpu.core_type<tc>, window_params = [{transform_indices = @transform_0, window_bounds = array<i64: 64, 128>}, {transform_indices = @transform_1, window_bounds = array<i64: 128, 256>}, {transform_indices = @transform_2, window_bounds = array<i64: 64, 256>}, {transform_indices = @transform_3, window_bounds = array<i64: 8, 256>}, {transform_indices = @transform_4, window_bounds = array<i64: 8, 256>}]} {
    %c0_i32 = arith.constant 0 : i32
    %0 = arith.cmpi eq, %arg1, %c0_i32 : i32
    %1 = arith.extui %0 : i1 to i32
    %c0_i32_0 = arith.constant 0 : i32
    %2 = arith.cmpi ne, %1, %c0_i32_0 : i32
    scf.if %2 {
      %cst_10 = arith.constant 0.000000e+00 : f32
      %12 = vector.broadcast %cst_10 : f32 to vector<64x256xf32>
      %c0_11 = arith.constant 0 : index
      %c0_12 = arith.constant 0 : index
      %13 = vector.load %arg7[%c0_11, %c0_12] : memref<64x256xf32, #tpu.memory_space<vmem>>, vector<64x256xf32>
      tpu.vector_store %arg7[%c0_11, %c0_12], %12 {strides = array<i32>} : memref<64x256xf32, #tpu.memory_space<vmem>>, vector<64x256xf32>,
    } else {
    }
    %c0 = arith.constant 0 : index
    %c0_1 = arith.constant 0 : index
    %3 = vector.load %arg7[%c0, %c0_1] : memref<64x256xf32, #tpu.memory_space<vmem>>, vector<64x256xf32>
    %c0_2 = arith.constant 0 : index
    %c0_3 = arith.constant 0 : index
    %4 = vector.load %arg2[%c0_2, %c0_3] : memref<64x128xbf16, #tpu.memory_space<vmem>>, vector<64x128xbf16>
    %c0_4 = arith.constant 0 : index
    %c0_5 = arith.constant 0 : index
    %5 = vector.load %arg3[%c0_4, %c0_5] : memref<128x256xbf16, #tpu.memory_space<vmem>>, vector<128x256xbf16>
    %cst = arith.constant dense<0.000000e+00> : vector<64x256xf32>
    %6 = tpu.matmul %4, %5, %cst {dimension_numbers = #tpu.dot_dimension_numbers<[1], [0], [0], [1], [0, 0, 1, 1], [], []>} : vector<64x128xbf16>, vector<128x256xbf16>, vector<64x256xf32> -> vector<64x256xf32>
    %7 = arith.addf %3, %6 : vector<64x256xf32>
    %c0_6 = arith.constant 0 : index
    %c0_7 = arith.constant 0 : index
    %8 = vector.load %arg7[%c0_6, %c0_7] : memref<64x256xf32, #tpu.memory_space<vmem>>, vector<64x256xf32>
    tpu.vector_store %arg7[%c0_6, %c0_7], %7 {strides = array<i32>} : memref<64x256xf32, #tpu.memory_space<vmem>>, vector<64x256xf32>,
    %c0_i32_8 = arith.constant 0 : i32
    %9 = arith.cmpi eq, %arg1, %c0_i32_8 : i32
    %10 = arith.extui %9 : i1 to i32
    %c0_i32_9 = arith.constant 0 : i32
    %11 = arith.cmpi ne, %10, %c0_i32_9 : i32
    scf.if %11 {
      %c0_10 = arith.constant 0 : index
      %c0_11 = arith.constant 0 : index
      %12 = vector.load %arg7[%c0_10, %c0_11] : memref<64x256xf32, #tpu.memory_space<vmem>>, vector<64x256xf32>
      %13 = arith.truncf %12 : vector<64x256xf32> to vector<64x256xbf16>
      %c0_12 = arith.constant 0 : index
      %c0_13 = arith.constant 0 : index
      %14 = vector.load %arg4[%c0_12, %c0_13] : memref<64x256xbf16, #tpu.memory_space<vmem>>, vector<64x256xbf16>
      tpu.vector_store %arg4[%c0_12, %c0_13], %13 {strides = array<i32>} : memref<64x256xbf16, #tpu.memory_space<vmem>>, vector<64x256xbf16>,
      %cst_14 = arith.constant dense<0.000000e+00> : vector<256xf32>
      %15 = vector.multi_reduction <add>, %12, %cst_14 [0] : vector<64x256xf32> to vector<256xf32>
      %16 = vector.shape_cast %15 : vector<256xf32> to vector<1x256xf32>
      %17 = arith.mulf %12, %12 : vector<64x256xf32>
      %cst_15 = arith.constant dense<0.000000e+00> : vector<256xf32>
      %18 = vector.multi_reduction <add>, %17, %cst_15 [0] : vector<64x256xf32> to vector<256xf32>
      %19 = vector.shape_cast %18 : vector<256xf32> to vector<1x256xf32>
      %20 = vector.shape_cast %16 : vector<1x256xf32> to vector<1x256xf32>
      %21 = vector.broadcast %20 : vector<1x256xf32> to vector<8x256xf32>
      %c0_16 = arith.constant 0 : index
      %c0_17 = arith.constant 0 : index
      %22 = vector.load %arg5[%c0_16, %c0_17] : memref<8x256xf32, #tpu.memory_space<vmem>>, vector<8x256xf32>
      tpu.vector_store %arg5[%c0_16, %c0_17], %21 {strides = array<i32>} : memref<8x256xf32, #tpu.memory_space<vmem>>, vector<8x256xf32>,
      %23 = vector.shape_cast %19 : vector<1x256xf32> to vector<1x256xf32>
      %24 = vector.broadcast %23 : vector<1x256xf32> to vector<8x256xf32>
      %c0_18 = arith.constant 0 : index
      %c0_19 = arith.constant 0 : index
      %25 = vector.load %arg6[%c0_18, %c0_19] : memref<8x256xf32, #tpu.memory_space<vmem>>, vector<8x256xf32>
      tpu.vector_store %arg6[%c0_18, %c0_19], %24 {strides = array<i32>} : memref<8x256xf32, #tpu.memory_space<vmem>>, vector<8x256xf32>,
    } else {
    }
    return
  }
  func.func @transform_0(%arg0: i32, %arg1: i32) -> (i32, i32) {
    %c0_i32 = arith.constant 0 : i32
    return %arg0, %arg1 : i32, i32
  }
  func.func @transform_1(%arg0: i32, %arg1: i32) -> (i32, i32) {
    %c0_i32 = arith.constant 0 : i32
    %c0_i32_0 = arith.constant 0 : i32
    return %arg1, %c0_i32 : i32, i32
  }
  func.func @transform_2(%arg0: i32, %arg1: i32) -> (i32, i32) {
    %c0_i32 = arith.constant 0 : i32
    %c0_i32_0 = arith.constant 0 : i32
    return %arg0, %c0_i32 : i32, i32
  }
  func.func @transform_3(%arg0: i32, %arg1: i32) -> (i32, i32) {
    %c0_i32 = arith.constant 0 : i32
    %c0_i32_0 = arith.constant 0 : i32
    return %arg0, %c0_i32 : i32, i32
  }
  func.func @transform_4(%arg0: i32, %arg1: i32) -> (i32, i32) {
    %c0_i32 = arith.constant 0 : i32
    %c0_i32_0 = arith.constant 0 : i32
    return %arg0, %c0_i32 : i32, i32
  }
}

module attributes {stable_mosaic.version = 11 : i64} {
  func.func @_bn_relu_kernel(%arg0: i32, %arg1: memref<64x256xbf16, #tpu.memory_space<vmem>>, %arg2: memref<1x256xf32, #tpu.memory_space<vmem>>, %arg3: memref<1x256xf32, #tpu.memory_space<vmem>>, %arg4: memref<64x256xbf16, #tpu.memory_space<vmem>>) attributes {dimension_semantics = [#tpu.dimension_semantics<parallel>], iteration_bounds = array<i64: 1>, scalar_prefetch = 0 : i64, scratch_operands = 0 : i64, tpu.core_type = #tpu.core_type<tc>, window_params = [{transform_indices = @transform_0, window_bounds = array<i64: 64, 256>}, {pipeline_mode = #tpu.pipeline_mode<synchronous>, transform_indices = @transform_1, window_bounds = array<i64: 1, 256>}, {pipeline_mode = #tpu.pipeline_mode<synchronous>, transform_indices = @transform_2, window_bounds = array<i64: 1, 256>}, {transform_indices = @transform_3, window_bounds = array<i64: 64, 256>}]} {
    %c0 = arith.constant 0 : index
    %c0_0 = arith.constant 0 : index
    %0 = vector.load %arg1[%c0, %c0_0] : memref<64x256xbf16, #tpu.memory_space<vmem>>, vector<64x256xbf16>
    %1 = arith.extf %0 : vector<64x256xbf16> to vector<64x256xf32>
    %c0_1 = arith.constant 0 : index
    %c0_2 = arith.constant 0 : index
    %2 = vector.load %arg2[%c0_1, %c0_2] : memref<1x256xf32, #tpu.memory_space<vmem>>, vector<1x256xf32>
    %3 = vector.broadcast %2 : vector<1x256xf32> to vector<64x256xf32>
    %4 = arith.mulf %1, %3 : vector<64x256xf32>
    %c0_3 = arith.constant 0 : index
    %c0_4 = arith.constant 0 : index
    %5 = vector.load %arg3[%c0_3, %c0_4] : memref<1x256xf32, #tpu.memory_space<vmem>>, vector<1x256xf32>
    %6 = vector.broadcast %5 : vector<1x256xf32> to vector<64x256xf32>
    %7 = arith.addf %4, %6 : vector<64x256xf32>
    %cst = arith.constant 0.000000e+00 : f32
    %8 = vector.broadcast %cst : f32 to vector<64x256xf32>
    %9 = arith.maximumf %7, %8 : vector<64x256xf32>
    %10 = arith.truncf %9 : vector<64x256xf32> to vector<64x256xbf16>
    %c0_5 = arith.constant 0 : index
    %c0_6 = arith.constant 0 : index
    %11 = vector.load %arg4[%c0_5, %c0_6] : memref<64x256xbf16, #tpu.memory_space<vmem>>, vector<64x256xbf16>
    tpu.vector_store %arg4[%c0_5, %c0_6], %10 {strides = array<i32>} : memref<64x256xbf16, #tpu.memory_space<vmem>>, vector<64x256xbf16>,
    return
  }
  func.func @transform_0(%arg0: i32) -> (i32, i32) {
    %c0_i32 = arith.constant 0 : i32
    %c0_i32_0 = arith.constant 0 : i32
    return %arg0, %c0_i32 : i32, i32
  }
  func.func @transform_1(%arg0: i32) -> (i32, i32) {
    %c0_i32 = arith.constant 0 : i32
    %c0_i32_0 = arith.constant 0 : i32
    %c0_i32_1 = arith.constant 0 : i32
    return %c0_i32, %c0_i32_0 : i32, i32
  }
  func.func @transform_2(%arg0: i32) -> (i32, i32) {
    %c0_i32 = arith.constant 0 : i32
    %c0_i32_0 = arith.constant 0 : i32
    %c0_i32_1 = arith.constant 0 : i32
    return %c0_i32, %c0_i32_0 : i32, i32
  }
  func.func @transform_3(%arg0: i32) -> (i32, i32) {
    %c0_i32 = arith.constant 0 : i32
    %c0_i32_0 = arith.constant 0 : i32
    return %arg0, %c0_i32 : i32, i32
  }
}

module attributes {stable_mosaic.version = 11 : i64} {
  func.func @_mm_stats_kernel(%arg0: i32, %arg1: i32, %arg2: memref<64x128xbf16, #tpu.memory_space<vmem>>, %arg3: memref<128x128xbf16, #tpu.memory_space<vmem>>, %arg4: memref<64x128xbf16, #tpu.memory_space<vmem>>, %arg5: memref<8x128xf32, #tpu.memory_space<vmem>>, %arg6: memref<8x128xf32, #tpu.memory_space<vmem>>, %arg7: memref<64x128xf32, #tpu.memory_space<vmem>>) attributes {dimension_semantics = [#tpu.dimension_semantics<parallel>, #tpu.dimension_semantics<arbitrary>], iteration_bounds = array<i64: 1, 2>, scalar_prefetch = 0 : i64, scratch_operands = 1 : i64, tpu.core_type = #tpu.core_type<tc>, window_params = [{transform_indices = @transform_0, window_bounds = array<i64: 64, 128>}, {transform_indices = @transform_1, window_bounds = array<i64: 128, 128>}, {transform_indices = @transform_2, window_bounds = array<i64: 64, 128>}, {transform_indices = @transform_3, window_bounds = array<i64: 8, 128>}, {transform_indices = @transform_4, window_bounds = array<i64: 8, 128>}]} {
    %c0_i32 = arith.constant 0 : i32
    %0 = arith.cmpi eq, %arg1, %c0_i32 : i32
    %1 = arith.extui %0 : i1 to i32
    %c0_i32_0 = arith.constant 0 : i32
    %2 = arith.cmpi ne, %1, %c0_i32_0 : i32
    scf.if %2 {
      %cst_9 = arith.constant 0.000000e+00 : f32
      %12 = vector.broadcast %cst_9 : f32 to vector<64x128xf32>
      %c0_10 = arith.constant 0 : index
      %c0_11 = arith.constant 0 : index
      %13 = vector.load %arg7[%c0_10, %c0_11] : memref<64x128xf32, #tpu.memory_space<vmem>>, vector<64x128xf32>
      tpu.vector_store %arg7[%c0_10, %c0_11], %12 {strides = array<i32>} : memref<64x128xf32, #tpu.memory_space<vmem>>, vector<64x128xf32>,
    } else {
    }
    %c0 = arith.constant 0 : index
    %c0_1 = arith.constant 0 : index
    %3 = vector.load %arg7[%c0, %c0_1] : memref<64x128xf32, #tpu.memory_space<vmem>>, vector<64x128xf32>
    %c0_2 = arith.constant 0 : index
    %c0_3 = arith.constant 0 : index
    %4 = vector.load %arg2[%c0_2, %c0_3] : memref<64x128xbf16, #tpu.memory_space<vmem>>, vector<64x128xbf16>
    %c0_4 = arith.constant 0 : index
    %c0_5 = arith.constant 0 : index
    %5 = vector.load %arg3[%c0_4, %c0_5] : memref<128x128xbf16, #tpu.memory_space<vmem>>, vector<128x128xbf16>
    %cst = arith.constant dense<0.000000e+00> : vector<64x128xf32>
    %6 = tpu.matmul %4, %5, %cst {dimension_numbers = #tpu.dot_dimension_numbers<[1], [0], [0], [1], [0, 0, 1, 1], [], []>} : vector<64x128xbf16>, vector<128x128xbf16>, vector<64x128xf32> -> vector<64x128xf32>
    %7 = arith.addf %3, %6 : vector<64x128xf32>
    %c0_6 = arith.constant 0 : index
    %c0_7 = arith.constant 0 : index
    %8 = vector.load %arg7[%c0_6, %c0_7] : memref<64x128xf32, #tpu.memory_space<vmem>>, vector<64x128xf32>
    tpu.vector_store %arg7[%c0_6, %c0_7], %7 {strides = array<i32>} : memref<64x128xf32, #tpu.memory_space<vmem>>, vector<64x128xf32>,
    %c1_i32 = arith.constant 1 : i32
    %9 = arith.cmpi eq, %arg1, %c1_i32 : i32
    %10 = arith.extui %9 : i1 to i32
    %c0_i32_8 = arith.constant 0 : i32
    %11 = arith.cmpi ne, %10, %c0_i32_8 : i32
    scf.if %11 {
      %c0_9 = arith.constant 0 : index
      %c0_10 = arith.constant 0 : index
      %12 = vector.load %arg7[%c0_9, %c0_10] : memref<64x128xf32, #tpu.memory_space<vmem>>, vector<64x128xf32>
      %13 = arith.truncf %12 : vector<64x128xf32> to vector<64x128xbf16>
      %c0_11 = arith.constant 0 : index
      %c0_12 = arith.constant 0 : index
      %14 = vector.load %arg4[%c0_11, %c0_12] : memref<64x128xbf16, #tpu.memory_space<vmem>>, vector<64x128xbf16>
      tpu.vector_store %arg4[%c0_11, %c0_12], %13 {strides = array<i32>} : memref<64x128xbf16, #tpu.memory_space<vmem>>, vector<64x128xbf16>,
      %cst_13 = arith.constant dense<0.000000e+00> : vector<128xf32>
      %15 = vector.multi_reduction <add>, %12, %cst_13 [0] : vector<64x128xf32> to vector<128xf32>
      %16 = vector.shape_cast %15 : vector<128xf32> to vector<1x128xf32>
      %17 = arith.mulf %12, %12 : vector<64x128xf32>
      %cst_14 = arith.constant dense<0.000000e+00> : vector<128xf32>
      %18 = vector.multi_reduction <add>, %17, %cst_14 [0] : vector<64x128xf32> to vector<128xf32>
      %19 = vector.shape_cast %18 : vector<128xf32> to vector<1x128xf32>
      %20 = vector.shape_cast %16 : vector<1x128xf32> to vector<1x128xf32>
      %21 = vector.broadcast %20 : vector<1x128xf32> to vector<8x128xf32>
      %c0_15 = arith.constant 0 : index
      %c0_16 = arith.constant 0 : index
      %22 = vector.load %arg5[%c0_15, %c0_16] : memref<8x128xf32, #tpu.memory_space<vmem>>, vector<8x128xf32>
      tpu.vector_store %arg5[%c0_15, %c0_16], %21 {strides = array<i32>} : memref<8x128xf32, #tpu.memory_space<vmem>>, vector<8x128xf32>,
      %23 = vector.shape_cast %19 : vector<1x128xf32> to vector<1x128xf32>
      %24 = vector.broadcast %23 : vector<1x128xf32> to vector<8x128xf32>
      %c0_17 = arith.constant 0 : index
      %c0_18 = arith.constant 0 : index
      %25 = vector.load %arg6[%c0_17, %c0_18] : memref<8x128xf32, #tpu.memory_space<vmem>>, vector<8x128xf32>
      tpu.vector_store %arg6[%c0_17, %c0_18], %24 {strides = array<i32>} : memref<8x128xf32, #tpu.memory_space<vmem>>, vector<8x128xf32>,
    } else {
    }
    return
  }
  func.func @transform_0(%arg0: i32, %arg1: i32) -> (i32, i32) {
    %c0_i32 = arith.constant 0 : i32
    return %arg0, %arg1 : i32, i32
  }
  func.func @transform_1(%arg0: i32, %arg1: i32) -> (i32, i32) {
    %c0_i32 = arith.constant 0 : i32
    %c0_i32_0 = arith.constant 0 : i32
    return %arg1, %c0_i32 : i32, i32
  }
  func.func @transform_2(%arg0: i32, %arg1: i32) -> (i32, i32) {
    %c0_i32 = arith.constant 0 : i32
    %c0_i32_0 = arith.constant 0 : i32
    return %arg0, %c0_i32 : i32, i32
  }
  func.func @transform_3(%arg0: i32, %arg1: i32) -> (i32, i32) {
    %c0_i32 = arith.constant 0 : i32
    %c0_i32_0 = arith.constant 0 : i32
    return %arg0, %c0_i32 : i32, i32
  }
  func.func @transform_4(%arg0: i32, %arg1: i32) -> (i32, i32) {
    %c0_i32 = arith.constant 0 : i32
    %c0_i32_0 = arith.constant 0 : i32
    return %arg0, %c0_i32 : i32, i32
  }
}

module attributes {stable_mosaic.version = 11 : i64} {
  func.func @_bn_relu_kernel(%arg0: i32, %arg1: memref<64x128xbf16, #tpu.memory_space<vmem>>, %arg2: memref<1x128xf32, #tpu.memory_space<vmem>>, %arg3: memref<1x128xf32, #tpu.memory_space<vmem>>, %arg4: memref<64x128xbf16, #tpu.memory_space<vmem>>) attributes {dimension_semantics = [#tpu.dimension_semantics<parallel>], iteration_bounds = array<i64: 1>, scalar_prefetch = 0 : i64, scratch_operands = 0 : i64, tpu.core_type = #tpu.core_type<tc>, window_params = [{transform_indices = @transform_0, window_bounds = array<i64: 64, 128>}, {pipeline_mode = #tpu.pipeline_mode<synchronous>, transform_indices = @transform_1, window_bounds = array<i64: 1, 128>}, {pipeline_mode = #tpu.pipeline_mode<synchronous>, transform_indices = @transform_2, window_bounds = array<i64: 1, 128>}, {transform_indices = @transform_3, window_bounds = array<i64: 64, 128>}]} {
    %c0 = arith.constant 0 : index
    %c0_0 = arith.constant 0 : index
    %0 = vector.load %arg1[%c0, %c0_0] : memref<64x128xbf16, #tpu.memory_space<vmem>>, vector<64x128xbf16>
    %1 = arith.extf %0 : vector<64x128xbf16> to vector<64x128xf32>
    %c0_1 = arith.constant 0 : index
    %c0_2 = arith.constant 0 : index
    %2 = vector.load %arg2[%c0_1, %c0_2] : memref<1x128xf32, #tpu.memory_space<vmem>>, vector<1x128xf32>
    %3 = vector.broadcast %2 : vector<1x128xf32> to vector<64x128xf32>
    %4 = arith.mulf %1, %3 : vector<64x128xf32>
    %c0_3 = arith.constant 0 : index
    %c0_4 = arith.constant 0 : index
    %5 = vector.load %arg3[%c0_3, %c0_4] : memref<1x128xf32, #tpu.memory_space<vmem>>, vector<1x128xf32>
    %6 = vector.broadcast %5 : vector<1x128xf32> to vector<64x128xf32>
    %7 = arith.addf %4, %6 : vector<64x128xf32>
    %cst = arith.constant 0.000000e+00 : f32
    %8 = vector.broadcast %cst : f32 to vector<64x128xf32>
    %9 = arith.maximumf %7, %8 : vector<64x128xf32>
    %10 = arith.truncf %9 : vector<64x128xf32> to vector<64x128xbf16>
    %c0_5 = arith.constant 0 : index
    %c0_6 = arith.constant 0 : index
    %11 = vector.load %arg4[%c0_5, %c0_6] : memref<64x128xbf16, #tpu.memory_space<vmem>>, vector<64x128xbf16>
    tpu.vector_store %arg4[%c0_5, %c0_6], %10 {strides = array<i32>} : memref<64x128xbf16, #tpu.memory_space<vmem>>, vector<64x128xbf16>,
    return
  }
  func.func @transform_0(%arg0: i32) -> (i32, i32) {
    %c0_i32 = arith.constant 0 : i32
    %c0_i32_0 = arith.constant 0 : i32
    return %arg0, %c0_i32 : i32, i32
  }
  func.func @transform_1(%arg0: i32) -> (i32, i32) {
    %c0_i32 = arith.constant 0 : i32
    %c0_i32_0 = arith.constant 0 : i32
    %c0_i32_1 = arith.constant 0 : i32
    return %c0_i32, %c0_i32_0 : i32, i32
  }
  func.func @transform_2(%arg0: i32) -> (i32, i32) {
    %c0_i32 = arith.constant 0 : i32
    %c0_i32_0 = arith.constant 0 : i32
    %c0_i32_1 = arith.constant 0 : i32
    return %c0_i32, %c0_i32_0 : i32, i32
  }
  func.func @transform_3(%arg0: i32) -> (i32, i32) {
    %c0_i32 = arith.constant 0 : i32
    %c0_i32_0 = arith.constant 0 : i32
    return %arg0, %c0_i32 : i32, i32
  }
}

module attributes {stable_mosaic.version = 11 : i64} {
  func.func @_mm_stats_kernel(%arg0: i32, %arg1: i32, %arg2: memref<64x128xbf16, #tpu.memory_space<vmem>>, %arg3: memref<128x128xbf16, #tpu.memory_space<vmem>>, %arg4: memref<64x128xbf16, #tpu.memory_space<vmem>>, %arg5: memref<8x128xf32, #tpu.memory_space<vmem>>, %arg6: memref<8x128xf32, #tpu.memory_space<vmem>>, %arg7: memref<64x128xf32, #tpu.memory_space<vmem>>) attributes {dimension_semantics = [#tpu.dimension_semantics<parallel>, #tpu.dimension_semantics<arbitrary>], iteration_bounds = array<i64: 2, 1>, scalar_prefetch = 0 : i64, scratch_operands = 1 : i64, tpu.core_type = #tpu.core_type<tc>, window_params = [{transform_indices = @transform_0, window_bounds = array<i64: 64, 128>}, {transform_indices = @transform_1, window_bounds = array<i64: 128, 128>}, {transform_indices = @transform_2, window_bounds = array<i64: 64, 128>}, {transform_indices = @transform_3, window_bounds = array<i64: 8, 128>}, {transform_indices = @transform_4, window_bounds = array<i64: 8, 128>}]} {
    %c0_i32 = arith.constant 0 : i32
    %0 = arith.cmpi eq, %arg1, %c0_i32 : i32
    %1 = arith.extui %0 : i1 to i32
    %c0_i32_0 = arith.constant 0 : i32
    %2 = arith.cmpi ne, %1, %c0_i32_0 : i32
    scf.if %2 {
      %cst_10 = arith.constant 0.000000e+00 : f32
      %12 = vector.broadcast %cst_10 : f32 to vector<64x128xf32>
      %c0_11 = arith.constant 0 : index
      %c0_12 = arith.constant 0 : index
      %13 = vector.load %arg7[%c0_11, %c0_12] : memref<64x128xf32, #tpu.memory_space<vmem>>, vector<64x128xf32>
      tpu.vector_store %arg7[%c0_11, %c0_12], %12 {strides = array<i32>} : memref<64x128xf32, #tpu.memory_space<vmem>>, vector<64x128xf32>,
    } else {
    }
    %c0 = arith.constant 0 : index
    %c0_1 = arith.constant 0 : index
    %3 = vector.load %arg7[%c0, %c0_1] : memref<64x128xf32, #tpu.memory_space<vmem>>, vector<64x128xf32>
    %c0_2 = arith.constant 0 : index
    %c0_3 = arith.constant 0 : index
    %4 = vector.load %arg2[%c0_2, %c0_3] : memref<64x128xbf16, #tpu.memory_space<vmem>>, vector<64x128xbf16>
    %c0_4 = arith.constant 0 : index
    %c0_5 = arith.constant 0 : index
    %5 = vector.load %arg3[%c0_4, %c0_5] : memref<128x128xbf16, #tpu.memory_space<vmem>>, vector<128x128xbf16>
    %cst = arith.constant dense<0.000000e+00> : vector<64x128xf32>
    %6 = tpu.matmul %4, %5, %cst {dimension_numbers = #tpu.dot_dimension_numbers<[1], [0], [0], [1], [0, 0, 1, 1], [], []>} : vector<64x128xbf16>, vector<128x128xbf16>, vector<64x128xf32> -> vector<64x128xf32>
    %7 = arith.addf %3, %6 : vector<64x128xf32>
    %c0_6 = arith.constant 0 : index
    %c0_7 = arith.constant 0 : index
    %8 = vector.load %arg7[%c0_6, %c0_7] : memref<64x128xf32, #tpu.memory_space<vmem>>, vector<64x128xf32>
    tpu.vector_store %arg7[%c0_6, %c0_7], %7 {strides = array<i32>} : memref<64x128xf32, #tpu.memory_space<vmem>>, vector<64x128xf32>,
    %c0_i32_8 = arith.constant 0 : i32
    %9 = arith.cmpi eq, %arg1, %c0_i32_8 : i32
    %10 = arith.extui %9 : i1 to i32
    %c0_i32_9 = arith.constant 0 : i32
    %11 = arith.cmpi ne, %10, %c0_i32_9 : i32
    scf.if %11 {
      %c0_10 = arith.constant 0 : index
      %c0_11 = arith.constant 0 : index
      %12 = vector.load %arg7[%c0_10, %c0_11] : memref<64x128xf32, #tpu.memory_space<vmem>>, vector<64x128xf32>
      %13 = arith.truncf %12 : vector<64x128xf32> to vector<64x128xbf16>
      %c0_12 = arith.constant 0 : index
      %c0_13 = arith.constant 0 : index
      %14 = vector.load %arg4[%c0_12, %c0_13] : memref<64x128xbf16, #tpu.memory_space<vmem>>, vector<64x128xbf16>
      tpu.vector_store %arg4[%c0_12, %c0_13], %13 {strides = array<i32>} : memref<64x128xbf16, #tpu.memory_space<vmem>>, vector<64x128xbf16>,
      %cst_14 = arith.constant dense<0.000000e+00> : vector<128xf32>
      %15 = vector.multi_reduction <add>, %12, %cst_14 [0] : vector<64x128xf32> to vector<128xf32>
      %16 = vector.shape_cast %15 : vector<128xf32> to vector<1x128xf32>
      %17 = arith.mulf %12, %12 : vector<64x128xf32>
      %cst_15 = arith.constant dense<0.000000e+00> : vector<128xf32>
      %18 = vector.multi_reduction <add>, %17, %cst_15 [0] : vector<64x128xf32> to vector<128xf32>
      %19 = vector.shape_cast %18 : vector<128xf32> to vector<1x128xf32>
      %20 = vector.shape_cast %16 : vector<1x128xf32> to vector<1x128xf32>
      %21 = vector.broadcast %20 : vector<1x128xf32> to vector<8x128xf32>
      %c0_16 = arith.constant 0 : index
      %c0_17 = arith.constant 0 : index
      %22 = vector.load %arg5[%c0_16, %c0_17] : memref<8x128xf32, #tpu.memory_space<vmem>>, vector<8x128xf32>
      tpu.vector_store %arg5[%c0_16, %c0_17], %21 {strides = array<i32>} : memref<8x128xf32, #tpu.memory_space<vmem>>, vector<8x128xf32>,
      %23 = vector.shape_cast %19 : vector<1x128xf32> to vector<1x128xf32>
      %24 = vector.broadcast %23 : vector<1x128xf32> to vector<8x128xf32>
      %c0_18 = arith.constant 0 : index
      %c0_19 = arith.constant 0 : index
      %25 = vector.load %arg6[%c0_18, %c0_19] : memref<8x128xf32, #tpu.memory_space<vmem>>, vector<8x128xf32>
      tpu.vector_store %arg6[%c0_18, %c0_19], %24 {strides = array<i32>} : memref<8x128xf32, #tpu.memory_space<vmem>>, vector<8x128xf32>,
    } else {
    }
    return
  }
  func.func @transform_0(%arg0: i32, %arg1: i32) -> (i32, i32) {
    %c0_i32 = arith.constant 0 : i32
    return %arg0, %arg1 : i32, i32
  }
  func.func @transform_1(%arg0: i32, %arg1: i32) -> (i32, i32) {
    %c0_i32 = arith.constant 0 : i32
    %c0_i32_0 = arith.constant 0 : i32
    return %arg1, %c0_i32 : i32, i32
  }
  func.func @transform_2(%arg0: i32, %arg1: i32) -> (i32, i32) {
    %c0_i32 = arith.constant 0 : i32
    %c0_i32_0 = arith.constant 0 : i32
    return %arg0, %c0_i32 : i32, i32
  }
  func.func @transform_3(%arg0: i32, %arg1: i32) -> (i32, i32) {
    %c0_i32 = arith.constant 0 : i32
    %c0_i32_0 = arith.constant 0 : i32
    return %arg0, %c0_i32 : i32, i32
  }
  func.func @transform_4(%arg0: i32, %arg1: i32) -> (i32, i32) {
    %c0_i32 = arith.constant 0 : i32
    %c0_i32_0 = arith.constant 0 : i32
    return %arg0, %c0_i32 : i32, i32
  }
}

module attributes {stable_mosaic.version = 11 : i64} {
  func.func @_bn_relu_kernel(%arg0: i32, %arg1: memref<128x128xbf16, #tpu.memory_space<vmem>>, %arg2: memref<1x128xf32, #tpu.memory_space<vmem>>, %arg3: memref<1x128xf32, #tpu.memory_space<vmem>>, %arg4: memref<128x128xbf16, #tpu.memory_space<vmem>>) attributes {dimension_semantics = [#tpu.dimension_semantics<parallel>], iteration_bounds = array<i64: 1>, scalar_prefetch = 0 : i64, scratch_operands = 0 : i64, tpu.core_type = #tpu.core_type<tc>, window_params = [{transform_indices = @transform_0, window_bounds = array<i64: 128, 128>}, {pipeline_mode = #tpu.pipeline_mode<synchronous>, transform_indices = @transform_1, window_bounds = array<i64: 1, 128>}, {pipeline_mode = #tpu.pipeline_mode<synchronous>, transform_indices = @transform_2, window_bounds = array<i64: 1, 128>}, {transform_indices = @transform_3, window_bounds = array<i64: 128, 128>}]} {
    %c0 = arith.constant 0 : index
    %c0_0 = arith.constant 0 : index
    %0 = vector.load %arg1[%c0, %c0_0] : memref<128x128xbf16, #tpu.memory_space<vmem>>, vector<128x128xbf16>
    %1 = arith.extf %0 : vector<128x128xbf16> to vector<128x128xf32>
    %c0_1 = arith.constant 0 : index
    %c0_2 = arith.constant 0 : index
    %2 = vector.load %arg2[%c0_1, %c0_2] : memref<1x128xf32, #tpu.memory_space<vmem>>, vector<1x128xf32>
    %3 = vector.broadcast %2 : vector<1x128xf32> to vector<128x128xf32>
    %4 = arith.mulf %1, %3 : vector<128x128xf32>
    %c0_3 = arith.constant 0 : index
    %c0_4 = arith.constant 0 : index
    %5 = vector.load %arg3[%c0_3, %c0_4] : memref<1x128xf32, #tpu.memory_space<vmem>>, vector<1x128xf32>
    %6 = vector.broadcast %5 : vector<1x128xf32> to vector<128x128xf32>
    %7 = arith.addf %4, %6 : vector<128x128xf32>
    %cst = arith.constant 0.000000e+00 : f32
    %8 = vector.broadcast %cst : f32 to vector<128x128xf32>
    %9 = arith.maximumf %7, %8 : vector<128x128xf32>
    %10 = arith.truncf %9 : vector<128x128xf32> to vector<128x128xbf16>
    %c0_5 = arith.constant 0 : index
    %c0_6 = arith.constant 0 : index
    %11 = vector.load %arg4[%c0_5, %c0_6] : memref<128x128xbf16, #tpu.memory_space<vmem>>, vector<128x128xbf16>
    tpu.vector_store %arg4[%c0_5, %c0_6], %10 {strides = array<i32>} : memref<128x128xbf16, #tpu.memory_space<vmem>>, vector<128x128xbf16>,
    return
  }
  func.func @transform_0(%arg0: i32) -> (i32, i32) {
    %c0_i32 = arith.constant 0 : i32
    %c0_i32_0 = arith.constant 0 : i32
    return %arg0, %c0_i32 : i32, i32
  }
  func.func @transform_1(%arg0: i32) -> (i32, i32) {
    %c0_i32 = arith.constant 0 : i32
    %c0_i32_0 = arith.constant 0 : i32
    %c0_i32_1 = arith.constant 0 : i32
    return %c0_i32, %c0_i32_0 : i32, i32
  }
  func.func @transform_2(%arg0: i32) -> (i32, i32) {
    %c0_i32 = arith.constant 0 : i32
    %c0_i32_0 = arith.constant 0 : i32
    %c0_i32_1 = arith.constant 0 : i32
    return %c0_i32, %c0_i32_0 : i32, i32
  }
  func.func @transform_3(%arg0: i32) -> (i32, i32) {
    %c0_i32 = arith.constant 0 : i32
    %c0_i32_0 = arith.constant 0 : i32
    return %arg0, %c0_i32 : i32, i32
  }
}

module attributes {stable_mosaic.version = 11 : i64} {
  func.func @_mm_tanh_kernel(%arg0: i32, %arg1: memref<64x128xbf16, #tpu.memory_space<vmem>>, %arg2: memref<128x128xbf16, #tpu.memory_space<vmem>>, %arg3: memref<64x128xbf16, #tpu.memory_space<vmem>>) attributes {dimension_semantics = [#tpu.dimension_semantics<parallel>], iteration_bounds = array<i64: 2>, scalar_prefetch = 0 : i64, scratch_operands = 0 : i64, tpu.core_type = #tpu.core_type<tc>, window_params = [{transform_indices = @transform_0, window_bounds = array<i64: 64, 128>}, {pipeline_mode = #tpu.pipeline_mode<synchronous>, transform_indices = @transform_1, window_bounds = array<i64: 128, 128>}, {transform_indices = @transform_2, window_bounds = array<i64: 64, 128>}]} {
    %c0 = arith.constant 0 : index
    %c0_0 = arith.constant 0 : index
    %0 = vector.load %arg1[%c0, %c0_0] : memref<64x128xbf16, #tpu.memory_space<vmem>>, vector<64x128xbf16>
    %c0_1 = arith.constant 0 : index
    %c0_2 = arith.constant 0 : index
    %1 = vector.load %arg2[%c0_1, %c0_2] : memref<128x128xbf16, #tpu.memory_space<vmem>>, vector<128x128xbf16>
    %cst = arith.constant dense<0.000000e+00> : vector<64x128xf32>
    %2 = tpu.matmul %0, %1, %cst {dimension_numbers = #tpu.dot_dimension_numbers<[1], [0], [0], [1], [0, 0, 1, 1], [], []>} : vector<64x128xbf16>, vector<128x128xbf16>, vector<64x128xf32> -> vector<64x128xf32>
    %3 = math.tanh %2 : vector<64x128xf32>
    %4 = arith.truncf %3 : vector<64x128xf32> to vector<64x128xbf16>
    %c0_3 = arith.constant 0 : index
    %c0_4 = arith.constant 0 : index
    %5 = vector.load %arg3[%c0_3, %c0_4] : memref<64x128xbf16, #tpu.memory_space<vmem>>, vector<64x128xbf16>
    tpu.vector_store %arg3[%c0_3, %c0_4], %4 {strides = array<i32>} : memref<64x128xbf16, #tpu.memory_space<vmem>>, vector<64x128xbf16>,
    return
  }
  func.func @transform_0(%arg0: i32) -> (i32, i32) {
    %c0_i32 = arith.constant 0 : i32
    %c0_i32_0 = arith.constant 0 : i32
    return %arg0, %c0_i32 : i32, i32
  }
  func.func @transform_1(%arg0: i32) -> (i32, i32) {
    %c0_i32 = arith.constant 0 : i32
    %c0_i32_0 = arith.constant 0 : i32
    %c0_i32_1 = arith.constant 0 : i32
    return %c0_i32, %c0_i32_0 : i32, i32
  }
  func.func @transform_2(%arg0: i32) -> (i32, i32) {
    %c0_i32 = arith.constant 0 : i32
    %c0_i32_0 = arith.constant 0 : i32
    return %arg0, %c0_i32 : i32, i32
  }
}

</mosaic_0001>

<llo_original>
// kernel: tile.30
$region0: #{tile.30}
  #allocation0 [shape = 's32[1]{0}', space=sflag, size = 0x4, scoped, tag = 'scoped memory for tile.30']
  %s0 = inlined_call_operand.vmem [shape: f32[16], index: 0, kind: input, shape index: {}]
  %s1 = inlined_call_operand.vmem [shape: f32[16,16], index: 1, kind: output, shape index: {}]
  // Predicated region
  $region2: #{tile.30} parent=0 // pred_check
    _
  $region3: #{tile.30} parent=0 // pred_check_branch
    %3 = sbr.rel (0) target = $region5
  $region4: #{tile.30} parent=0 // pred_region
    _
  $region5: #{tile.30} parent=0 // pred_fallthru
    _
  %v4 = vld [vmem:[%s0] ss:$0 sm:$0xff]
  %5 = vst [vmem:[%s1] sm:$0xff] %v4
  %s6 = scalar_lea.vmem %s1, 8
  %7 = vst [vmem:[%s6] sm:$0xff] %v4

// kernel: tile.31
$region0: #{tile.31}
  %s0 = inlined_call_operand.vmem [shape: f32[16,16], index: 0, kind: input, shape index: {}]
  %s1 = inlined_call_operand.vmem [shape: f32[1,256], index: 1, kind: output, shape index: {}]
  $region1: #{tile.31} parent=0
    #allocation0 [shape = 'u8[8192]{0}', space=vmem, size = 0x2000, scoped, tag = 'scoped mem for output reshape']
    %s2 = smov 3
    %v3 = vld [vmem:[%s0] ss:$8 sm:%s2]
    %vm4 = vcmask 130048
    %5 = vst.msk [vmem:[#allocation0] ss:$8 sm:$0x3] %vm4, %v3
    %s6 = scalar_lea.vmem %s0, 7
    %s7 = smov 3
    %v8 = vld [vmem:[%s6] ss:$8 sm:%s7]
    %9 = vrot.lane.b32.xlu0 %v8, 112
    %v10 = vpop.permute.xlu0 %9
    %vm11 = vcmask 1048448
    %12 = vst.msk [vmem:[#allocation0] ss:$8 sm:$0x3] %vm11, %v10
    %s13 = scalar_lea.vmem %s0, 6
    %s14 = smov 3
    %v15 = vld [vmem:[%s13] ss:$8 sm:%s14]
    %16 = vrot.lane.b32.xlu0 %v15, 96
    %v17 = vpop.permute.xlu0 %16
    %vm18 = vcmask 917248
    %19 = vst.msk [vmem:[#allocation0] ss:$8 sm:$0x3] %vm18, %v17
    %s20 = scalar_lea.vmem %s0, 5
    %s21 = smov 3
    %v22 = vld [vmem:[%s20] ss:$8 sm:%s21]
    %23 = vrot.lane.b32.xlu0 %v22, 80
    %v24 = vpop.permute.xlu0 %23
    %vm25 = vcmask 786048
    %26 = vst.msk [vmem:[#allocation0] ss:$8 sm:$0x3] %vm25, %v24
    %s27 = scalar_lea.vmem %s0, 4
    %s28 = smov 3
    %v29 = vld [vmem:[%s27] ss:$8 sm:%s28]
    %30 = vrot.lane.b32.xlu0 %v29, 64
    %v31 = vpop.permute.xlu0 %30
    %vm32 = vcmask 654848
    %33 = vst.msk [vmem:[#allocation0] ss:$8 sm:$0x3] %vm32, %v31
    %s34 = scalar_lea.vmem %s0, 3
    %s35 = smov 3
    %v36 = vld [vmem:[%s34] ss:$8 sm:%s35]
    %37 = vrot.lane.b32.xlu0 %v36, 48
    %v38 = vpop.permute.xlu0 %37
    %vm39 = vcmask 523648
    %40 = vst.msk [vmem:[#allocation0] ss:$8 sm:$0x3] %vm39, %v38
    %s41 = scalar_lea.vmem %s0, 2
    %s42 = smov 3
    %v43 = vld [vmem:[%s41] ss:$8 sm:%s42]
    %44 = vrot.lane.b32.xlu0 %v43, 32
    %v45 = vpop.permute.xlu0 %44
    %vm46 = vcmask 392448
    %47 = vst.msk [vmem:[#allocation0] ss:$8 sm:$0x3] %vm46, %v45
    %s48 = scalar_lea.vmem %s0, 1
    %s49 = smov 3
    %v50 = vld [vmem:[%s48] ss:$8 sm:%s49]
    %51 = vrot.lane.b32.xlu0 %v50, 16
    %v52 = vpop.permute.xlu0 %51
    %vm53 = vcmask 261248
    %54 = vst.msk [vmem:[#allocation0] ss:$8 sm:$0x3] %vm53, %v52
    %s56 = sshllo.u32 0, 1
    %v58 = vld [vmem:[#allocation0] sm:%s56]
    %s59 = sshllo.u32 0, 1
    %60 = vst [vmem:[%s1] sm:%s59] %v58
    %s61 = scalar_lea.vmem [#allocation0], 8
    %v62 = vld [vmem:[%s61] sm:%s56]
    %s63 = sshllo.u32 0, 1
    %s64 = scalar_lea.vmem %s1, 1
    %65 = vst [vmem:[%s64] sm:%s63] %v62

// kernel: decoder_forward.7
$region0: #{decoder_forward.7}
  #allocation0 [shape = 'u32[]', space=smem, size = 0x4, offset = 0x4, fixed_abs, tag = 'smem constant byte address 0x4 - core index']
  #allocation1 [shape = 'u32[144,128]{1,0:T(1,128)}', space=vmem, size = 0x12000, scoped, tag = 'internal scratch']
  #allocation2 [shape = 'f32[64,256]{1,0:T(8,128)}', space=vmem, size = 0x10000, scoped, tag = 'scratch operand']
  %s0 = inlined_call_operand.vmem [shape: bf16[64,128], index: 0, kind: input, shape index: {}]
  %s1 = inlined_call_operand.vmem [shape: bf16[128,256], index: 1, kind: input, shape index: {}]
  %s2 = inlined_call_operand.vmem [shape: bf16[64,256], index: 2, kind: output, shape index: {0}]
  %s3 = inlined_call_operand.vmem [shape: f32[8,256], index: 3, kind: output, shape index: {1}]
  %s4 = inlined_call_operand.vmem [shape: f32[8,256], index: 4, kind: output, shape index: {2}]
  %5 = xla_tuple %s2, %s3, %s4
  %s6 = sld [smem:[#allocation0]]
  $region42: #{decoder_forward.7} parent=0
    _
  %s8 = ssub.s32 1, %s6
  %s9 = scalar_select 0, %s8, %s6
  // Predicated region
  $region2: #{decoder_forward.7} parent=0 // pred_check
    _
  $region3: #{decoder_forward.7} parent=0 // pred_check_branch
    %11 = sbr.rel (0) target = $region5
  $region4: #{decoder_forward.7} parent=0 // pred_region
    _
  $region5: #{decoder_forward.7} parent=0 // pred_fallthru
    _
  // Predicated region
  $region6: #{decoder_forward.7} parent=0 // pred_check
    _
  $region7: #{decoder_forward.7} parent=0 // pred_check_branch
    %13 = sbr.rel (0) target = $region9
  $region8: #{decoder_forward.7} parent=0 // pred_region
    _
  $region9: #{decoder_forward.7} parent=0 // pred_fallthru
    _
  %p15 = scmp.eq.s32.totalorder 0, 0
  // Predicated region
  $region10: #{decoder_forward.7} parent=0 // pred_check
    %p16 = pneg %p15
  $region11: #{decoder_forward.7} parent=0 // pred_check_branch
    %18 = sbr.rel (%p16) target = $region13
  $region12: #{decoder_forward.7} parent=0 // pred_region
    %19 = vst [vmem:[#allocation2] sm:$0xff] 0.0
    %20 = vst [vmem:[#allocation2 + $0x8] sm:$0xff] 0.0
    %21 = vst [vmem:[#allocation2 + $0x10] sm:$0xff] 0.0
    %22 = vst [vmem:[#allocation2 + $0x18] sm:$0xff] 0.0
    %23 = vst [vmem:[#allocation2 + $0x20] sm:$0xff] 0.0
    %24 = vst [vmem:[#allocation2 + $0x28] sm:$0xff] 0.0
    %25 = vst [vmem:[#allocation2 + $0x30] sm:$0xff] 0.0
    %26 = vst [vmem:[#allocation2 + $0x38] sm:$0xff] 0.0
    %27 = vst [vmem:[#allocation2 + $0x40] sm:$0xff] 0.0
    %28 = vst [vmem:[#allocation2 + $0x48] sm:$0xff] 0.0
    %29 = vst [vmem:[#allocation2 + $0x50] sm:$0xff] 0.0
    %30 = vst [vmem:[#allocation2 + $0x58] sm:$0xff] 0.0
    %31 = vst [vmem:[#allocation2 + $0x60] sm:$0xff] 0.0
    %32 = vst [vmem:[#allocation2 + $0x68] sm:$0xff] 0.0
    %33 = vst [vmem:[#allocation2 + $0x70] sm:$0xff] 0.0
    %34 = vst [vmem:[#allocation2 + $0x78] sm:$0xff] 0.0
  $region13: #{decoder_forward.7} parent=0 // pred_fallthru
    _
  %v35 = vld [vmem:[#allocation2] sm:$0xff]
  %v36 = vld [vmem:[#allocation2 + $0x8] sm:$0xff]
  %v37 = vld [vmem:[#allocation2 + $0x10] sm:$0xff]
  %v38 = vld [vmem:[#allocation2 + $0x18] sm:$0xff]
  %v39 = vld [vmem:[#allocation2 + $0x20] sm:$0xff]
  %v40 = vld [vmem:[#allocation2 + $0x28] sm:$0xff]
  %v41 = vld [vmem:[#allocation2 + $0x30] sm:$0xff]
  %v42 = vld [vmem:[#allocation2 + $0x38] sm:$0xff]
  %v43 = vld [vmem:[#allocation2 + $0x40] sm:$0xff]
  %v44 = vld [vmem:[#allocation2 + $0x48] sm:$0xff]
  %v45 = vld [vmem:[#allocation2 + $0x50] sm:$0xff]
  %v46 = vld [vmem:[#allocation2 + $0x58] sm:$0xff]
  %v47 = vld [vmem:[#allocation2 + $0x60] sm:$0xff]
  %v48 = vld [vmem:[#allocation2 + $0x68] sm:$0xff]
  %v49 = vld [vmem:[#allocation2 + $0x70] sm:$0xff]
  %v50 = vld [vmem:[#allocation2 + $0x78] sm:$0xff]
  %v51 = vld [vmem:[%s0] sm:$0xf]
  %v52 = vld [vmem:[%s0 + $0x4] sm:$0xf]
  %v53 = vld [vmem:[%s0 + $0x8] sm:$0xf]
  %v54 = vld [vmem:[%s0 + $0xc] sm:$0xf]
  %v55 = vld [vmem:[%s0 + $0x10] sm:$0xf]
  %v56 = vld [vmem:[%s0 + $0x14] sm:$0xf]
  %v57 = vld [vmem:[%s0 + $0x18] sm:$0xf]
  %v58 = vld [vmem:[%s0 + $0x1c] sm:$0xf]
  %v59 = vld [vmem:[%s1] sm:$0xff]
  %v60 = vld [vmem:[%s1 + $0x8] sm:$0xff]
  %v61 = vld [vmem:[%s1 + $0x10] sm:$0xff]
  %v62 = vld [vmem:[%s1 + $0x18] sm:$0xff]
  %v63 = vld [vmem:[%s1 + $0x20] sm:$0xff]
  %v64 = vld [vmem:[%s1 + $0x28] sm:$0xff]
  %v65 = vld [vmem:[%s1 + $0x30] sm:$0xff]
  %v66 = vld [vmem:[%s1 + $0x38] sm:$0xff]
  %v67 = vld [vmem:[%s1 + $0x40] sm:$0xff]
  %v68 = vld [vmem:[%s1 + $0x48] sm:$0xff]
  %v69 = vld [vmem:[%s1 + $0x50] sm:$0xff]
  %v70 = vld [vmem:[%s1 + $0x58] sm:$0xff]
  %v71 = vld [vmem:[%s1 + $0x60] sm:$0xff]
  %v72 = vld [vmem:[%s1 + $0x68] sm:$0xff]
  %v73 = vld [vmem:[%s1 + $0x70] sm:$0xff]
  %v74 = vld [vmem:[%s1 + $0x78] sm:$0xff]
  %v83 = vunpack.c.l.b16 %v51
  %v84 = vunpack.c.l.b16 %v52
  %v85 = vunpack.c.l.b16 %v53
  %v86 = vunpack.c.l.b16 %v54
  %v87 = vunpack.c.l.b16 %v55
  %v88 = vunpack.c.l.b16 %v56
  %v89 = vunpack.c.l.b16 %v57
  %v90 = vunpack.c.l.b16 %v58
  %v91 = vpack.c.b16 %v84, %v83
  %v92 = vpack.c.b16 %v86, %v85
  %v93 = vpack.c.b16 %v88, %v87
  %v94 = vpack.c.b16 %v90, %v89
  %v115 = vunpack.c.l.b16 %v59
  %v116 = vunpack.c.h.b16 %v59
  %v117 = vunpack.c.l.b16 %v60
  %v118 = vunpack.c.h.b16 %v60
  %v119 = vunpack.c.l.b16 %v61
  %v120 = vunpack.c.h.b16 %v61
  %v121 = vunpack.c.l.b16 %v62
  %v122 = vunpack.c.h.b16 %v62
  %v123 = vunpack.c.l.b16 %v63
  %v124 = vunpack.c.h.b16 %v63
  %v125 = vunpack.c.l.b16 %v64
  %v126 = vunpack.c.h.b16 %v64
  %v127 = vunpack.c.l.b16 %v65
  %v128 = vunpack.c.h.b16 %v65
  %v129 = vunpack.c.l.b16 %v66
  %v130 = vunpack.c.h.b16 %v66
  %v131 = vunpack.c.l.b16 %v67
  %v132 = vunpack.c.h.b16 %v67
  %v133 = vunpack.c.l.b16 %v68
  %v134 = vunpack.c.h.b16 %v68
  %v135 = vunpack.c.l.b16 %v69
  %v136 = vunpack.c.h.b16 %v69
  %v137 = vunpack.c.l.b16 %v70
  %v138 = vunpack.c.h.b16 %v70
  %v139 = vunpack.c.l.b16 %v71
  %v140 = vunpack.c.h.b16 %v71
  %v141 = vunpack.c.l.b16 %v72
  %v142 = vunpack.c.h.b16 %v72
  %v143 = vunpack.c.l.b16 %v73
  %v144 = vunpack.c.h.b16 %v73
  %v145 = vunpack.c.l.b16 %v74
  %v146 = vunpack.c.h.b16 %v74
  %v147 = vpack.c.b16 %v117, %v115
  %v148 = vpack.c.b16 %v118, %v116
  %v149 = vpack.c.b16 %v121, %v119
  %v150 = vpack.c.b16 %v122, %v120
  %v151 = vpack.c.b16 %v125, %v123
  %v152 = vpack.c.b16 %v126, %v124
  %v153 = vpack.c.b16 %v129, %v127
  %v154 = vpack.c.b16 %v130, %v128
  %v155 = vpack.c.b16 %v133, %v131
  %v156 = vpack.c.b16 %v134, %v132
  %v157 = vpack.c.b16 %v137, %v135
  %v158 = vpack.c.b16 %v138, %v136
  %v159 = vpack.c.b16 %v141, %v139
  %v160 = vpack.c.b16 %v142, %v140
  %v161 = vpack.c.b16 %v145, %v143
  %v162 = vpack.c.b16 %v146, %v144
  %179 = vmatprep.subr.bf16.mxu0 %v148
  %180 = vmatpush1.bf16.msra.mxu0 %v147
  %181 = vmatprep.subr.bf16.mxu0 %v150
  %182 = vmatpush1.bf16.msra.mxu0 %v149
  %183 = vmatprep.subr.bf16.mxu0 %v152
  %184 = vmatpush1.bf16.msra.mxu0 %v151
  %185 = vmatprep.subr.bf16.mxu0 %v154
  %186 = vmatpush1.bf16.msra.mxu0 %v153
  %187 = vmatprep.subr.bf16.mxu0 %v156
  %188 = vmatpush1.bf16.msra.mxu0 %v155
  %189 = vmatprep.subr.bf16.mxu0 %v158
  %190 = vmatpush1.bf16.msra.mxu0 %v157
  %191 = vmatprep.subr.bf16.mxu0 %v160
  %192 = vmatpush1.bf16.msra.mxu0 %v159
  %193 = vmatprep.subr.bf16.mxu0 %v162
  %194 = vmatpush1.bf16.msra.mxu0 %v161
  %195 = vmatprep.subr.bf16.mxu0 0
  %196 = vmatpush1.bf16.msra.mxu0 0
  %197 = vmatprep.subr.bf16.mxu0 0
  %198 = vmatpush1.bf16.msra.mxu0 0
  %199 = vmatprep.subr.bf16.mxu0 0
  %200 = vmatpush1.bf16.msra.mxu0 0
  %201 = vmatprep.subr.bf16.mxu0 0
  %202 = vmatpush1.bf16.msra.mxu0 0
  %203 = vmatprep.subr.bf16.mxu0 0
  %204 = vmatpush1.bf16.msra.mxu0 0
  %205 = vmatprep.subr.bf16.mxu0 0
  %206 = vmatpush1.bf16.msra.mxu0 0
  %207 = vmatprep.subr.bf16.mxu0 0
  %208 = vmatpush1.bf16.msra.mxu0 0
  %209 = vmatprep.subr.bf16.mxu0 0
  %210 = vmatpush1.bf16.msra.mxu0 0
  %211 = vmatprep.mubr.bf16.mxu0 0
  %212 = vmatmul.mubr.bf16.gmra.mrb[0].mxu0 %v91
  %v213 = vpop.f32.mrb[0].mxu0
  %v214 = vadd.f32 0.0, %v213
  %v215 = vpop.f32.mrb[0].mxu0
  %v216 = vadd.f32 0.0, %v215
  %v217 = vpop.f32.mrb[0].mxu0
  %v218 = vadd.f32 0.0, %v217
  %v219 = vpop.f32.mrb[0].mxu0
  %v220 = vadd.f32 0.0, %v219
  %221 = vmatprep.mubr.bf16.mxu0 0
  %222 = vmatmul.mubr.bf16.gmra.mrb[0].mxu0 %v92
  %v223 = vpop.f32.mrb[0].mxu0
  %v224 = vadd.f32 0.0, %v223
  %v225 = vpop.f32.mrb[0].mxu0
  %v226 = vadd.f32 0.0, %v225
  %v227 = vpop.f32.mrb[0].mxu0
  %v228 = vadd.f32 0.0, %v227
  %v229 = vpop.f32.mrb[0].mxu0
  %v230 = vadd.f32 0.0, %v229
  %231 = vmatprep.mubr.bf16.mxu0 0
  %232 = vmatmul.mubr.bf16.gmra.mrb[0].mxu0 %v93
  %v233 = vpop.f32.mrb[0].mxu0
  %v234 = vadd.f32 0.0, %v233
  %v235 = vpop.f32.mrb[0].mxu0
  %v236 = vadd.f32 0.0, %v235
  %v237 = vpop.f32.mrb[0].mxu0
  %v238 = vadd.f32 0.0, %v237
  %v239 = vpop.f32.mrb[0].mxu0
  %v240 = vadd.f32 0.0, %v239
  %241 = vmatprep.mubr.bf16.mxu0 0
  %242 = vmatmul.mubr.bf16.gmra.mrb[0].mxu0 %v94
  %v243 = vpop.f32.mrb[0].mxu0
  %v244 = vadd.f32 0.0, %v243
  %v245 = vpop.f32.mrb[0].mxu0
  %v246 = vadd.f32 0.0, %v245
  %v247 = vpop.f32.mrb[0].mxu0
  %v248 = vadd.f32 0.0, %v247
  %v249 = vpop.f32.mrb[0].mxu0
  %v250 = vadd.f32 0.0, %v249
  %251 = vdwg.mxu0
  %v252 = vadd.f32 %v35, %v214
  %v253 = vadd.f32 %v36, %v216
  %v254 = vadd.f32 %v37, %v218
  %v255 = vadd.f32 %v38, %v220
  %v256 = vadd.f32 %v39, %v224
  %v257 = vadd.f32 %v40, %v226
  %v258 = vadd.f32 %v41, %v228
  %v259 = vadd.f32 %v42, %v230
  %v260 = vadd.f32 %v43, %v234
  %v261 = vadd.f32 %v44, %v236
  %v262 = vadd.f32 %v45, %v238
  %v263 = vadd.f32 %v46, %v240
  %v264 = vadd.f32 %v47, %v244
  %v265 = vadd.f32 %v48, %v246
  %v266 = vadd.f32 %v49, %v248
  %v267 = vadd.f32 %v50, %v250
  %268 = vst [vmem:[#allocation2] sm:$0xff] %v252
  %269 = vst [vmem:[#allocation2 + $0x8] sm:$0xff] %v253
  %270 = vst [vmem:[#allocation2 + $0x10] sm:$0xff] %v254
  %271 = vst [vmem:[#allocation2 + $0x18] sm:$0xff] %v255
  %272 = vst [vmem:[#allocation2 + $0x20] sm:$0xff] %v256
  %273 = vst [vmem:[#allocation2 + $0x28] sm:$0xff] %v257
  %274 = vst [vmem:[#allocation2 + $0x30] sm:$0xff] %v258
  %275 = vst [vmem:[#allocation2 + $0x38] sm:$0xff] %v259
  %276 = vst [vmem:[#allocation2 + $0x40] sm:$0xff] %v260
  %277 = vst [vmem:[#allocation2 + $0x48] sm:$0xff] %v261
  %278 = vst [vmem:[#allocation2 + $0x50] sm:$0xff] %v262
  %279 = vst [vmem:[#allocation2 + $0x58] sm:$0xff] %v263
  %280 = vst [vmem:[#allocation2 + $0x60] sm:$0xff] %v264
  %281 = vst [vmem:[#allocation2 + $0x68] sm:$0xff] %v265
  %282 = vst [vmem:[#allocation2 + $0x70] sm:$0xff] %v266
  %283 = vst [vmem:[#allocation2 + $0x78] sm:$0xff] %v267
  // Predicated region
  $region14: #{decoder_forward.7} parent=0 // pred_check
    %p284 = pneg %p15
  $region15: #{decoder_forward.7} parent=0 // pred_check_branch
    %286 = sbr.rel (%p284) target = $region17
  $region16: #{decoder_forward.7} parent=0 // pred_region
    %v287 = vld [vmem:[#allocation2] sm:$0xff]
    %v288 = vld [vmem:[#allocation2 + $0x8] sm:$0xff]
    %v289 = vld [vmem:[#allocation2 + $0x10] sm:$0xff]
    %v290 = vld [vmem:[#allocation2 + $0x18] sm:$0xff]
    %v291 = vld [vmem:[#allocation2 + $0x20] sm:$0xff]
    %v292 = vld [vmem:[#allocation2 + $0x28] sm:$0xff]
    %v293 = vld [vmem:[#allocation2 + $0x30] sm:$0xff]
    %v294 = vld [vmem:[#allocation2 + $0x38] sm:$0xff]
    %v295 = vld [vmem:[#allocation2 + $0x40] sm:$0xff]
    %v296 = vld [vmem:[#allocation2 + $0x48] sm:$0xff]
    %v297 = vld [vmem:[#allocation2 + $0x50] sm:$0xff]
    %v298 = vld [vmem:[#allocation2 + $0x58] sm:$0xff]
    %v299 = vld [vmem:[#allocation2 + $0x60] sm:$0xff]
    %v300 = vld [vmem:[#allocation2 + $0x68] sm:$0xff]
    %v301 = vld [vmem:[#allocation2 + $0x70] sm:$0xff]
    %v302 = vld [vmem:[#allocation2 + $0x78] sm:$0xff]
    %v303 = vpack.c.bf16 %v289, %v287
    %v304 = vpack.c.bf16 %v290, %v288
    %v305 = vpack.c.bf16 %v293, %v291
    %v306 = vpack.c.bf16 %v294, %v292
    %v307 = vpack.c.bf16 %v297, %v295
    %v308 = vpack.c.bf16 %v298, %v296
    %v309 = vpack.c.bf16 %v301, %v299
    %v310 = vpack.c.bf16 %v302, %v300
    %v319 = vunpack.c.l.b16 %v303
    %v320 = vunpack.c.l.b16 %v304
    %v321 = vunpack.c.h.b16 %v303
    %v322 = vunpack.c.h.b16 %v304
    %v323 = vunpack.c.l.b16 %v305
    %v324 = vunpack.c.l.b16 %v306
    %v325 = vunpack.c.h.b16 %v305
    %v326 = vunpack.c.h.b16 %v306
    %v327 = vunpack.c.l.b16 %v307
    %v328 = vunpack.c.l.b16 %v308
    %v329 = vunpack.c.h.b16 %v307
    %v330 = vunpack.c.h.b16 %v308
    %v331 = vunpack.c.l.b16 %v309
    %v332 = vunpack.c.l.b16 %v310
    %v333 = vunpack.c.h.b16 %v309
    %v334 = vunpack.c.h.b16 %v310
    %v335 = vpack.c.b16 %v320, %v319
    %v336 = vpack.c.b16 %v322, %v321
    %v337 = vpack.c.b16 %v324, %v323
    %v338 = vpack.c.b16 %v326, %v325
    %v339 = vpack.c.b16 %v328, %v327
    %v340 = vpack.c.b16 %v330, %v329
    %v341 = vpack.c.b16 %v332, %v331
    %v342 = vpack.c.b16 %v334, %v333
    %351 = vst [vmem:[%s2] sm:$0xff] %v335
    %352 = vst [vmem:[%s2 + $0x8] sm:$0xff] %v336
    %353 = vst [vmem:[%s2 + $0x10] sm:$0xff] %v337
    %354 = vst [vmem:[%s2 + $0x18] sm:$0xff] %v338
    %355 = vst [vmem:[%s2 + $0x20] sm:$0xff] %v339
    %356 = vst [vmem:[%s2 + $0x28] sm:$0xff] %v340
    %357 = vst [vmem:[%s2 + $0x30] sm:$0xff] %v341
    %358 = vst [vmem:[%s2 + $0x38] sm:$0xff] %v342
    %v359 = vadd.f32 %v287, %v289
    %v360 = vadd.f32 %v359, %v291
    %v361 = vadd.f32 %v360, %v293
    %v362 = vadd.f32 %v361, %v295
    %v363 = vadd.f32 %v362, %v297
    %v364 = vadd.f32 %v363, %v299
    %v365 = vadd.f32 %v364, %v301
    %v366 = vrot.slane %v365, 4
    %v367 = vadd.f32 %v365, %v366
    %v368 = vrot.slane %v367, 2
    %v369 = vadd.f32 %v367, %v368
    %v370 = vrot.slane %v369, 1
    %v371 = vadd.f32 %v369, %v370
    %v372 = vadd.f32 %v288, %v290
    %v373 = vadd.f32 %v372, %v292
    %v374 = vadd.f32 %v373, %v294
    %v375 = vadd.f32 %v374, %v296
    %v376 = vadd.f32 %v375, %v298
    %v377 = vadd.f32 %v376, %v300
    %v378 = vadd.f32 %v377, %v302
    %v379 = vrot.slane %v378, 4
    %v380 = vadd.f32 %v378, %v379
    %v381 = vrot.slane %v380, 2
    %v382 = vadd.f32 %v380, %v381
    %v383 = vrot.slane %v382, 1
    %v384 = vadd.f32 %v382, %v383
    %v385 = vmul.f32 %v287, %v287
    %v386 = vmul.f32 %v288, %v288
    %v387 = vmul.f32 %v289, %v289
    %v388 = vmul.f32 %v290, %v290
    %v389 = vmul.f32 %v291, %v291
    %v390 = vmul.f32 %v292, %v292
    %v391 = vmul.f32 %v293, %v293
    %v392 = vmul.f32 %v294, %v294
    %v393 = vmul.f32 %v295, %v295
    %v394 = vmul.f32 %v296, %v296
    %v395 = vmul.f32 %v297, %v297
    %v396 = vmul.f32 %v298, %v298
    %v397 = vmul.f32 %v299, %v299
    %v398 = vmul.f32 %v300, %v300
    %v399 = vmul.f32 %v301, %v301
    %v400 = vmul.f32 %v302, %v302
    %v401 = vadd.f32 %v385, %v387
    %v402 = vadd.f32 %v401, %v389
    %v403 = vadd.f32 %v402, %v391
    %v404 = vadd.f32 %v403, %v393
    %v405 = vadd.f32 %v404, %v395
    %v406 = vadd.f32 %v405, %v397
    %v407 = vadd.f32 %v406, %v399
    %v408 = vrot.slane %v407, 4
    %v409 = vadd.f32 %v407, %v408
    %v410 = vrot.slane %v409, 2
    %v411 = vadd.f32 %v409, %v410
    %v412 = vrot.slane %v411, 1
    %v413 = vadd.f32 %v411, %v412
    %v414 = vadd.f32 %v386, %v388
    %v415 = vadd.f32 %v414, %v390
    %v416 = vadd.f32 %v415, %v392
    %v417 = vadd.f32 %v416, %v394
    %v418 = vadd.f32 %v417, %v396
    %v419 = vadd.f32 %v418, %v398
    %v420 = vadd.f32 %v419, %v400
    %v421 = vrot.slane %v420, 4
    %v422 = vadd.f32 %v420, %v421
    %v423 = vrot.slane %v422, 2
    %v424 = vadd.f32 %v422, %v423
    %v425 = vrot.slane %v424, 1
    %v426 = vadd.f32 %v424, %v425
    %427 = vst [vmem:[%s3] sm:$0xff] %v371
    %428 = vst [vmem:[%s3 + $0x8] sm:$0xff] %v384
    %429 = vst [vmem:[%s4] sm:$0xff] %v413
    %430 = vst [vmem:[%s4 + $0x8] sm:$0xff] %v426
  $region17: #{decoder_forward.7} parent=0 // pred_fallthru
    _
  // Predicated region
  $region18: #{decoder_forward.7} parent=0 // pred_check
    _
  $region19: #{decoder_forward.7} parent=0 // pred_check_branch
    %432 = sbr.rel (0) target = $region21
  $region20: #{decoder_forward.7} parent=0 // pred_region
    _
  $region21: #{decoder_forward.7} parent=0 // pred_fallthru
    _
  // Predicated region
  $region22: #{decoder_forward.7} parent=0 // pred_check
    _
  $region23: #{decoder_forward.7} parent=0 // pred_check_branch
    %434 = sbr.rel (0) target = $region25
  $region24: #{decoder_forward.7} parent=0 // pred_region
    _
  $region25: #{decoder_forward.7} parent=0 // pred_fallthru
    _
  // Predicated region
  $region26: #{decoder_forward.7} parent=0 // pred_check
    _
  $region27: #{decoder_forward.7} parent=0 // pred_check_branch
    %436 = sbr.rel (0) target = $region29
  $region28: #{decoder_forward.7} parent=0 // pred_region
    _
  $region29: #{decoder_forward.7} parent=0 // pred_fallthru
    _
  // Predicated region
  $region30: #{decoder_forward.7} parent=0 // pred_check
    _
  $region31: #{decoder_forward.7} parent=0 // pred_check_branch
    %438 = sbr.rel (0) target = $region33
  $region32: #{decoder_forward.7} parent=0 // pred_region
    _
  $region33: #{decoder_forward.7} parent=0 // pred_fallthru
    _
  // Predicated region
  $region34: #{decoder_forward.7} parent=0 // pred_check
    _
  $region35: #{decoder_forward.7} parent=0 // pred_check_branch
    %440 = sbr.rel (0) target = $region37
  $region36: #{decoder_forward.7} parent=0 // pred_region
    _
  $region37: #{decoder_forward.7} parent=0 // pred_fallthru
    _
  // Predicated region
  $region38: #{decoder_forward.7} parent=0 // pred_check
    _
  $region39: #{decoder_forward.7} parent=0 // pred_check_branch
    %442 = sbr.rel (0) target = $region41
  $region40: #{decoder_forward.7} parent=0 // pred_region
    _
  $region41: #{decoder_forward.7} parent=0 // pred_fallthru
    _

// kernel: decoder_forward.8
$region0: #{decoder_forward.8}
  #allocation0 [shape = 'u32[]', space=smem, size = 0x4, offset = 0x4, fixed_abs, tag = 'smem constant byte address 0x4 - core index']
  #allocation1 [shape = 'u32[144,128]{1,0:T(1,128)}', space=vmem, size = 0x12000, scoped, tag = 'internal scratch']
  %s0 = inlined_call_operand.vmem [shape: bf16[64,256], index: 0, kind: input, shape index: {}]
  %s1 = inlined_call_operand.vmem [shape: f32[1,256], index: 1, kind: input, shape index: {}]
  %s2 = inlined_call_operand.vmem [shape: f32[1,256], index: 2, kind: input, shape index: {}]
  %s3 = inlined_call_operand.vmem [shape: bf16[64,256], index: 3, kind: output, shape index: {}]
  %s4 = sld [smem:[#allocation0]]
  $region22: #{decoder_forward.8} parent=0
    _
  %s6 = ssub.s32 1, %s4
  %s7 = scalar_select 0, %s6, %s4
  // Predicated region
  $region2: #{decoder_forward.8} parent=0 // pred_check
    _
  $region3: #{decoder_forward.8} parent=0 // pred_check_branch
    %9 = sbr.rel (0) target = $region5
  $region4: #{decoder_forward.8} parent=0 // pred_region
    _
  $region5: #{decoder_forward.8} parent=0 // pred_fallthru
    _
  // Predicated region
  $region6: #{decoder_forward.8} parent=0 // pred_check
    _
  $region7: #{decoder_forward.8} parent=0 // pred_check_branch
    %11 = sbr.rel (0) target = $region9
  $region8: #{decoder_forward.8} parent=0 // pred_region
    _
  $region9: #{decoder_forward.8} parent=0 // pred_fallthru
    _
  // Predicated region
  $region10: #{decoder_forward.8} parent=0 // pred_check
    _
  $region11: #{decoder_forward.8} parent=0 // pred_check_branch
    %13 = sbr.rel (0) target = $region13
  $region12: #{decoder_forward.8} parent=0 // pred_region
    _
  $region13: #{decoder_forward.8} parent=0 // pred_fallthru
    _
  %v14 = vld [vmem:[%s0] sm:$0xff]
  %v15 = vld [vmem:[%s0 + $0x8] sm:$0xff]
  %v16 = vld [vmem:[%s0 + $0x10] sm:$0xff]
  %v17 = vld [vmem:[%s0 + $0x18] sm:$0xff]
  %v18 = vld [vmem:[%s0 + $0x20] sm:$0xff]
  %v19 = vld [vmem:[%s0 + $0x28] sm:$0xff]
  %v20 = vld [vmem:[%s0 + $0x30] sm:$0xff]
  %v21 = vld [vmem:[%s0 + $0x38] sm:$0xff]
  %v22 = vunpack.c.l.bf16 %v14
  %v23 = vunpack.c.h.bf16 %v14
  %v24 = vunpack.c.l.bf16 %v15
  %v25 = vunpack.c.h.bf16 %v15
  %v26 = vunpack.c.l.bf16 %v16
  %v27 = vunpack.c.h.bf16 %v16
  %v28 = vunpack.c.l.bf16 %v17
  %v29 = vunpack.c.h.bf16 %v17
  %v30 = vunpack.c.l.bf16 %v18
  %v31 = vunpack.c.h.bf16 %v18
  %v32 = vunpack.c.l.bf16 %v19
  %v33 = vunpack.c.h.bf16 %v19
  %v34 = vunpack.c.l.bf16 %v20
  %v35 = vunpack.c.h.bf16 %v20
  %v36 = vunpack.c.l.bf16 %v21
  %v37 = vunpack.c.h.bf16 %v21
  %v38 = vld [vmem:[%s1] sm:$0x3]
  %v40 = vlaneseq
  %v41 = vshrl.u32 %v40, 7
  %v42 = vsub.s32 0, %v41
  %v43 = vrot.slane %v38, %v42
  %v44 = vlaneseq
  %v45 = vshrl.u32 %v44, 7
  %v46 = vsub.s32 1, %v45
  %v47 = vrot.slane %v38, %v46
  %v50 = vmul.f32 %v22, %v43
  %v51 = vmul.f32 %v23, %v47
  %v52 = vmul.f32 %v24, %v43
  %v53 = vmul.f32 %v25, %v47
  %v54 = vmul.f32 %v26, %v43
  %v55 = vmul.f32 %v27, %v47
  %v56 = vmul.f32 %v28, %v43
  %v57 = vmul.f32 %v29, %v47
  %v58 = vmul.f32 %v30, %v43
  %v59 = vmul.f32 %v31, %v47
  %v60 = vmul.f32 %v32, %v43
  %v61 = vmul.f32 %v33, %v47
  %v62 = vmul.f32 %v34, %v43
  %v63 = vmul.f32 %v35, %v47
  %v64 = vmul.f32 %v36, %v43
  %v65 = vmul.f32 %v37, %v47
  %v66 = vld [vmem:[%s2] sm:$0x3]
  %v68 = vlaneseq
  %v69 = vshrl.u32 %v68, 7
  %v70 = vsub.s32 0, %v69
  %v71 = vrot.slane %v66, %v70
  %v72 = vlaneseq
  %v73 = vshrl.u32 %v72, 7
  %v74 = vsub.s32 1, %v73
  %v75 = vrot.slane %v66, %v74
  %v78 = vadd.f32 %v50, %v71
  %v79 = vadd.f32 %v51, %v75
  %v80 = vadd.f32 %v52, %v71
  %v81 = vadd.f32 %v53, %v75
  %v82 = vadd.f32 %v54, %v71
  %v83 = vadd.f32 %v55, %v75
  %v84 = vadd.f32 %v56, %v71
  %v85 = vadd.f32 %v57, %v75
  %v86 = vadd.f32 %v58, %v71
  %v87 = vadd.f32 %v59, %v75
  %v88 = vadd.f32 %v60, %v71
  %v89 = vadd.f32 %v61, %v75
  %v90 = vadd.f32 %v62, %v71
  %v91 = vadd.f32 %v63, %v75
  %v92 = vadd.f32 %v64, %v71
  %v93 = vadd.f32 %v65, %v75
  %v94 = vmax.f32 %v78, 0.0
  %v95 = vmax.f32 %v79, 0.0
  %v96 = vmax.f32 %v80, 0.0
  %v97 = vmax.f32 %v81, 0.0
  %v98 = vmax.f32 %v82, 0.0
  %v99 = vmax.f32 %v83, 0.0
  %v100 = vmax.f32 %v84, 0.0
  %v101 = vmax.f32 %v85, 0.0
  %v102 = vmax.f32 %v86, 0.0
  %v103 = vmax.f32 %v87, 0.0
  %v104 = vmax.f32 %v88, 0.0
  %v105 = vmax.f32 %v89, 0.0
  %v106 = vmax.f32 %v90, 0.0
  %v107 = vmax.f32 %v91, 0.0
  %v108 = vmax.f32 %v92, 0.0
  %v109 = vmax.f32 %v93, 0.0
  %v110 = vpack.c.bf16 %v96, %v94
  %v111 = vpack.c.bf16 %v97, %v95
  %v112 = vpack.c.bf16 %v100, %v98
  %v113 = vpack.c.bf16 %v101, %v99
  %v114 = vpack.c.bf16 %v104, %v102
  %v115 = vpack.c.bf16 %v105, %v103
  %v116 = vpack.c.bf16 %v108, %v106
  %v117 = vpack.c.bf16 %v109, %v107
  %v126 = vunpack.c.l.b16 %v110
  %v127 = vunpack.c.l.b16 %v111
  %v128 = vunpack.c.h.b16 %v110
  %v129 = vunpack.c.h.b16 %v111
  %v130 = vunpack.c.l.b16 %v112
  %v131 = vunpack.c.l.b16 %v113
  %v132 = vunpack.c.h.b16 %v112
  %v133 = vunpack.c.h.b16 %v113
  %v134 = vunpack.c.l.b16 %v114
  %v135 = vunpack.c.l.b16 %v115
  %v136 = vunpack.c.h.b16 %v114
  %v137 = vunpack.c.h.b16 %v115
  %v138 = vunpack.c.l.b16 %v116
  %v139 = vunpack.c.l.b16 %v117
  %v140 = vunpack.c.h.b16 %v116
  %v141 = vunpack.c.h.b16 %v117
  %v142 = vpack.c.b16 %v127, %v126
  %v143 = vpack.c.b16 %v129, %v128
  %v144 = vpack.c.b16 %v131, %v130
  %v145 = vpack.c.b16 %v133, %v132
  %v146 = vpack.c.b16 %v135, %v134
  %v147 = vpack.c.b16 %v137, %v136
  %v148 = vpack.c.b16 %v139, %v138
  %v149 = vpack.c.b16 %v141, %v140
  %158 = vst [vmem:[%s3] sm:$0xff] %v142
  %159 = vst [vmem:[%s3 + $0x8] sm:$0xff] %v143
  %160 = vst [vmem:[%s3 + $0x10] sm:$0xff] %v144
  %161 = vst [vmem:[%s3 + $0x18] sm:$0xff] %v145
  %162 = vst [vmem:[%s3 + $0x20] sm:$0xff] %v146
  %163 = vst [vmem:[%s3 + $0x28] sm:$0xff] %v147
  %164 = vst [vmem:[%s3 + $0x30] sm:$0xff] %v148
  %165 = vst [vmem:[%s3 + $0x38] sm:$0xff] %v149
  // Predicated region
  $region14: #{decoder_forward.8} parent=0 // pred_check
    _
  $region15: #{decoder_forward.8} parent=0 // pred_check_branch
    %167 = sbr.rel (0) target = $region17
  $region16: #{decoder_forward.8} parent=0 // pred_region
    _
  $region17: #{decoder_forward.8} parent=0 // pred_fallthru
    _
  // Predicated region
  $region18: #{decoder_forward.8} parent=0 // pred_check
    _
  $region19: #{decoder_forward.8} parent=0 // pred_check_branch
    %169 = sbr.rel (0) target = $region21
  $region20: #{decoder_forward.8} parent=0 // pred_region
    _
  $region21: #{decoder_forward.8} parent=0 // pred_fallthru
    _

// kernel: tile.40
$region0: #{tile.40}
  #allocation0 [shape = 's32[1]{0}', space=sflag, size = 0x4, scoped, tag = 'scoped memory for tile.40']
  %s0 = inlined_call_operand.vmem [shape: f32[8], index: 0, kind: input, shape index: {}]
  %s1 = inlined_call_operand.vmem [shape: f32[4,8], index: 1, kind: output, shape index: {}]
  // Predicated region
  $region2: #{tile.40} parent=0 // pred_check
    _
  $region3: #{tile.40} parent=0 // pred_check_branch
    %3 = sbr.rel (0) target = $region5
  $region4: #{tile.40} parent=0 // pred_region
    _
  $region5: #{tile.40} parent=0 // pred_fallthru
    _
  %v4 = vld [vmem:[%s0] ss:$0 sm:$0xff]
  %5 = vst [vmem:[%s1] sm:$0xf] %v4

// kernel: tile.41
$region0: #{tile.41}
  %s0 = inlined_call_operand.vmem [shape: f32[4,8], index: 0, kind: input, shape index: {}]
  %s1 = inlined_call_operand.vmem [shape: f32[1,32], index: 1, kind: output, shape index: {}]
  $region1: #{tile.41} parent=0
    #allocation0 [shape = 'u8[4096]{0}', space=vmem, size = 0x1000, scoped, tag = 'scoped mem for output reshape']
    #allocation1 [shape = 'u8[4096]{0}', space=vmem, size = 0x1000, scoped, tag = 'scoped mem for input reshape']
    %s3 = sshllo.u32 0, 4
    %v4 = vld [vmem:[%s0] sm:%s3]
    %5 = vst [vmem:[#allocation1] sm:%s3] %v4
    %v6 = vld [vmem:[#allocation1] sm:$0x1]
    %vm7 = vcmask 64512
    %8 = vst.msk [vmem:[#allocation0] sm:$0x1] %vm7, %v6
    %s9 = scalar_lea.vmem [#allocation1], 3
    %v10 = vld [vmem:[%s9] sm:$0x1]
    %11 = vrot.lane.b32.xlu0 %v10, 24
    %v12 = vpop.permute.xlu0 %11
    %vm13 = vcmask 261312
    %14 = vst.msk [vmem:[#allocation0] sm:$0x1] %vm13, %v12
    %s15 = scalar_lea.vmem [#allocation1], 2
    %v16 = vld [vmem:[%s15] sm:$0x1]
    %17 = vrot.lane.b32.xlu0 %v16, 16
    %v18 = vpop.permute.xlu0 %17
    %vm19 = vcmask 195712
    %20 = vst.msk [vmem:[#allocation0] sm:$0x1] %vm19, %v18
    %s21 = scalar_lea.vmem [#allocation1], 1
    %v22 = vld [vmem:[%s21] sm:$0x1]
    %23 = vrot.lane.b32.xlu0 %v22, 8
    %v24 = vpop.permute.xlu0 %23
    %vm25 = vcmask 130112
    %26 = vst.msk [vmem:[#allocation0] sm:$0x1] %vm25, %v24
    %s28 = sshllo.u32 0, 1
    %v30 = vld [vmem:[#allocation0] sm:%s28]
    %s31 = sshllo.u32 0, 1
    %32 = vst [vmem:[%s1] sm:%s31] %v30

// kernel: decoder_forward.9
$region0: #{decoder_forward.9}
  #allocation0 [shape = 'u32[]', space=smem, size = 0x4, offset = 0x4, fixed_abs, tag = 'smem constant byte address 0x4 - core index']
  #allocation1 [shape = 'u32[144,128]{1,0:T(1,128)}', space=vmem, size = 0x12000, scoped, tag = 'internal scratch']
  #allocation2 [shape = 'f32[64,128]{1,0:T(8,128)}', space=vmem, size = 0x8000, scoped, tag = 'scratch operand']
  %s0 = inlined_call_operand.vmem [shape: bf16[64,256], index: 0, kind: input, shape index: {}]
  %s1 = inlined_call_operand.vmem [shape: bf16[256,128], index: 1, kind: input, shape index: {}]
  %s2 = inlined_call_operand.vmem [shape: bf16[64,128], index: 2, kind: output, shape index: {0}]
  %s3 = inlined_call_operand.vmem [shape: f32[8,128], index: 3, kind: output, shape index: {1}]
  %s4 = inlined_call_operand.vmem [shape: f32[8,128], index: 4, kind: output, shape index: {2}]
  %5 = xla_tuple %s2, %s3, %s4
  %s6 = sld [smem:[#allocation0]]
  $region106: #{decoder_forward.9} parent=0
    _
  %s8 = ssub.s32 1, %s6
  %s9 = scalar_select 0, %s8, %s6
  $region1: #{decoder_forward.9} parent=0
    #allocation3 [shape = 'u8[32768]{0}', space=vmem, size = 0x8000, scoped, tag = 'input window, operand 0']
    loop: start=0, step=1, limit=4
    $region2: #{decoder_forward.9} parent=1 // loop_pre_header
      _
    $region3: #{decoder_forward.9} parent=1 // loop_header
      %s11 = sphi 0, %s15
      %p12 = scmp.ge.s32.totalorder %s11, 4
      %s18 = sphi 0, %s30
      %s19 = sphi 0, %s26
      %s20 = sphi 0, %s18
      %s21 = sphi 0, %s19
      %s22 = sphi 0, %s20
      %s23 = sphi 0, %s21
      %s35 = sphi 0, %s37
      %s38 = sphi 0, %s35
      %s39 = sphi 0, %s38
      %s55 = sphi 0, %s39
      %s61 = sphi 0, %s63
      %s64 = sphi 0, %s61
      %s65 = sphi 0, %s64
      %s81 = sphi 0, %s65
      %s87 = sphi 0, %s89
      %s90 = sphi 0, %s87
      %s91 = sphi 0, %s90
      %s107 = sphi 0, %s91
      %s113 = sphi 0, %s115
      %s116 = sphi 0, %s113
      %s117 = sphi 0, %s116
      %s133 = sphi 0, %s117
      %s139 = sphi 0, %s141
      %s142 = sphi 0, %s139
      %s143 = sphi 0, %s142
      %s159 = sphi 0, %s143
    $region4: #{decoder_forward.9} parent=1 // loop_header_branch
      %14 = sbr.rel (%p12) target = $region8
    $region5: #{decoder_forward.9} parent=1 // loop_body
      %s16 = ssub.s32 %s11, 1
      %s17 = ssub.s32 %s11, 2
      %s24 = sadd.s32 1, %s19
      %p25 = scmp.ge.s32.totalorder %s24, 2
      %s26 = scalar_select %p25, 0, %s24
      %s27 = sadd.s32 1, %s18
      %s28 = scalar_select %p25, %s27, %s18
      %p29 = scmp.ge.s32.totalorder %s28, 1
      %s30 = scalar_select %p29, 0, %s28
      %s31 = ssub.s32 %s18, %s30
      %s32 = ssub.s32 %s19, %s26
      %s33 = sor.u32 %s31, %s32
      %p34 = scmp.eq.s32.totalorder %s33, 0
      %s36 = sadd.s32 %s35, 1
      %s37 = scalar_select %p34, %s35, %s36
      %p40 = pneg %p34
      %p41 = scmp.eq.s32.totalorder %s11, 1
      %p42 = por %p40, %p41
      %p43 = scmp.ne.s32.totalorder %s35, %s38
      %p44 = scmp.eq.s32.totalorder %s11, 0
      %p45 = por %p43, %p44
      %p46 = scmp.ne.s32.totalorder %s35, %s38
      %p47 = scmp.eq.s32.totalorder %s16, 1
      %p48 = por %p46, %p47
      %p49 = scmp.ne.s32.totalorder %s38, %s39
      %p50 = scmp.eq.s32.totalorder %s16, 0
      %p51 = por %p49, %p50
      %p52 = scmp.ne.s32.totalorder %s38, %s39
      %p53 = scmp.eq.s32.totalorder %s17, 1
      %p54 = por %p52, %p53
      %p56 = scmp.ne.s32.totalorder %s39, %s55
      %p57 = scmp.eq.s32.totalorder %s17, 0
      %p58 = por %p56, %p57
      %s59 = ssub.s32 %s19, %s26
      %p60 = scmp.eq.s32.totalorder %s59, 0
      %s62 = sadd.s32 %s61, 1
      %s63 = scalar_select %p60, %s61, %s62
      %p66 = pneg %p60
      %p67 = scmp.eq.s32.totalorder %s11, 1
      %p68 = por %p66, %p67
      %p69 = scmp.ne.s32.totalorder %s61, %s64
      %p70 = scmp.eq.s32.totalorder %s11, 0
      %p71 = por %p69, %p70
      %p72 = scmp.ne.s32.totalorder %s61, %s64
      %p73 = scmp.eq.s32.totalorder %s16, 1
      %p74 = por %p72, %p73
      %p75 = scmp.ne.s32.totalorder %s64, %s65
      %p76 = scmp.eq.s32.totalorder %s16, 0
      %p77 = por %p75, %p76
      %p78 = scmp.ne.s32.totalorder %s64, %s65
      %p79 = scmp.eq.s32.totalorder %s17, 1
      %p80 = por %p78, %p79
      %p82 = scmp.ne.s32.totalorder %s65, %s81
      %p83 = scmp.eq.s32.totalorder %s17, 0
      %p84 = por %p82, %p83
      %s85 = ssub.s32 %s18, %s30
      %p86 = scmp.eq.s32.totalorder %s85, 0
      %s88 = sadd.s32 %s87, 1
      %s89 = scalar_select %p86, %s87, %s88
      %p92 = pneg %p86
      %p93 = scmp.eq.s32.totalorder %s11, 1
      %p94 = por %p92, %p93
      %p95 = scmp.ne.s32.totalorder %s87, %s90
      %p96 = scmp.eq.s32.totalorder %s11, 0
      %p97 = por %p95, %p96
      %p98 = scmp.ne.s32.totalorder %s87, %s90
      %p99 = scmp.eq.s32.totalorder %s16, 1
      %p100 = por %p98, %p99
      %p101 = scmp.ne.s32.totalorder %s90, %s91
      %p102 = scmp.eq.s32.totalorder %s16, 0
      %p103 = por %p101, %p102
      %p104 = scmp.ne.s32.totalorder %s90, %s91
      %p105 = scmp.eq.s32.totalorder %s17, 1
      %p106 = por %p104, %p105
      %p108 = scmp.ne.s32.totalorder %s91, %s107
      %p109 = scmp.eq.s32.totalorder %s17, 0
      %p110 = por %p108, %p109
      %s111 = ssub.s32 %s18, %s30
      %p112 = scmp.eq.s32.totalorder %s111, 0
      %s114 = sadd.s32 %s113, 1
      %s115 = scalar_select %p112, %s113, %s114
      %p118 = pneg %p112
      %p119 = scmp.eq.s32.totalorder %s11, 1
      %p120 = por %p118, %p119
      %p121 = scmp.ne.s32.totalorder %s113, %s116
      %p122 = scmp.eq.s32.totalorder %s11, 0
      %p123 = por %p121, %p122
      %p124 = scmp.ne.s32.totalorder %s113, %s116
      %p125 = scmp.eq.s32.totalorder %s16, 1
      %p126 = por %p124, %p125
      %p127 = scmp.ne.s32.totalorder %s116, %s117
      %p128 = scmp.eq.s32.totalorder %s16, 0
      %p129 = por %p127, %p128
      %p130 = scmp.ne.s32.totalorder %s116, %s117
      %p131 = scmp.eq.s32.totalorder %s17, 1
      %p132 = por %p130, %p131
      %p134 = scmp.ne.s32.totalorder %s117, %s133
      %p135 = scmp.eq.s32.totalorder %s17, 0
      %p136 = por %p134, %p135
      %s137 = ssub.s32 %s18, %s30
      %p138 = scmp.eq.s32.totalorder %s137, 0
      %s140 = sadd.s32 %s139, 1
      %s141 = scalar_select %p138, %s139, %s140
      %p144 = pneg %p138
      %p145 = scmp.eq.s32.totalorder %s11, 1
      %p146 = por %p144, %p145
      %p147 = scmp.ne.s32.totalorder %s139, %s142
      %p148 = scmp.eq.s32.totalorder %s11, 0
      %p149 = por %p147, %p148
      %p150 = scmp.ne.s32.totalorder %s139, %s142
      %p151 = scmp.eq.s32.totalorder %s16, 1
      %p152 = por %p150, %p151
      %p153 = scmp.ne.s32.totalorder %s142, %s143
      %p154 = scmp.eq.s32.totalorder %s16, 0
      %p155 = por %p153, %p154
      %p156 = scmp.ne.s32.totalorder %s142, %s143
      %p157 = scmp.eq.s32.totalorder %s17, 1
      %p158 = por %p156, %p157
      %p160 = scmp.ne.s32.totalorder %s143, %s159
      %p161 = scmp.eq.s32.totalorder %s17, 0
      %p162 = por %p160, %p161
      %p163 = scmp.le.s32.totalorder 1, %s11
      %p164 = scmp.lt.s32.totalorder %s11, 3
      %p165 = pnand %p163, %p164
      %p166 = pneg %p165
      // Predicated region
      $region9: #{decoder_forward.9} parent=5 // pred_check
        _
      $region10: #{decoder_forward.9} parent=5 // pred_check_branch
        %168 = sbr.rel (%p165) target = $region12
      $region11: #{decoder_forward.9} parent=5 // pred_region
        %s169 = ssub.s32 %s11, 1
      $region12: #{decoder_forward.9} parent=5 // pred_fallthru
        _
      %p170 = scmp.lt.s32.totalorder %s11, 2
      // Predicated region
      $region13: #{decoder_forward.9} parent=5 // pred_check
        %p171 = pneg %p170
      $region14: #{decoder_forward.9} parent=5 // pred_check_branch
        %173 = sbr.rel (%p171) target = $region16
      $region15: #{decoder_forward.9} parent=5 // pred_region
        // Predicated region
        $region17: #{decoder_forward.9} parent=15 // pred_check
          %p174 = pneg %p45
        $region18: #{decoder_forward.9} parent=15 // pred_check_branch
          %176 = sbr.rel (%p174) target = $region20
        $region19: #{decoder_forward.9} parent=15 // pred_region
          %s177 = sand.u32 %s35, 1
          %s178 = sand.u32 %s35, 1
          %s179 = smul.addr %s178, 32
          %s180 = scalar_lea.vmem [#allocation3], %s179
          %s181 = smul.u32 8, %s18
          %s182 = smul.addr %s181, 2
          %s183 = sadd.s32 %s19, %s182
          %s184 = smul.addr %s183, 4
          %s185 = scalar_lea.vmem %s0, %s184
          // Predicated region
          $region21: #{decoder_forward.9} parent=19 // pred_check
            _
          $region22: #{decoder_forward.9} parent=19 // pred_check_branch
            %187 = sbr.rel (0) target = $region24
          $region23: #{decoder_forward.9} parent=19 // pred_region
            // Predicated region
            $region25: #{decoder_forward.9} parent=23 // pred_check
              _
            $region26: #{decoder_forward.9} parent=23 // pred_check_branch
              %189 = sbr.rel target = $region28
            $region27: #{decoder_forward.9} parent=23 // pred_region
              // Predicated region
              $region40: #{decoder_forward.9} parent=27 // pred_check
                _
              $region41: #{decoder_forward.9} parent=27 // pred_check_branch
                %218 = sbr.rel (0) target = $region43
              $region42: #{decoder_forward.9} parent=27 // pred_region
                loop: start=0, step=1, limit=1
                $region44: #{decoder_forward.9} parent=42 // loop_pre_header
                  _
                $region45: #{decoder_forward.9} parent=42 // loop_header
                  %s220 = sphi 0, %s224
                  %p221 = scmp.ge.s32.totalorder %s220, 1
                  %s225 = sphi %s185, %s185
                  %s226 = sphi %s180, %s180
                $region46: #{decoder_forward.9} parent=42 // loop_header_branch
                  %223 = sbr.rel (%p221) target = $region50
                $region47: #{decoder_forward.9} parent=42 // loop_body
                  _
                $region48: #{decoder_forward.9} parent=42 // loop_footer
                  %s224 = sadd.s32 1, %s220
                $region49: #{decoder_forward.9} parent=42 // loop_footer_branch
                  %219 = sbr.rel target = $region45
                $region50: #{decoder_forward.9} parent=42 // loop_exit
                  _
                loop: start=0, step=1, limit=1
                $region51: #{decoder_forward.9} parent=42 // loop_pre_header
                  _
                $region52: #{decoder_forward.9} parent=42 // loop_header
                  %s229 = sphi 0, %s233
                  %p230 = scmp.ge.s32.totalorder %s229, 1
                  %s234 = sphi %s185, %s185
                  %s235 = sphi %s180, %s180
                $region53: #{decoder_forward.9} parent=42 // loop_header_branch
                  %232 = sbr.rel (%p230) target = $region57
                $region54: #{decoder_forward.9} parent=42 // loop_body
                  %v236 = vld [vmem:[%s234] sm:$0xf]
                  %237 = vst [vmem:[%s235] sm:$0xf] %v236
                  %v238 = vld [vmem:[%s234 + $0x8] sm:$0xf]
                  %239 = vst [vmem:[%s235 + $0x4] sm:$0xf] %v238
                  %v240 = vld [vmem:[%s234 + $0x10] sm:$0xf]
                  %241 = vst [vmem:[%s235 + $0x8] sm:$0xf] %v240
                  %v242 = vld [vmem:[%s234 + $0x18] sm:$0xf]
                  %243 = vst [vmem:[%s235 + $0xc] sm:$0xf] %v242
                  %v244 = vld [vmem:[%s234 + $0x20] sm:$0xf]
                  %245 = vst [vmem:[%s235 + $0x10] sm:$0xf] %v244
                  %v246 = vld [vmem:[%s234 + $0x28] sm:$0xf]
                  %247 = vst [vmem:[%s235 + $0x14] sm:$0xf] %v246
                  %v248 = vld [vmem:[%s234 + $0x30] sm:$0xf]
                  %249 = vst [vmem:[%s235 + $0x18] sm:$0xf] %v248
                  %v250 = vld [vmem:[%s234 + $0x38] sm:$0xf]
                  %251 = vst [vmem:[%s235 + $0x1c] sm:$0xf] %v250
                $region55: #{decoder_forward.9} parent=42 // loop_footer
                  %s233 = sadd.s32 1, %s229
                $region56: #{decoder_forward.9} parent=42 // loop_footer_branch
                  %228 = sbr.rel target = $region52
                $region57: #{decoder_forward.9} parent=42 // loop_exit
                  _
              $region43: #{decoder_forward.9} parent=27 // pred_fallthru
                _
            $region28: #{decoder_forward.9} parent=23 // pred_fallthru
              _
            // Predicated region
            $region29: #{decoder_forward.9} parent=23 // pred_check
              _
            $region30: #{decoder_forward.9} parent=23 // pred_check_branch
              %191 = sbr.rel (0) target = $region32
            $region31: #{decoder_forward.9} parent=23 // pred_region
              loop: start=0, step=1, limit=1
              $region33: #{decoder_forward.9} parent=31 // loop_pre_header
                _
              $region34: #{decoder_forward.9} parent=31 // loop_header
                %s194 = sphi 0, %s198
                %p195 = scmp.ge.s32.totalorder %s194, 1
                %s199 = sphi %s185, %s185
                %s200 = sphi %s180, %s180
              $region35: #{decoder_forward.9} parent=31 // loop_header_branch
                %197 = sbr.rel (%p195) target = $region39
              $region36: #{decoder_forward.9} parent=31 // loop_body
                %v201 = vld [vmem:[%s199] sm:$0xf]
                %202 = vst [vmem:[%s200] sm:$0xf] %v201
                %v203 = vld [vmem:[%s199 + $0x8] sm:$0xf]
                %204 = vst [vmem:[%s200 + $0x4] sm:$0xf] %v203
                %v205 = vld [vmem:[%s199 + $0x10] sm:$0xf]
                %206 = vst [vmem:[%s200 + $0x8] sm:$0xf] %v205
                %v207 = vld [vmem:[%s199 + $0x18] sm:$0xf]
                %208 = vst [vmem:[%s200 + $0xc] sm:$0xf] %v207
                %v209 = vld [vmem:[%s199 + $0x20] sm:$0xf]
                %210 = vst [vmem:[%s200 + $0x10] sm:$0xf] %v209
                %v211 = vld [vmem:[%s199 + $0x28] sm:$0xf]
                %212 = vst [vmem:[%s200 + $0x14] sm:$0xf] %v211
                %v213 = vld [vmem:[%s199 + $0x30] sm:$0xf]
                %214 = vst [vmem:[%s200 + $0x18] sm:$0xf] %v213
                %v215 = vld [vmem:[%s199 + $0x38] sm:$0xf]
                %216 = vst [vmem:[%s200 + $0x1c] sm:$0xf] %v215
              $region37: #{decoder_forward.9} parent=31 // loop_footer
                %s198 = sadd.s32 1, %s194
              $region38: #{decoder_forward.9} parent=31 // loop_footer_branch
                %193 = sbr.rel target = $region34
              $region39: #{decoder_forward.9} parent=31 // loop_exit
                _
            $region32: #{decoder_forward.9} parent=23 // pred_fallthru
              _
          $region24: #{decoder_forward.9} parent=19 // pred_fallthru
            _
          %252 = vnop
        $region20: #{decoder_forward.9} parent=15 // pred_fallthru
          _
        // Predicated region
        $region58: #{decoder_forward.9} parent=15 // pred_check
          %p253 = pneg %p71
        $region59: #{decoder_forward.9} parent=15 // pred_check_branch
          %255 = sbr.rel (%p253) target = $region61
        $region60: #{decoder_forward.9} parent=15 // pred_region
          %s256 = smul.u32 16, %s19
          %p257 = scmp.lt.s32.totalorder %s256, 31
          %s258 = scalar_select %p257, %s256, 31
          %s259 = smul.addr %s258, 4
          %s260 = scalar_lea.vmem %s1, %s259
          %s261 = smul.u32 16, %s19
        $region61: #{decoder_forward.9} parent=15 // pred_fallthru
          _
      $region16: #{decoder_forward.9} parent=5 // pred_fallthru
        _
      %p262 = scmp.le.s32.totalorder 1, %s11
      %p263 = scmp.lt.s32.totalorder %s11, 3
      %p264 = pnand %p262, %p263
      %p265 = pneg %p264
      // Predicated region
      $region62: #{decoder_forward.9} parent=5 // pred_check
        _
      $region63: #{decoder_forward.9} parent=5 // pred_check_branch
        %267 = sbr.rel (%p264) target = $region65
      $region64: #{decoder_forward.9} parent=5 // pred_region
        %s268 = ssub.s32 %s11, 1
        %s269 = sand.u32 %s38, 1
        %s270 = sand.u32 %s38, 1
        %s271 = smul.addr %s270, 32
        %s272 = scalar_lea.vmem [#allocation3], %s271
        // Predicated region
        $region66: #{decoder_forward.9} parent=64 // pred_check
          %p273 = pneg %p51
        $region67: #{decoder_forward.9} parent=64 // pred_check_branch
          %275 = sbr.rel (%p273) target = $region69
        $region68: #{decoder_forward.9} parent=64 // pred_region
          _
        $region69: #{decoder_forward.9} parent=64 // pred_fallthru
          _
        %s276 = sand.u32 %s38, 1
        %s277 = sand.u32 %s38, 1
        %s278 = smul.addr %s277, 32
        %s279 = scalar_lea.vmem [#allocation3], %s278
        %p280 = pneg %p51
        %p281 = pneg %p48
        %s282 = smul.u32 16, %s21
        %p283 = scmp.lt.s32.totalorder %s282, 31
        %s284 = scalar_select %p283, %s282, 31
        %s285 = smul.addr %s284, 4
        %s286 = scalar_lea.vmem %s1, %s285
        %p287 = pneg %p77
        %p288 = pneg %p74
        %p289 = pneg %p103
        %p290 = pneg %p100
        %s291 = smul.u32 8, %s20
        %p292 = scmp.lt.s32.totalorder %s291, 7
        %s293 = scalar_select %p292, %s291, 7
        %s294 = smul.addr %s293, 4
        %s295 = scalar_lea.vmem %s2, %s294
        %p296 = pneg %p129
        %p297 = pneg %p126
        %p298 = scmp.lt.s32.totalorder %s20, 0
        %s299 = scalar_select %p298, %s20, 0
        %s300 = smul.addr %s299, 8
        %s301 = scalar_lea.vmem %s3, %s300
        %p302 = pneg %p155
        %p303 = pneg %p152
        %p304 = scmp.lt.s32.totalorder %s20, 0
        %s305 = scalar_select %p304, %s20, 0
        %s306 = smul.addr %s305, 8
        %s307 = scalar_lea.vmem %s4, %s306
        %s308 = smul.u32 8, %s20
        %s309 = smul.u32 16, %s21
        %p310 = scmp.lt.s32.totalorder %s309, 31
        %s311 = scalar_select %p310, %s309, 31
        %s312 = smul.addr %s311, 4
        %s313 = scalar_lea.vmem %s1, %s312
        %s314 = smul.u32 16, %s21
        %s315 = smul.u32 8, %s20
        %p316 = scmp.lt.s32.totalorder %s315, 7
        %s317 = scalar_select %p316, %s315, 7
        %s318 = smul.addr %s317, 4
        %s319 = scalar_lea.vmem %s2, %s318
        %s320 = smul.u32 8, %s20
        %p321 = scmp.lt.s32.totalorder %s20, 0
        %s322 = scalar_select %p321, %s20, 0
        %s323 = smul.addr %s322, 8
        %s324 = scalar_lea.vmem %s3, %s323
        %p325 = scmp.lt.s32.totalorder %s20, 0
        %s326 = scalar_select %p325, %s20, 0
        %s327 = smul.addr %s326, 8
        %s328 = scalar_lea.vmem %s4, %s327
        %p330 = scmp.eq.s32.totalorder %s21, 0
        // Predicated region
        $region70: #{decoder_forward.9} parent=64 // pred_check
          %p331 = pneg %p330
        $region71: #{decoder_forward.9} parent=64 // pred_check_branch
          %333 = sbr.rel (%p331) target = $region73
        $region72: #{decoder_forward.9} parent=64 // pred_region
          %334 = vst [vmem:[#allocation2] sm:$0xff] 0.0
          %335 = vst [vmem:[#allocation2 + $0x8] sm:$0xff] 0.0
          %336 = vst [vmem:[#allocation2 + $0x10] sm:$0xff] 0.0
          %337 = vst [vmem:[#allocation2 + $0x18] sm:$0xff] 0.0
          %338 = vst [vmem:[#allocation2 + $0x20] sm:$0xff] 0.0
          %339 = vst [vmem:[#allocation2 + $0x28] sm:$0xff] 0.0
          %340 = vst [vmem:[#allocation2 + $0x30] sm:$0xff] 0.0
          %341 = vst [vmem:[#allocation2 + $0x38] sm:$0xff] 0.0
        $region73: #{decoder_forward.9} parent=64 // pred_fallthru
          _
        %v342 = vld [vmem:[#allocation2] sm:$0xff]
        %v343 = vld [vmem:[#allocation2 + $0x8] sm:$0xff]
        %v344 = vld [vmem:[#allocation2 + $0x10] sm:$0xff]
        %v345 = vld [vmem:[#allocation2 + $0x18] sm:$0xff]
        %v346 = vld [vmem:[#allocation2 + $0x20] sm:$0xff]
        %v347 = vld [vmem:[#allocation2 + $0x28] sm:$0xff]
        %v348 = vld [vmem:[#allocation2 + $0x30] sm:$0xff]
        %v349 = vld [vmem:[#allocation2 + $0x38] sm:$0xff]
        %v350 = vld [vmem:[%s272] sm:$0xf]
        %v351 = vld [vmem:[%s272 + $0x4] sm:$0xf]
        %v352 = vld [vmem:[%s272 + $0x8] sm:$0xf]
        %v353 = vld [vmem:[%s272 + $0xc] sm:$0xf]
        %v354 = vld [vmem:[%s272 + $0x10] sm:$0xf]
        %v355 = vld [vmem:[%s272 + $0x14] sm:$0xf]
        %v356 = vld [vmem:[%s272 + $0x18] sm:$0xf]
        %v357 = vld [vmem:[%s272 + $0x1c] sm:$0xf]
        %v358 = vld [vmem:[%s313] sm:$0xf]
        %v359 = vld [vmem:[%s313 + $0x4] sm:$0xf]
        %v360 = vld [vmem:[%s313 + $0x8] sm:$0xf]
        %v361 = vld [vmem:[%s313 + $0xc] sm:$0xf]
        %v362 = vld [vmem:[%s313 + $0x10] sm:$0xf]
        %v363 = vld [vmem:[%s313 + $0x14] sm:$0xf]
        %v364 = vld [vmem:[%s313 + $0x18] sm:$0xf]
        %v365 = vld [vmem:[%s313 + $0x1c] sm:$0xf]
        %v366 = vld [vmem:[%s313 + $0x20] sm:$0xf]
        %v367 = vld [vmem:[%s313 + $0x24] sm:$0xf]
        %v368 = vld [vmem:[%s313 + $0x28] sm:$0xf]
        %v369 = vld [vmem:[%s313 + $0x2c] sm:$0xf]
        %v370 = vld [vmem:[%s313 + $0x30] sm:$0xf]
        %v371 = vld [vmem:[%s313 + $0x34] sm:$0xf]
        %v372 = vld [vmem:[%s313 + $0x38] sm:$0xf]
        %v373 = vld [vmem:[%s313 + $0x3c] sm:$0xf]
        %v382 = vunpack.c.l.b16 %v350
        %v383 = vunpack.c.l.b16 %v351
        %v384 = vunpack.c.l.b16 %v352
        %v385 = vunpack.c.l.b16 %v353
        %v386 = vunpack.c.l.b16 %v354
        %v387 = vunpack.c.l.b16 %v355
        %v388 = vunpack.c.l.b16 %v356
        %v389 = vunpack.c.l.b16 %v357
        %v390 = vpack.c.b16 %v383, %v382
        %v391 = vpack.c.b16 %v385, %v384
        %v392 = vpack.c.b16 %v387, %v386
        %v393 = vpack.c.b16 %v389, %v388
        %v414 = vunpack.c.l.b16 %v358
        %v415 = vunpack.c.l.b16 %v359
        %v416 = vunpack.c.l.b16 %v360
        %v417 = vunpack.c.l.b16 %v361
        %v418 = vunpack.c.l.b16 %v362
        %v419 = vunpack.c.l.b16 %v363
        %v420 = vunpack.c.l.b16 %v364
        %v421 = vunpack.c.l.b16 %v365
        %v422 = vunpack.c.l.b16 %v366
        %v423 = vunpack.c.l.b16 %v367
        %v424 = vunpack.c.l.b16 %v368
        %v425 = vunpack.c.l.b16 %v369
        %v426 = vunpack.c.l.b16 %v370
        %v427 = vunpack.c.l.b16 %v371
        %v428 = vunpack.c.l.b16 %v372
        %v429 = vunpack.c.l.b16 %v373
        %v430 = vpack.c.b16 %v415, %v414
        %v431 = vpack.c.b16 %v417, %v416
        %v432 = vpack.c.b16 %v419, %v418
        %v433 = vpack.c.b16 %v421, %v420
        %v434 = vpack.c.b16 %v423, %v422
        %v435 = vpack.c.b16 %v425, %v424
        %v436 = vpack.c.b16 %v427, %v426
        %v437 = vpack.c.b16 %v429, %v428
        %446 = vmatprep.subr.bf16.mxu0 0
        %447 = vmatpush1.bf16.msra.mxu0 %v430
        %448 = vmatprep.subr.bf16.mxu0 0
        %449 = vmatpush1.bf16.msra.mxu0 %v431
        %450 = vmatprep.subr.bf16.mxu0 0
        %451 = vmatpush1.bf16.msra.mxu0 %v432
        %452 = vmatprep.subr.bf16.mxu0 0
        %453 = vmatpush1.bf16.msra.mxu0 %v433
        %454 = vmatprep.subr.bf16.mxu0 0
        %455 = vmatpush1.bf16.msra.mxu0 %v434
        %456 = vmatprep.subr.bf16.mxu0 0
        %457 = vmatpush1.bf16.msra.mxu0 %v435
        %458 = vmatprep.subr.bf16.mxu0 0
        %459 = vmatpush1.bf16.msra.mxu0 %v436
        %460 = vmatprep.subr.bf16.mxu0 0
        %461 = vmatpush1.bf16.msra.mxu0 %v437
        %462 = vmatprep.subr.bf16.mxu0 0
        %463 = vmatpush1.bf16.msra.mxu0 0
        %464 = vmatprep.subr.bf16.mxu0 0
        %465 = vmatpush1.bf16.msra.mxu0 0
        %466 = vmatprep.subr.bf16.mxu0 0
        %467 = vmatpush1.bf16.msra.mxu0 0
        %468 = vmatprep.subr.bf16.mxu0 0
        %469 = vmatpush1.bf16.msra.mxu0 0
        %470 = vmatprep.subr.bf16.mxu0 0
        %471 = vmatpush1.bf16.msra.mxu0 0
        %472 = vmatprep.subr.bf16.mxu0 0
        %473 = vmatpush1.bf16.msra.mxu0 0
        %474 = vmatprep.subr.bf16.mxu0 0
        %475 = vmatpush1.bf16.msra.mxu0 0
        %476 = vmatprep.subr.bf16.mxu0 0
        %477 = vmatpush1.bf16.msra.mxu0 0
        %478 = vmatprep.mubr.bf16.mxu0 0
        %479 = vmatmul.mubr.bf16.gmra.mrb[0].mxu0 %v390
        %v480 = vpop.f32.mrb[0].mxu0
        %v481 = vadd.f32 0.0, %v480
        %v482 = vpop.f32.mrb[0].mxu0
        %v483 = vpop.f32.mrb[0].mxu0
        %v484 = vadd.f32 0.0, %v483
        %v485 = vpop.f32.mrb[0].mxu0
        %486 = vmatprep.mubr.bf16.mxu0 0
        %487 = vmatmul.mubr.bf16.gmra.mrb[0].mxu0 %v391
        %v488 = vpop.f32.mrb[0].mxu0
        %v489 = vadd.f32 0.0, %v488
        %v490 = vpop.f32.mrb[0].mxu0
        %v491 = vpop.f32.mrb[0].mxu0
        %v492 = vadd.f32 0.0, %v491
        %v493 = vpop.f32.mrb[0].mxu0
        %494 = vmatprep.mubr.bf16.mxu0 0
        %495 = vmatmul.mubr.bf16.gmra.mrb[0].mxu0 %v392
        %v496 = vpop.f32.mrb[0].mxu0
        %v497 = vadd.f32 0.0, %v496
        %v498 = vpop.f32.mrb[0].mxu0
        %v499 = vpop.f32.mrb[0].mxu0
        %v500 = vadd.f32 0.0, %v499
        %v501 = vpop.f32.mrb[0].mxu0
        %502 = vmatprep.mubr.bf16.mxu0 0
        %503 = vmatmul.mubr.bf16.gmra.mrb[0].mxu0 %v393
        %v504 = vpop.f32.mrb[0].mxu0
        %v505 = vadd.f32 0.0, %v504
        %v506 = vpop.f32.mrb[0].mxu0
        %v507 = vpop.f32.mrb[0].mxu0
        %v508 = vadd.f32 0.0, %v507
        %v509 = vpop.f32.mrb[0].mxu0
        %510 = vdwg.mxu0
        %v511 = vadd.f32 %v342, %v481
        %v512 = vadd.f32 %v343, %v484
        %v513 = vadd.f32 %v344, %v489
        %v514 = vadd.f32 %v345, %v492
        %v515 = vadd.f32 %v346, %v497
        %v516 = vadd.f32 %v347, %v500
        %v517 = vadd.f32 %v348, %v505
        %v518 = vadd.f32 %v349, %v508
        %519 = vst [vmem:[#allocation2] sm:$0xff] %v511
        %520 = vst [vmem:[#allocation2 + $0x8] sm:$0xff] %v512
        %521 = vst [vmem:[#allocation2 + $0x10] sm:$0xff] %v513
        %522 = vst [vmem:[#allocation2 + $0x18] sm:$0xff] %v514
        %523 = vst [vmem:[#allocation2 + $0x20] sm:$0xff] %v515
        %524 = vst [vmem:[#allocation2 + $0x28] sm:$0xff] %v516
        %525 = vst [vmem:[#allocation2 + $0x30] sm:$0xff] %v517
        %526 = vst [vmem:[#allocation2 + $0x38] sm:$0xff] %v518
        %p527 = scmp.eq.s32.totalorder %s21, 1
        // Predicated region
        $region74: #{decoder_forward.9} parent=64 // pred_check
          %p528 = pneg %p527
        $region75: #{decoder_forward.9} parent=64 // pred_check_branch
          %530 = sbr.rel (%p528) target = $region77
        $region76: #{decoder_forward.9} parent=64 // pred_region
          %v531 = vld [vmem:[#allocation2] sm:$0xff]
          %v532 = vld [vmem:[#allocation2 + $0x8] sm:$0xff]
          %v533 = vld [vmem:[#allocation2 + $0x10] sm:$0xff]
          %v534 = vld [vmem:[#allocation2 + $0x18] sm:$0xff]
          %v535 = vld [vmem:[#allocation2 + $0x20] sm:$0xff]
          %v536 = vld [vmem:[#allocation2 + $0x28] sm:$0xff]
          %v537 = vld [vmem:[#allocation2 + $0x30] sm:$0xff]
          %v538 = vld [vmem:[#allocation2 + $0x38] sm:$0xff]
          %v539 = vpack.c.bf16 %v532, %v531
          %v540 = vpack.c.bf16 %v534, %v533
          %v541 = vpack.c.bf16 %v536, %v535
          %v542 = vpack.c.bf16 %v538, %v537
          %v547 = vunpack.c.l.b16 %v539
          %v548 = vunpack.c.h.b16 %v539
          %v549 = vunpack.c.l.b16 %v540
          %v550 = vunpack.c.h.b16 %v540
          %v551 = vunpack.c.l.b16 %v541
          %v552 = vunpack.c.h.b16 %v541
          %v553 = vunpack.c.l.b16 %v542
          %v554 = vunpack.c.h.b16 %v542
          %v555 = vpack.c.b16 %v547, %v547
          %v556 = vpack.c.b16 %v548, %v548
          %v557 = vpack.c.b16 %v549, %v549
          %v558 = vpack.c.b16 %v550, %v550
          %v559 = vpack.c.b16 %v551, %v551
          %v560 = vpack.c.b16 %v552, %v552
          %v561 = vpack.c.b16 %v553, %v553
          %v562 = vpack.c.b16 %v554, %v554
          %571 = vst [vmem:[%s319] sm:$0xf] %v555
          %572 = vst [vmem:[%s319 + $0x4] sm:$0xf] %v556
          %573 = vst [vmem:[%s319 + $0x8] sm:$0xf] %v557
          %574 = vst [vmem:[%s319 + $0xc] sm:$0xf] %v558
          %575 = vst [vmem:[%s319 + $0x10] sm:$0xf] %v559
          %576 = vst [vmem:[%s319 + $0x14] sm:$0xf] %v560
          %577 = vst [vmem:[%s319 + $0x18] sm:$0xf] %v561
          %578 = vst [vmem:[%s319 + $0x1c] sm:$0xf] %v562
          %v579 = vadd.f32 %v531, %v532
          %v580 = vadd.f32 %v579, %v533
          %v581 = vadd.f32 %v580, %v534
          %v582 = vadd.f32 %v581, %v535
          %v583 = vadd.f32 %v582, %v536
          %v584 = vadd.f32 %v583, %v537
          %v585 = vadd.f32 %v584, %v538
          %v586 = vrot.slane %v585, 4
          %v587 = vadd.f32 %v585, %v586
          %v588 = vrot.slane %v587, 2
          %v589 = vadd.f32 %v587, %v588
          %v590 = vrot.slane %v589, 1
          %v591 = vadd.f32 %v589, %v590
          %v592 = vmul.f32 %v531, %v531
          %v593 = vmul.f32 %v532, %v532
          %v594 = vmul.f32 %v533, %v533
          %v595 = vmul.f32 %v534, %v534
          %v596 = vmul.f32 %v535, %v535
          %v597 = vmul.f32 %v536, %v536
          %v598 = vmul.f32 %v537, %v537
          %v599 = vmul.f32 %v538, %v538
          %v600 = vadd.f32 %v592, %v593
          %v601 = vadd.f32 %v600, %v594
          %v602 = vadd.f32 %v601, %v595
          %v603 = vadd.f32 %v602, %v596
          %v604 = vadd.f32 %v603, %v597
          %v605 = vadd.f32 %v604, %v598
          %v606 = vadd.f32 %v605, %v599
          %v607 = vrot.slane %v606, 4
          %v608 = vadd.f32 %v606, %v607
          %v609 = vrot.slane %v608, 2
          %v610 = vadd.f32 %v608, %v609
          %v611 = vrot.slane %v610, 1
          %v612 = vadd.f32 %v610, %v611
          %613 = vst [vmem:[%s324] sm:$0xff] %v591
          %614 = vst [vmem:[%s328] sm:$0xff] %v612
        $region77: #{decoder_forward.9} parent=64 // pred_fallthru
          _
        %s615 = smul.u32 8, %s20
        %p616 = scmp.lt.s32.totalorder %s615, 7
        %s617 = scalar_select %p616, %s615, 7
        %s618 = smul.addr %s617, 4
        %s619 = scalar_lea.vmem %s2, %s618
        %p620 = scmp.lt.s32.totalorder %s20, 0
        %s621 = scalar_select %p620, %s20, 0
        %s622 = smul.addr %s621, 8
        %s623 = scalar_lea.vmem %s3, %s622
        %p624 = scmp.lt.s32.totalorder %s20, 0
        %s625 = scalar_select %p624, %s20, 0
        %s626 = smul.addr %s625, 8
        %s627 = scalar_lea.vmem %s4, %s626
        // Predicated region
        $region78: #{decoder_forward.9} parent=64 // pred_check
          %p628 = pneg %p100
        $region79: #{decoder_forward.9} parent=64 // pred_check_branch
          %630 = sbr.rel (%p628) target = $region81
        $region80: #{decoder_forward.9} parent=64 // pred_region
          %s631 = smul.u32 8, %s20
        $region81: #{decoder_forward.9} parent=64 // pred_fallthru
          _
        // Predicated region
        $region82: #{decoder_forward.9} parent=64 // pred_check
          %p632 = pneg %p126
        $region83: #{decoder_forward.9} parent=64 // pred_check_branch
          %634 = sbr.rel (%p632) target = $region85
        $region84: #{decoder_forward.9} parent=64 // pred_region
          _
        $region85: #{decoder_forward.9} parent=64 // pred_fallthru
          _
        // Predicated region
        $region86: #{decoder_forward.9} parent=64 // pred_check
          %p635 = pneg %p152
        $region87: #{decoder_forward.9} parent=64 // pred_check_branch
          %637 = sbr.rel (%p635) target = $region89
        $region88: #{decoder_forward.9} parent=64 // pred_region
          _
        $region89: #{decoder_forward.9} parent=64 // pred_fallthru
          _
        // Predicated region
        $region90: #{decoder_forward.9} parent=64 // pred_check
          %p638 = pneg %p100
        $region91: #{decoder_forward.9} parent=64 // pred_check_branch
          %640 = sbr.rel (%p638) target = $region93
        $region92: #{decoder_forward.9} parent=64 // pred_region
          %s641 = smul.u32 8, %s20
          %p642 = scmp.lt.s32.totalorder %s641, 7
          %s643 = scalar_select %p642, %s641, 7
          %s644 = smul.addr %s643, 4
          %s645 = scalar_lea.vmem %s2, %s644
        $region93: #{decoder_forward.9} parent=64 // pred_fallthru
          _
        // Predicated region
        $region94: #{decoder_forward.9} parent=64 // pred_check
          %p646 = pneg %p126
        $region95: #{decoder_forward.9} parent=64 // pred_check_branch
          %648 = sbr.rel (%p646) target = $region97
        $region96: #{decoder_forward.9} parent=64 // pred_region
          %p649 = scmp.lt.s32.totalorder %s20, 0
          %s650 = scalar_select %p649, %s20, 0
          %s651 = smul.addr %s650, 8
          %s652 = scalar_lea.vmem %s3, %s651
        $region97: #{decoder_forward.9} parent=64 // pred_fallthru
          _
        // Predicated region
        $region98: #{decoder_forward.9} parent=64 // pred_check
          %p653 = pneg %p152
        $region99: #{decoder_forward.9} parent=64 // pred_check_branch
          %655 = sbr.rel (%p653) target = $region101
        $region100: #{decoder_forward.9} parent=64 // pred_region
          %p656 = scmp.lt.s32.totalorder %s20, 0
          %s657 = scalar_select %p656, %s20, 0
          %s658 = smul.addr %s657, 8
          %s659 = scalar_lea.vmem %s4, %s658
        $region101: #{decoder_forward.9} parent=64 // pred_fallthru
          _
      $region65: #{decoder_forward.9} parent=5 // pred_fallthru
        _
      %p660 = scmp.le.s32.totalorder 2, %s11
      // Predicated region
      $region102: #{decoder_forward.9} parent=5 // pred_check
        %p661 = pneg %p660
      $region103: #{decoder_forward.9} parent=5 // pred_check_branch
        %663 = sbr.rel (%p661) target = $region105
      $region104: #{decoder_forward.9} parent=5 // pred_region
        %s664 = ssub.s32 %s11, 2
      $region105: #{decoder_forward.9} parent=5 // pred_fallthru
        _
    $region6: #{decoder_forward.9} parent=1 // loop_footer
      %s15 = sadd.s32 1, %s11
    $region7: #{decoder_forward.9} parent=1 // loop_footer_branch
      %10 = sbr.rel target = $region3
    $region8: #{decoder_forward.9} parent=1 // loop_exit
      _

// kernel: decoder_forward.10
$region0: #{decoder_forward.10}
  #allocation0 [shape = 'u32[]', space=smem, size = 0x4, offset = 0x4, fixed_abs, tag = 'smem constant byte address 0x4 - core index']
  #allocation1 [shape = 'u32[144,128]{1,0:T(1,128)}', space=vmem, size = 0x12000, scoped, tag = 'internal scratch']
  %s0 = inlined_call_operand.vmem [shape: bf16[64,128], index: 0, kind: input, shape index: {}]
  %s1 = inlined_call_operand.vmem [shape: f32[1,128], index: 1, kind: input, shape index: {}]
  %s2 = inlined_call_operand.vmem [shape: f32[1,128], index: 2, kind: input, shape index: {}]
  %s3 = inlined_call_operand.vmem [shape: bf16[64,128], index: 3, kind: output, shape index: {}]
  %s4 = sld [smem:[#allocation0]]
  $region22: #{decoder_forward.10} parent=0
    _
  %s6 = ssub.s32 1, %s4
  %s7 = scalar_select 0, %s6, %s4
  // Predicated region
  $region2: #{decoder_forward.10} parent=0 // pred_check
    _
  $region3: #{decoder_forward.10} parent=0 // pred_check_branch
    %9 = sbr.rel (0) target = $region5
  $region4: #{decoder_forward.10} parent=0 // pred_region
    _
  $region5: #{decoder_forward.10} parent=0 // pred_fallthru
    _
  // Predicated region
  $region6: #{decoder_forward.10} parent=0 // pred_check
    _
  $region7: #{decoder_forward.10} parent=0 // pred_check_branch
    %11 = sbr.rel (0) target = $region9
  $region8: #{decoder_forward.10} parent=0 // pred_region
    _
  $region9: #{decoder_forward.10} parent=0 // pred_fallthru
    _
  // Predicated region
  $region10: #{decoder_forward.10} parent=0 // pred_check
    _
  $region11: #{decoder_forward.10} parent=0 // pred_check_branch
    %13 = sbr.rel (0) target = $region13
  $region12: #{decoder_forward.10} parent=0 // pred_region
    _
  $region13: #{decoder_forward.10} parent=0 // pred_fallthru
    _
  %v14 = vld [vmem:[%s0] sm:$0xf]
  %v15 = vld [vmem:[%s0 + $0x4] sm:$0xf]
  %v16 = vld [vmem:[%s0 + $0x8] sm:$0xf]
  %v17 = vld [vmem:[%s0 + $0xc] sm:$0xf]
  %v18 = vld [vmem:[%s0 + $0x10] sm:$0xf]
  %v19 = vld [vmem:[%s0 + $0x14] sm:$0xf]
  %v20 = vld [vmem:[%s0 + $0x18] sm:$0xf]
  %v21 = vld [vmem:[%s0 + $0x1c] sm:$0xf]
  %v22 = vunpack.c.l.bf16 %v14
  %v23 = vunpack.c.l.bf16 %v15
  %v24 = vunpack.c.l.bf16 %v16
  %v25 = vunpack.c.l.bf16 %v17
  %v26 = vunpack.c.l.bf16 %v18
  %v27 = vunpack.c.l.bf16 %v19
  %v28 = vunpack.c.l.bf16 %v20
  %v29 = vunpack.c.l.bf16 %v21
  %v30 = vld [vmem:[%s1] sm:$0x1]
  %v32 = vlaneseq
  %v33 = vshrl.u32 %v32, 7
  %v34 = vsub.s32 0, %v33
  %v35 = vrot.slane %v30, %v34
  %v37 = vmul.f32 %v22, %v35
  %v38 = vmul.f32 %v23, %v35
  %v39 = vmul.f32 %v24, %v35
  %v40 = vmul.f32 %v25, %v35
  %v41 = vmul.f32 %v26, %v35
  %v42 = vmul.f32 %v27, %v35
  %v43 = vmul.f32 %v28, %v35
  %v44 = vmul.f32 %v29, %v35
  %v45 = vld [vmem:[%s2] sm:$0x1]
  %v47 = vlaneseq
  %v48 = vshrl.u32 %v47, 7
  %v49 = vsub.s32 0, %v48
  %v50 = vrot.slane %v45, %v49
  %v52 = vadd.f32 %v37, %v50
  %v53 = vadd.f32 %v38, %v50
  %v54 = vadd.f32 %v39, %v50
  %v55 = vadd.f32 %v40, %v50
  %v56 = vadd.f32 %v41, %v50
  %v57 = vadd.f32 %v42, %v50
  %v58 = vadd.f32 %v43, %v50
  %v59 = vadd.f32 %v44, %v50
  %v60 = vmax.f32 %v52, 0.0
  %v61 = vmax.f32 %v53, 0.0
  %v62 = vmax.f32 %v54, 0.0
  %v63 = vmax.f32 %v55, 0.0
  %v64 = vmax.f32 %v56, 0.0
  %v65 = vmax.f32 %v57, 0.0
  %v66 = vmax.f32 %v58, 0.0
  %v67 = vmax.f32 %v59, 0.0
  %v68 = vpack.c.bf16 %v61, %v60
  %v69 = vpack.c.bf16 %v63, %v62
  %v70 = vpack.c.bf16 %v65, %v64
  %v71 = vpack.c.bf16 %v67, %v66
  %v76 = vunpack.c.l.b16 %v68
  %v77 = vunpack.c.h.b16 %v68
  %v78 = vunpack.c.l.b16 %v69
  %v79 = vunpack.c.h.b16 %v69
  %v80 = vunpack.c.l.b16 %v70
  %v81 = vunpack.c.h.b16 %v70
  %v82 = vunpack.c.l.b16 %v71
  %v83 = vunpack.c.h.b16 %v71
  %v84 = vpack.c.b16 %v76, %v76
  %v85 = vpack.c.b16 %v77, %v77
  %v86 = vpack.c.b16 %v78, %v78
  %v87 = vpack.c.b16 %v79, %v79
  %v88 = vpack.c.b16 %v80, %v80
  %v89 = vpack.c.b16 %v81, %v81
  %v90 = vpack.c.b16 %v82, %v82
  %v91 = vpack.c.b16 %v83, %v83
  %100 = vst [vmem:[%s3] sm:$0xf] %v84
  %101 = vst [vmem:[%s3 + $0x4] sm:$0xf] %v85
  %102 = vst [vmem:[%s3 + $0x8] sm:$0xf] %v86
  %103 = vst [vmem:[%s3 + $0xc] sm:$0xf] %v87
  %104 = vst [vmem:[%s3 + $0x10] sm:$0xf] %v88
  %105 = vst [vmem:[%s3 + $0x14] sm:$0xf] %v89
  %106 = vst [vmem:[%s3 + $0x18] sm:$0xf] %v90
  %107 = vst [vmem:[%s3 + $0x1c] sm:$0xf] %v91
  // Predicated region
  $region14: #{decoder_forward.10} parent=0 // pred_check
    _
  $region15: #{decoder_forward.10} parent=0 // pred_check_branch
    %109 = sbr.rel (0) target = $region17
  $region16: #{decoder_forward.10} parent=0 // pred_region
    _
  $region17: #{decoder_forward.10} parent=0 // pred_fallthru
    _
  // Predicated region
  $region18: #{decoder_forward.10} parent=0 // pred_check
    _
  $region19: #{decoder_forward.10} parent=0 // pred_check_branch
    %111 = sbr.rel (0) target = $region21
  $region20: #{decoder_forward.10} parent=0 // pred_region
    _
  $region21: #{decoder_forward.10} parent=0 // pred_fallthru
    _

// kernel: decoder_forward.11
$region0: #{decoder_forward.11}
  #allocation0 [shape = 'u32[]', space=smem, size = 0x4, offset = 0x4, fixed_abs, tag = 'smem constant byte address 0x4 - core index']
  #allocation1 [shape = 'u32[144,128]{1,0:T(1,128)}', space=vmem, size = 0x12000, scoped, tag = 'internal scratch']
  #allocation2 [shape = 'f32[64,128]{1,0:T(8,128)}', space=vmem, size = 0x8000, scoped, tag = 'scratch operand']
  %s0 = inlined_call_operand.vmem [shape: bf16[128,128], index: 0, kind: input, shape index: {}]
  %s1 = inlined_call_operand.vmem [shape: bf16[128,128], index: 1, kind: input, shape index: {}]
  %s2 = inlined_call_operand.vmem [shape: bf16[128,128], index: 2, kind: output, shape index: {0}]
  %s3 = inlined_call_operand.vmem [shape: f32[16,128], index: 3, kind: output, shape index: {1}]
  %s4 = inlined_call_operand.vmem [shape: f32[16,128], index: 4, kind: output, shape index: {2}]
  %5 = xla_tuple %s2, %s3, %s4
  %s6 = sld [smem:[#allocation0]]
  $region65: #{decoder_forward.11} parent=0
    _
  %s8 = ssub.s32 1, %s6
  %s9 = scalar_select 0, %s8, %s6
  loop: start=0, step=1, limit=4
  $region2: #{decoder_forward.11} parent=0 // loop_pre_header
    _
  $region3: #{decoder_forward.11} parent=0 // loop_header
    %s11 = sphi 0, %s15
    %p12 = scmp.ge.s32.totalorder %s11, 4
    %s18 = sphi 0, %s30
    %s19 = sphi 0, %s26
    %s20 = sphi 0, %s18
    %s21 = sphi 0, %s19
    %s22 = sphi 0, %s20
    %s23 = sphi 0, %s21
    %s35 = sphi 0, %s37
    %s38 = sphi 0, %s35
    %s39 = sphi 0, %s38
    %s55 = sphi 0, %s39
    %s61 = sphi 0, %s63
    %s64 = sphi 0, %s61
    %s65 = sphi 0, %s64
    %s81 = sphi 0, %s65
    %s87 = sphi 0, %s89
    %s90 = sphi 0, %s87
    %s91 = sphi 0, %s90
    %s107 = sphi 0, %s91
    %s113 = sphi 0, %s115
    %s116 = sphi 0, %s113
    %s117 = sphi 0, %s116
    %s133 = sphi 0, %s117
    %s139 = sphi 0, %s141
    %s142 = sphi 0, %s139
    %s143 = sphi 0, %s142
    %s159 = sphi 0, %s143
  $region4: #{decoder_forward.11} parent=0 // loop_header_branch
    %14 = sbr.rel (%p12) target = $region8
  $region5: #{decoder_forward.11} parent=0 // loop_body
    %s16 = ssub.s32 %s11, 1
    %s17 = ssub.s32 %s11, 2
    %s24 = sadd.s32 1, %s19
    %p25 = scmp.ge.s32.totalorder %s24, 1
    %s26 = scalar_select %p25, 0, %s24
    %s27 = sadd.s32 1, %s18
    %s28 = scalar_select %p25, %s27, %s18
    %p29 = scmp.ge.s32.totalorder %s28, 2
    %s30 = scalar_select %p29, 0, %s28
    %s31 = ssub.s32 %s18, %s30
    %s32 = ssub.s32 %s19, %s26
    %s33 = sor.u32 %s31, %s32
    %p34 = scmp.eq.s32.totalorder %s33, 0
    %s36 = sadd.s32 %s35, 1
    %s37 = scalar_select %p34, %s35, %s36
    %p40 = pneg %p34
    %p41 = scmp.eq.s32.totalorder %s11, 1
    %p42 = por %p40, %p41
    %p43 = scmp.ne.s32.totalorder %s35, %s38
    %p44 = scmp.eq.s32.totalorder %s11, 0
    %p45 = por %p43, %p44
    %p46 = scmp.ne.s32.totalorder %s35, %s38
    %p47 = scmp.eq.s32.totalorder %s16, 1
    %p48 = por %p46, %p47
    %p49 = scmp.ne.s32.totalorder %s38, %s39
    %p50 = scmp.eq.s32.totalorder %s16, 0
    %p51 = por %p49, %p50
    %p52 = scmp.ne.s32.totalorder %s38, %s39
    %p53 = scmp.eq.s32.totalorder %s17, 1
    %p54 = por %p52, %p53
    %p56 = scmp.ne.s32.totalorder %s39, %s55
    %p57 = scmp.eq.s32.totalorder %s17, 0
    %p58 = por %p56, %p57
    %s59 = ssub.s32 %s19, %s26
    %p60 = scmp.eq.s32.totalorder %s59, 0
    %s62 = sadd.s32 %s61, 1
    %s63 = scalar_select %p60, %s61, %s62
    %p66 = pneg %p60
    %p67 = scmp.eq.s32.totalorder %s11, 1
    %p68 = por %p66, %p67
    %p69 = scmp.ne.s32.totalorder %s61, %s64
    %p70 = scmp.eq.s32.totalorder %s11, 0
    %p71 = por %p69, %p70
    %p72 = scmp.ne.s32.totalorder %s61, %s64
    %p73 = scmp.eq.s32.totalorder %s16, 1
    %p74 = por %p72, %p73
    %p75 = scmp.ne.s32.totalorder %s64, %s65
    %p76 = scmp.eq.s32.totalorder %s16, 0
    %p77 = por %p75, %p76
    %p78 = scmp.ne.s32.totalorder %s64, %s65
    %p79 = scmp.eq.s32.totalorder %s17, 1
    %p80 = por %p78, %p79
    %p82 = scmp.ne.s32.totalorder %s65, %s81
    %p83 = scmp.eq.s32.totalorder %s17, 0
    %p84 = por %p82, %p83
    %s85 = ssub.s32 %s18, %s30
    %p86 = scmp.eq.s32.totalorder %s85, 0
    %s88 = sadd.s32 %s87, 1
    %s89 = scalar_select %p86, %s87, %s88
    %p92 = pneg %p86
    %p93 = scmp.eq.s32.totalorder %s11, 1
    %p94 = por %p92, %p93
    %p95 = scmp.ne.s32.totalorder %s87, %s90
    %p96 = scmp.eq.s32.totalorder %s11, 0
    %p97 = por %p95, %p96
    %p98 = scmp.ne.s32.totalorder %s87, %s90
    %p99 = scmp.eq.s32.totalorder %s16, 1
    %p100 = por %p98, %p99
    %p101 = scmp.ne.s32.totalorder %s90, %s91
    %p102 = scmp.eq.s32.totalorder %s16, 0
    %p103 = por %p101, %p102
    %p104 = scmp.ne.s32.totalorder %s90, %s91
    %p105 = scmp.eq.s32.totalorder %s17, 1
    %p106 = por %p104, %p105
    %p108 = scmp.ne.s32.totalorder %s91, %s107
    %p109 = scmp.eq.s32.totalorder %s17, 0
    %p110 = por %p108, %p109
    %s111 = ssub.s32 %s18, %s30
    %p112 = scmp.eq.s32.totalorder %s111, 0
    %s114 = sadd.s32 %s113, 1
    %s115 = scalar_select %p112, %s113, %s114
    %p118 = pneg %p112
    %p119 = scmp.eq.s32.totalorder %s11, 1
    %p120 = por %p118, %p119
    %p121 = scmp.ne.s32.totalorder %s113, %s116
    %p122 = scmp.eq.s32.totalorder %s11, 0
    %p123 = por %p121, %p122
    %p124 = scmp.ne.s32.totalorder %s113, %s116
    %p125 = scmp.eq.s32.totalorder %s16, 1
    %p126 = por %p124, %p125
    %p127 = scmp.ne.s32.totalorder %s116, %s117
    %p128 = scmp.eq.s32.totalorder %s16, 0
    %p129 = por %p127, %p128
    %p130 = scmp.ne.s32.totalorder %s116, %s117
    %p131 = scmp.eq.s32.totalorder %s17, 1
    %p132 = por %p130, %p131
    %p134 = scmp.ne.s32.totalorder %s117, %s133
    %p135 = scmp.eq.s32.totalorder %s17, 0
    %p136 = por %p134, %p135
    %s137 = ssub.s32 %s18, %s30
    %p138 = scmp.eq.s32.totalorder %s137, 0
    %s140 = sadd.s32 %s139, 1
    %s141 = scalar_select %p138, %s139, %s140
    %p144 = pneg %p138
    %p145 = scmp.eq.s32.totalorder %s11, 1
    %p146 = por %p144, %p145
    %p147 = scmp.ne.s32.totalorder %s139, %s142
    %p148 = scmp.eq.s32.totalorder %s11, 0
    %p149 = por %p147, %p148
    %p150 = scmp.ne.s32.totalorder %s139, %s142
    %p151 = scmp.eq.s32.totalorder %s16, 1
    %p152 = por %p150, %p151
    %p153 = scmp.ne.s32.totalorder %s142, %s143
    %p154 = scmp.eq.s32.totalorder %s16, 0
    %p155 = por %p153, %p154
    %p156 = scmp.ne.s32.totalorder %s142, %s143
    %p157 = scmp.eq.s32.totalorder %s17, 1
    %p158 = por %p156, %p157
    %p160 = scmp.ne.s32.totalorder %s143, %s159
    %p161 = scmp.eq.s32.totalorder %s17, 0
    %p162 = por %p160, %p161
    %p163 = scmp.le.s32.totalorder 1, %s11
    %p164 = scmp.lt.s32.totalorder %s11, 3
    %p165 = pnand %p163, %p164
    %p166 = pneg %p165
    // Predicated region
    $region9: #{decoder_forward.11} parent=5 // pred_check
      _
    $region10: #{decoder_forward.11} parent=5 // pred_check_branch
      %168 = sbr.rel (%p165) target = $region12
    $region11: #{decoder_forward.11} parent=5 // pred_region
      %s169 = ssub.s32 %s11, 1
      // Predicated region
      $region13: #{decoder_forward.11} parent=11 // pred_check
        %p170 = pneg %p77
      $region14: #{decoder_forward.11} parent=11 // pred_check_branch
        %172 = sbr.rel (%p170) target = $region16
      $region15: #{decoder_forward.11} parent=11 // pred_region
        %s173 = smul.u32 16, %s21
        %p174 = scmp.lt.s32.totalorder %s173, 15
        %s175 = scalar_select %p174, %s173, 15
        %s176 = smul.addr %s175, 4
        %s177 = scalar_lea.vmem %s1, %s176
        %s178 = smul.u32 16, %s21
      $region16: #{decoder_forward.11} parent=11 // pred_fallthru
        _
    $region12: #{decoder_forward.11} parent=5 // pred_fallthru
      _
    %p179 = scmp.lt.s32.totalorder %s11, 2
    // Predicated region
    $region17: #{decoder_forward.11} parent=5 // pred_check
      %p180 = pneg %p179
    $region18: #{decoder_forward.11} parent=5 // pred_check_branch
      %182 = sbr.rel (%p180) target = $region20
    $region19: #{decoder_forward.11} parent=5 // pred_region
      // Predicated region
      $region21: #{decoder_forward.11} parent=19 // pred_check
        %p183 = pneg %p45
      $region22: #{decoder_forward.11} parent=19 // pred_check_branch
        %185 = sbr.rel (%p183) target = $region24
      $region23: #{decoder_forward.11} parent=19 // pred_region
        %s186 = smul.u32 8, %s18
        %p187 = scmp.lt.s32.totalorder %s186, 15
        %s188 = scalar_select %p187, %s186, 15
        %p189 = scmp.lt.s32.totalorder %s19, 0
        %s190 = scalar_select %p189, %s19, 0
        %s191 = sadd.s32 %s190, %s188
        %s192 = smul.addr %s191, 4
        %s193 = scalar_lea.vmem %s0, %s192
        %s194 = smul.u32 8, %s18
      $region24: #{decoder_forward.11} parent=19 // pred_fallthru
        _
    $region20: #{decoder_forward.11} parent=5 // pred_fallthru
      _
    %p195 = scmp.le.s32.totalorder 1, %s11
    %p196 = scmp.lt.s32.totalorder %s11, 3
    %p197 = pnand %p195, %p196
    %p198 = pneg %p197
    // Predicated region
    $region25: #{decoder_forward.11} parent=5 // pred_check
      _
    $region26: #{decoder_forward.11} parent=5 // pred_check_branch
      %200 = sbr.rel (%p197) target = $region28
    $region27: #{decoder_forward.11} parent=5 // pred_region
      %s201 = ssub.s32 %s11, 1
      %s202 = smul.u32 8, %s20
      %p203 = scmp.lt.s32.totalorder %s202, 15
      %s204 = scalar_select %p203, %s202, 15
      %p205 = scmp.lt.s32.totalorder %s21, 0
      %s206 = scalar_select %p205, %s21, 0
      %s207 = sadd.s32 %s206, %s204
      %s208 = smul.addr %s207, 4
      %s209 = scalar_lea.vmem %s0, %s208
      %p210 = pneg %p51
      %p211 = pneg %p48
      %s212 = smul.u32 16, %s21
      %p213 = scmp.lt.s32.totalorder %s212, 15
      %s214 = scalar_select %p213, %s212, 15
      %s215 = smul.addr %s214, 4
      %s216 = scalar_lea.vmem %s1, %s215
      %p217 = pneg %p77
      %p218 = pneg %p74
      %p219 = pneg %p103
      %p220 = pneg %p100
      %s221 = smul.u32 8, %s20
      %p222 = scmp.lt.s32.totalorder %s221, 15
      %s223 = scalar_select %p222, %s221, 15
      %s224 = smul.addr %s223, 4
      %s225 = scalar_lea.vmem %s2, %s224
      %p226 = pneg %p129
      %p227 = pneg %p126
      %p228 = scmp.lt.s32.totalorder %s20, 1
      %s229 = scalar_select %p228, %s20, 1
      %s230 = smul.addr %s229, 8
      %s231 = scalar_lea.vmem %s3, %s230
      %p232 = pneg %p155
      %p233 = pneg %p152
      %p234 = scmp.lt.s32.totalorder %s20, 1
      %s235 = scalar_select %p234, %s20, 1
      %s236 = smul.addr %s235, 8
      %s237 = scalar_lea.vmem %s4, %s236
      %s238 = smul.u32 8, %s20
      %p239 = scmp.lt.s32.totalorder %s238, 15
      %s240 = scalar_select %p239, %s238, 15
      %p241 = scmp.lt.s32.totalorder %s21, 0
      %s242 = scalar_select %p241, %s21, 0
      %s243 = sadd.s32 %s242, %s240
      %s244 = smul.addr %s243, 4
      %s245 = scalar_lea.vmem %s0, %s244
      %s246 = smul.u32 8, %s20
      %s247 = smul.u32 16, %s21
      %p248 = scmp.lt.s32.totalorder %s247, 15
      %s249 = scalar_select %p248, %s247, 15
      %s250 = smul.addr %s249, 4
      %s251 = scalar_lea.vmem %s1, %s250
      %s252 = smul.u32 16, %s21
      %s253 = smul.u32 8, %s20
      %p254 = scmp.lt.s32.totalorder %s253, 15
      %s255 = scalar_select %p254, %s253, 15
      %s256 = smul.addr %s255, 4
      %s257 = scalar_lea.vmem %s2, %s256
      %s258 = smul.u32 8, %s20
      %p259 = scmp.lt.s32.totalorder %s20, 1
      %s260 = scalar_select %p259, %s20, 1
      %s261 = smul.addr %s260, 8
      %s262 = scalar_lea.vmem %s3, %s261
      %p263 = scmp.lt.s32.totalorder %s20, 1
      %s264 = scalar_select %p263, %s20, 1
      %s265 = smul.addr %s264, 8
      %s266 = scalar_lea.vmem %s4, %s265
      %p268 = scmp.eq.s32.totalorder %s21, 0
      // Predicated region
      $region29: #{decoder_forward.11} parent=27 // pred_check
        %p269 = pneg %p268
      $region30: #{decoder_forward.11} parent=27 // pred_check_branch
        %271 = sbr.rel (%p269) target = $region32
      $region31: #{decoder_forward.11} parent=27 // pred_region
        %272 = vst [vmem:[#allocation2] sm:$0xff] 0.0
        %273 = vst [vmem:[#allocation2 + $0x8] sm:$0xff] 0.0
        %274 = vst [vmem:[#allocation2 + $0x10] sm:$0xff] 0.0
        %275 = vst [vmem:[#allocation2 + $0x18] sm:$0xff] 0.0
        %276 = vst [vmem:[#allocation2 + $0x20] sm:$0xff] 0.0
        %277 = vst [vmem:[#allocation2 + $0x28] sm:$0xff] 0.0
        %278 = vst [vmem:[#allocation2 + $0x30] sm:$0xff] 0.0
        %279 = vst [vmem:[#allocation2 + $0x38] sm:$0xff] 0.0
      $region32: #{decoder_forward.11} parent=27 // pred_fallthru
        _
      %v280 = vld [vmem:[#allocation2] sm:$0xff]
      %v281 = vld [vmem:[#allocation2 + $0x8] sm:$0xff]
      %v282 = vld [vmem:[#allocation2 + $0x10] sm:$0xff]
      %v283 = vld [vmem:[#allocation2 + $0x18] sm:$0xff]
      %v284 = vld [vmem:[#allocation2 + $0x20] sm:$0xff]
      %v285 = vld [vmem:[#allocation2 + $0x28] sm:$0xff]
      %v286 = vld [vmem:[#allocation2 + $0x30] sm:$0xff]
      %v287 = vld [vmem:[#allocation2 + $0x38] sm:$0xff]
      %v288 = vld [vmem:[%s245] sm:$0xf]
      %v289 = vld [vmem:[%s245 + $0x4] sm:$0xf]
      %v290 = vld [vmem:[%s245 + $0x8] sm:$0xf]
      %v291 = vld [vmem:[%s245 + $0xc] sm:$0xf]
      %v292 = vld [vmem:[%s245 + $0x10] sm:$0xf]
      %v293 = vld [vmem:[%s245 + $0x14] sm:$0xf]
      %v294 = vld [vmem:[%s245 + $0x18] sm:$0xf]
      %v295 = vld [vmem:[%s245 + $0x1c] sm:$0xf]
      %v296 = vld [vmem:[%s251] sm:$0xf]
      %v297 = vld [vmem:[%s251 + $0x4] sm:$0xf]
      %v298 = vld [vmem:[%s251 + $0x8] sm:$0xf]
      %v299 = vld [vmem:[%s251 + $0xc] sm:$0xf]
      %v300 = vld [vmem:[%s251 + $0x10] sm:$0xf]
      %v301 = vld [vmem:[%s251 + $0x14] sm:$0xf]
      %v302 = vld [vmem:[%s251 + $0x18] sm:$0xf]
      %v303 = vld [vmem:[%s251 + $0x1c] sm:$0xf]
      %v304 = vld [vmem:[%s251 + $0x20] sm:$0xf]
      %v305 = vld [vmem:[%s251 + $0x24] sm:$0xf]
      %v306 = vld [vmem:[%s251 + $0x28] sm:$0xf]
      %v307 = vld [vmem:[%s251 + $0x2c] sm:$0xf]
      %v308 = vld [vmem:[%s251 + $0x30] sm:$0xf]
      %v309 = vld [vmem:[%s251 + $0x34] sm:$0xf]
      %v310 = vld [vmem:[%s251 + $0x38] sm:$0xf]
      %v311 = vld [vmem:[%s251 + $0x3c] sm:$0xf]
      %v320 = vunpack.c.l.b16 %v288
      %v321 = vunpack.c.l.b16 %v289
      %v322 = vunpack.c.l.b16 %v290
      %v323 = vunpack.c.l.b16 %v291
      %v324 = vunpack.c.l.b16 %v292
      %v325 = vunpack.c.l.b16 %v293
      %v326 = vunpack.c.l.b16 %v294
      %v327 = vunpack.c.l.b16 %v295
      %v328 = vpack.c.b16 %v321, %v320
      %v329 = vpack.c.b16 %v323, %v322
      %v330 = vpack.c.b16 %v325, %v324
      %v331 = vpack.c.b16 %v327, %v326
      %v352 = vunpack.c.l.b16 %v296
      %v353 = vunpack.c.l.b16 %v297
      %v354 = vunpack.c.l.b16 %v298
      %v355 = vunpack.c.l.b16 %v299
      %v356 = vunpack.c.l.b16 %v300
      %v357 = vunpack.c.l.b16 %v301
      %v358 = vunpack.c.l.b16 %v302
      %v359 = vunpack.c.l.b16 %v303
      %v360 = vunpack.c.l.b16 %v304
      %v361 = vunpack.c.l.b16 %v305
      %v362 = vunpack.c.l.b16 %v306
      %v363 = vunpack.c.l.b16 %v307
      %v364 = vunpack.c.l.b16 %v308
      %v365 = vunpack.c.l.b16 %v309
      %v366 = vunpack.c.l.b16 %v310
      %v367 = vunpack.c.l.b16 %v311
      %v368 = vpack.c.b16 %v353, %v352
      %v369 = vpack.c.b16 %v355, %v354
      %v370 = vpack.c.b16 %v357, %v356
      %v371 = vpack.c.b16 %v359, %v358
      %v372 = vpack.c.b16 %v361, %v360
      %v373 = vpack.c.b16 %v363, %v362
      %v374 = vpack.c.b16 %v365, %v364
      %v375 = vpack.c.b16 %v367, %v366
      %384 = vmatprep.subr.bf16.mxu0 0
      %385 = vmatpush1.bf16.msra.mxu0 %v368
      %386 = vmatprep.subr.bf16.mxu0 0
      %387 = vmatpush1.bf16.msra.mxu0 %v369
      %388 = vmatprep.subr.bf16.mxu0 0
      %389 = vmatpush1.bf16.msra.mxu0 %v370
      %390 = vmatprep.subr.bf16.mxu0 0
      %391 = vmatpush1.bf16.msra.mxu0 %v371
      %392 = vmatprep.subr.bf16.mxu0 0
      %393 = vmatpush1.bf16.msra.mxu0 %v372
      %394 = vmatprep.subr.bf16.mxu0 0
      %395 = vmatpush1.bf16.msra.mxu0 %v373
      %396 = vmatprep.subr.bf16.mxu0 0
      %397 = vmatpush1.bf16.msra.mxu0 %v374
      %398 = vmatprep.subr.bf16.mxu0 0
      %399 = vmatpush1.bf16.msra.mxu0 %v375
      %400 = vmatprep.subr.bf16.mxu0 0
      %401 = vmatpush1.bf16.msra.mxu0 0
      %402 = vmatprep.subr.bf16.mxu0 0
      %403 = vmatpush1.bf16.msra.mxu0 0
      %404 = vmatprep.subr.bf16.mxu0 0
      %405 = vmatpush1.bf16.msra.mxu0 0
      %406 = vmatprep.subr.bf16.mxu0 0
      %407 = vmatpush1.bf16.msra.mxu0 0
      %408 = vmatprep.subr.bf16.mxu0 0
      %409 = vmatpush1.bf16.msra.mxu0 0
      %410 = vmatprep.subr.bf16.mxu0 0
      %411 = vmatpush1.bf16.msra.mxu0 0
      %412 = vmatprep.subr.bf16.mxu0 0
      %413 = vmatpush1.bf16.msra.mxu0 0
      %414 = vmatprep.subr.bf16.mxu0 0
      %415 = vmatpush1.bf16.msra.mxu0 0
      %416 = vmatprep.mubr.bf16.mxu0 0
      %417 = vmatmul.mubr.bf16.gmra.mrb[0].mxu0 %v328
      %v418 = vpop.f32.mrb[0].mxu0
      %v419 = vadd.f32 0.0, %v418
      %v420 = vpop.f32.mrb[0].mxu0
      %v421 = vpop.f32.mrb[0].mxu0
      %v422 = vadd.f32 0.0, %v421
      %v423 = vpop.f32.mrb[0].mxu0
      %424 = vmatprep.mubr.bf16.mxu0 0
      %425 = vmatmul.mubr.bf16.gmra.mrb[0].mxu0 %v329
      %v426 = vpop.f32.mrb[0].mxu0
      %v427 = vadd.f32 0.0, %v426
      %v428 = vpop.f32.mrb[0].mxu0
      %v429 = vpop.f32.mrb[0].mxu0
      %v430 = vadd.f32 0.0, %v429
      %v431 = vpop.f32.mrb[0].mxu0
      %432 = vmatprep.mubr.bf16.mxu0 0
      %433 = vmatmul.mubr.bf16.gmra.mrb[0].mxu0 %v330
      %v434 = vpop.f32.mrb[0].mxu0
      %v435 = vadd.f32 0.0, %v434
      %v436 = vpop.f32.mrb[0].mxu0
      %v437 = vpop.f32.mrb[0].mxu0
      %v438 = vadd.f32 0.0, %v437
      %v439 = vpop.f32.mrb[0].mxu0
      %440 = vmatprep.mubr.bf16.mxu0 0
      %441 = vmatmul.mubr.bf16.gmra.mrb[0].mxu0 %v331
      %v442 = vpop.f32.mrb[0].mxu0
      %v443 = vadd.f32 0.0, %v442
      %v444 = vpop.f32.mrb[0].mxu0
      %v445 = vpop.f32.mrb[0].mxu0
      %v446 = vadd.f32 0.0, %v445
      %v447 = vpop.f32.mrb[0].mxu0
      %448 = vdwg.mxu0
      %v449 = vadd.f32 %v280, %v419
      %v450 = vadd.f32 %v281, %v422
      %v451 = vadd.f32 %v282, %v427
      %v452 = vadd.f32 %v283, %v430
      %v453 = vadd.f32 %v284, %v435
      %v454 = vadd.f32 %v285, %v438
      %v455 = vadd.f32 %v286, %v443
      %v456 = vadd.f32 %v287, %v446
      %457 = vst [vmem:[#allocation2] sm:$0xff] %v449
      %458 = vst [vmem:[#allocation2 + $0x8] sm:$0xff] %v450
      %459 = vst [vmem:[#allocation2 + $0x10] sm:$0xff] %v451
      %460 = vst [vmem:[#allocation2 + $0x18] sm:$0xff] %v452
      %461 = vst [vmem:[#allocation2 + $0x20] sm:$0xff] %v453
      %462 = vst [vmem:[#allocation2 + $0x28] sm:$0xff] %v454
      %463 = vst [vmem:[#allocation2 + $0x30] sm:$0xff] %v455
      %464 = vst [vmem:[#allocation2 + $0x38] sm:$0xff] %v456
      // Predicated region
      $region33: #{decoder_forward.11} parent=27 // pred_check
        %p465 = pneg %p268
      $region34: #{decoder_forward.11} parent=27 // pred_check_branch
        %467 = sbr.rel (%p465) target = $region36
      $region35: #{decoder_forward.11} parent=27 // pred_region
        %v468 = vld [vmem:[#allocation2] sm:$0xff]
        %v469 = vld [vmem:[#allocation2 + $0x8] sm:$0xff]
        %v470 = vld [vmem:[#allocation2 + $0x10] sm:$0xff]
        %v471 = vld [vmem:[#allocation2 + $0x18] sm:$0xff]
        %v472 = vld [vmem:[#allocation2 + $0x20] sm:$0xff]
        %v473 = vld [vmem:[#allocation2 + $0x28] sm:$0xff]
        %v474 = vld [vmem:[#allocation2 + $0x30] sm:$0xff]
        %v475 = vld [vmem:[#allocation2 + $0x38] sm:$0xff]
        %v476 = vpack.c.bf16 %v469, %v468
        %v477 = vpack.c.bf16 %v471, %v470
        %v478 = vpack.c.bf16 %v473, %v472
        %v479 = vpack.c.bf16 %v475, %v474
        %v484 = vunpack.c.l.b16 %v476
        %v485 = vunpack.c.h.b16 %v476
        %v486 = vunpack.c.l.b16 %v477
        %v487 = vunpack.c.h.b16 %v477
        %v488 = vunpack.c.l.b16 %v478
        %v489 = vunpack.c.h.b16 %v478
        %v490 = vunpack.c.l.b16 %v479
        %v491 = vunpack.c.h.b16 %v479
        %v492 = vpack.c.b16 %v484, %v484
        %v493 = vpack.c.b16 %v485, %v485
        %v494 = vpack.c.b16 %v486, %v486
        %v495 = vpack.c.b16 %v487, %v487
        %v496 = vpack.c.b16 %v488, %v488
        %v497 = vpack.c.b16 %v489, %v489
        %v498 = vpack.c.b16 %v490, %v490
        %v499 = vpack.c.b16 %v491, %v491
        %508 = vst [vmem:[%s257] sm:$0xf] %v492
        %509 = vst [vmem:[%s257 + $0x4] sm:$0xf] %v493
        %510 = vst [vmem:[%s257 + $0x8] sm:$0xf] %v494
        %511 = vst [vmem:[%s257 + $0xc] sm:$0xf] %v495
        %512 = vst [vmem:[%s257 + $0x10] sm:$0xf] %v496
        %513 = vst [vmem:[%s257 + $0x14] sm:$0xf] %v497
        %514 = vst [vmem:[%s257 + $0x18] sm:$0xf] %v498
        %515 = vst [vmem:[%s257 + $0x1c] sm:$0xf] %v499
        %v516 = vadd.f32 %v468, %v469
        %v517 = vadd.f32 %v516, %v470
        %v518 = vadd.f32 %v517, %v471
        %v519 = vadd.f32 %v518, %v472
        %v520 = vadd.f32 %v519, %v473
        %v521 = vadd.f32 %v520, %v474
        %v522 = vadd.f32 %v521, %v475
        %v523 = vrot.slane %v522, 4
        %v524 = vadd.f32 %v522, %v523
        %v525 = vrot.slane %v524, 2
        %v526 = vadd.f32 %v524, %v525
        %v527 = vrot.slane %v526, 1
        %v528 = vadd.f32 %v526, %v527
        %v529 = vmul.f32 %v468, %v468
        %v530 = vmul.f32 %v469, %v469
        %v531 = vmul.f32 %v470, %v470
        %v532 = vmul.f32 %v471, %v471
        %v533 = vmul.f32 %v472, %v472
        %v534 = vmul.f32 %v473, %v473
        %v535 = vmul.f32 %v474, %v474
        %v536 = vmul.f32 %v475, %v475
        %v537 = vadd.f32 %v529, %v530
        %v538 = vadd.f32 %v537, %v531
        %v539 = vadd.f32 %v538, %v532
        %v540 = vadd.f32 %v539, %v533
        %v541 = vadd.f32 %v540, %v534
        %v542 = vadd.f32 %v541, %v535
        %v543 = vadd.f32 %v542, %v536
        %v544 = vrot.slane %v543, 4
        %v545 = vadd.f32 %v543, %v544
        %v546 = vrot.slane %v545, 2
        %v547 = vadd.f32 %v545, %v546
        %v548 = vrot.slane %v547, 1
        %v549 = vadd.f32 %v547, %v548
        %550 = vst [vmem:[%s262] sm:$0xff] %v528
        %551 = vst [vmem:[%s266] sm:$0xff] %v549
      $region36: #{decoder_forward.11} parent=27 // pred_fallthru
        _
      %s552 = smul.u32 8, %s20
      %p553 = scmp.lt.s32.totalorder %s552, 15
      %s554 = scalar_select %p553, %s552, 15
      %s555 = smul.addr %s554, 4
      %s556 = scalar_lea.vmem %s2, %s555
      %p557 = scmp.lt.s32.totalorder %s20, 1
      %s558 = scalar_select %p557, %s20, 1
      %s559 = smul.addr %s558, 8
      %s560 = scalar_lea.vmem %s3, %s559
      %p561 = scmp.lt.s32.totalorder %s20, 1
      %s562 = scalar_select %p561, %s20, 1
      %s563 = smul.addr %s562, 8
      %s564 = scalar_lea.vmem %s4, %s563
      // Predicated region
      $region37: #{decoder_forward.11} parent=27 // pred_check
        %p565 = pneg %p100
      $region38: #{decoder_forward.11} parent=27 // pred_check_branch
        %567 = sbr.rel (%p565) target = $region40
      $region39: #{decoder_forward.11} parent=27 // pred_region
        %s568 = smul.u32 8, %s20
      $region40: #{decoder_forward.11} parent=27 // pred_fallthru
        _
      // Predicated region
      $region41: #{decoder_forward.11} parent=27 // pred_check
        %p569 = pneg %p126
      $region42: #{decoder_forward.11} parent=27 // pred_check_branch
        %571 = sbr.rel (%p569) target = $region44
      $region43: #{decoder_forward.11} parent=27 // pred_region
        _
      $region44: #{decoder_forward.11} parent=27 // pred_fallthru
        _
      // Predicated region
      $region45: #{decoder_forward.11} parent=27 // pred_check
        %p572 = pneg %p152
      $region46: #{decoder_forward.11} parent=27 // pred_check_branch
        %574 = sbr.rel (%p572) target = $region48
      $region47: #{decoder_forward.11} parent=27 // pred_region
        _
      $region48: #{decoder_forward.11} parent=27 // pred_fallthru
        _
    $region28: #{decoder_forward.11} parent=5 // pred_fallthru
      _
    %p575 = scmp.le.s32.totalorder 2, %s11
    // Predicated region
    $region49: #{decoder_forward.11} parent=5 // pred_check
      %p576 = pneg %p575
    $region50: #{decoder_forward.11} parent=5 // pred_check_branch
      %578 = sbr.rel (%p576) target = $region52
    $region51: #{decoder_forward.11} parent=5 // pred_region
      %s579 = ssub.s32 %s11, 2
      // Predicated region
      $region53: #{decoder_forward.11} parent=51 // pred_check
        %p580 = pneg %p106
      $region54: #{decoder_forward.11} parent=51 // pred_check_branch
        %582 = sbr.rel (%p580) target = $region56
      $region55: #{decoder_forward.11} parent=51 // pred_region
        %s583 = smul.u32 8, %s22
        %p584 = scmp.lt.s32.totalorder %s583, 15
        %s585 = scalar_select %p584, %s583, 15
        %s586 = smul.addr %s585, 4
        %s587 = scalar_lea.vmem %s2, %s586
      $region56: #{decoder_forward.11} parent=51 // pred_fallthru
        _
      // Predicated region
      $region57: #{decoder_forward.11} parent=51 // pred_check
        %p588 = pneg %p132
      $region58: #{decoder_forward.11} parent=51 // pred_check_branch
        %590 = sbr.rel (%p588) target = $region60
      $region59: #{decoder_forward.11} parent=51 // pred_region
        %p591 = scmp.lt.s32.totalorder %s22, 1
        %s592 = scalar_select %p591, %s22, 1
        %s593 = smul.addr %s592, 8
        %s594 = scalar_lea.vmem %s3, %s593
      $region60: #{decoder_forward.11} parent=51 // pred_fallthru
        _
      // Predicated region
      $region61: #{decoder_forward.11} parent=51 // pred_check
        %p595 = pneg %p158
      $region62: #{decoder_forward.11} parent=51 // pred_check_branch
        %597 = sbr.rel (%p595) target = $region64
      $region63: #{decoder_forward.11} parent=51 // pred_region
        %p598 = scmp.lt.s32.totalorder %s22, 1
        %s599 = scalar_select %p598, %s22, 1
        %s600 = smul.addr %s599, 8
        %s601 = scalar_lea.vmem %s4, %s600
      $region64: #{decoder_forward.11} parent=51 // pred_fallthru
        _
    $region52: #{decoder_forward.11} parent=5 // pred_fallthru
      _
  $region6: #{decoder_forward.11} parent=0 // loop_footer
    %s15 = sadd.s32 1, %s11
  $region7: #{decoder_forward.11} parent=0 // loop_footer_branch
    %10 = sbr.rel target = $region3
  $region8: #{decoder_forward.11} parent=0 // loop_exit
    _

// kernel: decoder_forward.12
$region0: #{decoder_forward.12}
  #allocation0 [shape = 'u32[]', space=smem, size = 0x4, offset = 0x4, fixed_abs, tag = 'smem constant byte address 0x4 - core index']
  #allocation1 [shape = 'u32[144,128]{1,0:T(1,128)}', space=vmem, size = 0x12000, scoped, tag = 'internal scratch']
  %s0 = inlined_call_operand.vmem [shape: bf16[128,128], index: 0, kind: input, shape index: {}]
  %s1 = inlined_call_operand.vmem [shape: f32[1,128], index: 1, kind: input, shape index: {}]
  %s2 = inlined_call_operand.vmem [shape: f32[1,128], index: 2, kind: input, shape index: {}]
  %s3 = inlined_call_operand.vmem [shape: bf16[128,128], index: 3, kind: output, shape index: {}]
  %s4 = sld [smem:[#allocation0]]
  $region22: #{decoder_forward.12} parent=0
    _
  %s6 = ssub.s32 1, %s4
  %s7 = scalar_select 0, %s6, %s4
  // Predicated region
  $region2: #{decoder_forward.12} parent=0 // pred_check
    _
  $region3: #{decoder_forward.12} parent=0 // pred_check_branch
    %9 = sbr.rel (0) target = $region5
  $region4: #{decoder_forward.12} parent=0 // pred_region
    _
  $region5: #{decoder_forward.12} parent=0 // pred_fallthru
    _
  // Predicated region
  $region6: #{decoder_forward.12} parent=0 // pred_check
    _
  $region7: #{decoder_forward.12} parent=0 // pred_check_branch
    %11 = sbr.rel (0) target = $region9
  $region8: #{decoder_forward.12} parent=0 // pred_region
    _
  $region9: #{decoder_forward.12} parent=0 // pred_fallthru
    _
  // Predicated region
  $region10: #{decoder_forward.12} parent=0 // pred_check
    _
  $region11: #{decoder_forward.12} parent=0 // pred_check_branch
    %13 = sbr.rel (0) target = $region13
  $region12: #{decoder_forward.12} parent=0 // pred_region
    _
  $region13: #{decoder_forward.12} parent=0 // pred_fallthru
    _
  %v14 = vld [vmem:[%s0] sm:$0xf]
  %v15 = vld [vmem:[%s0 + $0x4] sm:$0xf]
  %v16 = vld [vmem:[%s0 + $0x8] sm:$0xf]
  %v17 = vld [vmem:[%s0 + $0xc] sm:$0xf]
  %v18 = vld [vmem:[%s0 + $0x10] sm:$0xf]
  %v19 = vld [vmem:[%s0 + $0x14] sm:$0xf]
  %v20 = vld [vmem:[%s0 + $0x18] sm:$0xf]
  %v21 = vld [vmem:[%s0 + $0x1c] sm:$0xf]
  %v22 = vld [vmem:[%s0 + $0x20] sm:$0xf]
  %v23 = vld [vmem:[%s0 + $0x24] sm:$0xf]
  %v24 = vld [vmem:[%s0 + $0x28] sm:$0xf]
  %v25 = vld [vmem:[%s0 + $0x2c] sm:$0xf]
  %v26 = vld [vmem:[%s0 + $0x30] sm:$0xf]
  %v27 = vld [vmem:[%s0 + $0x34] sm:$0xf]
  %v28 = vld [vmem:[%s0 + $0x38] sm:$0xf]
  %v29 = vld [vmem:[%s0 + $0x3c] sm:$0xf]
  %v30 = vunpack.c.l.bf16 %v14
  %v31 = vunpack.c.l.bf16 %v15
  %v32 = vunpack.c.l.bf16 %v16
  %v33 = vunpack.c.l.bf16 %v17
  %v34 = vunpack.c.l.bf16 %v18
  %v35 = vunpack.c.l.bf16 %v19
  %v36 = vunpack.c.l.bf16 %v20
  %v37 = vunpack.c.l.bf16 %v21
  %v38 = vunpack.c.l.bf16 %v22
  %v39 = vunpack.c.l.bf16 %v23
  %v40 = vunpack.c.l.bf16 %v24
  %v41 = vunpack.c.l.bf16 %v25
  %v42 = vunpack.c.l.bf16 %v26
  %v43 = vunpack.c.l.bf16 %v27
  %v44 = vunpack.c.l.bf16 %v28
  %v45 = vunpack.c.l.bf16 %v29
  %v46 = vld [vmem:[%s1] sm:$0x1]
  %v48 = vlaneseq
  %v49 = vshrl.u32 %v48, 7
  %v50 = vsub.s32 0, %v49
  %v51 = vrot.slane %v46, %v50
  %v53 = vmul.f32 %v30, %v51
  %v54 = vmul.f32 %v31, %v51
  %v55 = vmul.f32 %v32, %v51
  %v56 = vmul.f32 %v33, %v51
  %v57 = vmul.f32 %v34, %v51
  %v58 = vmul.f32 %v35, %v51
  %v59 = vmul.f32 %v36, %v51
  %v60 = vmul.f32 %v37, %v51
  %v61 = vmul.f32 %v38, %v51
  %v62 = vmul.f32 %v39, %v51
  %v63 = vmul.f32 %v40, %v51
  %v64 = vmul.f32 %v41, %v51
  %v65 = vmul.f32 %v42, %v51
  %v66 = vmul.f32 %v43, %v51
  %v67 = vmul.f32 %v44, %v51
  %v68 = vmul.f32 %v45, %v51
  %v69 = vld [vmem:[%s2] sm:$0x1]
  %v71 = vlaneseq
  %v72 = vshrl.u32 %v71, 7
  %v73 = vsub.s32 0, %v72
  %v74 = vrot.slane %v69, %v73
  %v76 = vadd.f32 %v53, %v74
  %v77 = vadd.f32 %v54, %v74
  %v78 = vadd.f32 %v55, %v74
  %v79 = vadd.f32 %v56, %v74
  %v80 = vadd.f32 %v57, %v74
  %v81 = vadd.f32 %v58, %v74
  %v82 = vadd.f32 %v59, %v74
  %v83 = vadd.f32 %v60, %v74
  %v84 = vadd.f32 %v61, %v74
  %v85 = vadd.f32 %v62, %v74
  %v86 = vadd.f32 %v63, %v74
  %v87 = vadd.f32 %v64, %v74
  %v88 = vadd.f32 %v65, %v74
  %v89 = vadd.f32 %v66, %v74
  %v90 = vadd.f32 %v67, %v74
  %v91 = vadd.f32 %v68, %v74
  %v92 = vmax.f32 %v76, 0.0
  %v93 = vmax.f32 %v77, 0.0
  %v94 = vmax.f32 %v78, 0.0
  %v95 = vmax.f32 %v79, 0.0
  %v96 = vmax.f32 %v80, 0.0
  %v97 = vmax.f32 %v81, 0.0
  %v98 = vmax.f32 %v82, 0.0
  %v99 = vmax.f32 %v83, 0.0
  %v100 = vmax.f32 %v84, 0.0
  %v101 = vmax.f32 %v85, 0.0
  %v102 = vmax.f32 %v86, 0.0
  %v103 = vmax.f32 %v87, 0.0
  %v104 = vmax.f32 %v88, 0.0
  %v105 = vmax.f32 %v89, 0.0
  %v106 = vmax.f32 %v90, 0.0
  %v107 = vmax.f32 %v91, 0.0
  %v108 = vpack.c.bf16 %v93, %v92
  %v109 = vpack.c.bf16 %v95, %v94
  %v110 = vpack.c.bf16 %v97, %v96
  %v111 = vpack.c.bf16 %v99, %v98
  %v112 = vpack.c.bf16 %v101, %v100
  %v113 = vpack.c.bf16 %v103, %v102
  %v114 = vpack.c.bf16 %v105, %v104
  %v115 = vpack.c.bf16 %v107, %v106
  %v124 = vunpack.c.l.b16 %v108
  %v125 = vunpack.c.h.b16 %v108
  %v126 = vunpack.c.l.b16 %v109
  %v127 = vunpack.c.h.b16 %v109
  %v128 = vunpack.c.l.b16 %v110
  %v129 = vunpack.c.h.b16 %v110
  %v130 = vunpack.c.l.b16 %v111
  %v131 = vunpack.c.h.b16 %v111
  %v132 = vunpack.c.l.b16 %v112
  %v133 = vunpack.c.h.b16 %v112
  %v134 = vunpack.c.l.b16 %v113
  %v135 = vunpack.c.h.b16 %v113
  %v136 = vunpack.c.l.b16 %v114
  %v137 = vunpack.c.h.b16 %v114
  %v138 = vunpack.c.l.b16 %v115
  %v139 = vunpack.c.h.b16 %v115
  %v140 = vpack.c.b16 %v124, %v124
  %v141 = vpack.c.b16 %v125, %v125
  %v142 = vpack.c.b16 %v126, %v126
  %v143 = vpack.c.b16 %v127, %v127
  %v144 = vpack.c.b16 %v128, %v128
  %v145 = vpack.c.b16 %v129, %v129
  %v146 = vpack.c.b16 %v130, %v130
  %v147 = vpack.c.b16 %v131, %v131
  %v148 = vpack.c.b16 %v132, %v132
  %v149 = vpack.c.b16 %v133, %v133
  %v150 = vpack.c.b16 %v134, %v134
  %v151 = vpack.c.b16 %v135, %v135
  %v152 = vpack.c.b16 %v136, %v136
  %v153 = vpack.c.b16 %v137, %v137
  %v154 = vpack.c.b16 %v138, %v138
  %v155 = vpack.c.b16 %v139, %v139
  %172 = vst [vmem:[%s3] sm:$0xf] %v140
  %173 = vst [vmem:[%s3 + $0x4] sm:$0xf] %v141
  %174 = vst [vmem:[%s3 + $0x8] sm:$0xf] %v142
  %175 = vst [vmem:[%s3 + $0xc] sm:$0xf] %v143
  %176 = vst [vmem:[%s3 + $0x10] sm:$0xf] %v144
  %177 = vst [vmem:[%s3 + $0x14] sm:$0xf] %v145
  %178 = vst [vmem:[%s3 + $0x18] sm:$0xf] %v146
  %179 = vst [vmem:[%s3 + $0x1c] sm:$0xf] %v147
  %180 = vst [vmem:[%s3 + $0x20] sm:$0xf] %v148
  %181 = vst [vmem:[%s3 + $0x24] sm:$0xf] %v149
  %182 = vst [vmem:[%s3 + $0x28] sm:$0xf] %v150
  %183 = vst [vmem:[%s3 + $0x2c] sm:$0xf] %v151
  %184 = vst [vmem:[%s3 + $0x30] sm:$0xf] %v152
  %185 = vst [vmem:[%s3 + $0x34] sm:$0xf] %v153
  %186 = vst [vmem:[%s3 + $0x38] sm:$0xf] %v154
  %187 = vst [vmem:[%s3 + $0x3c] sm:$0xf] %v155
  // Predicated region
  $region14: #{decoder_forward.12} parent=0 // pred_check
    _
  $region15: #{decoder_forward.12} parent=0 // pred_check_branch
    %189 = sbr.rel (0) target = $region17
  $region16: #{decoder_forward.12} parent=0 // pred_region
    _
  $region17: #{decoder_forward.12} parent=0 // pred_fallthru
    _
  // Predicated region
  $region18: #{decoder_forward.12} parent=0 // pred_check
    _
  $region19: #{decoder_forward.12} parent=0 // pred_check_branch
    %191 = sbr.rel (0) target = $region21
  $region20: #{decoder_forward.12} parent=0 // pred_region
    _
  $region21: #{decoder_forward.12} parent=0 // pred_fallthru
    _

// kernel: decoder_forward.13
$region0: #{decoder_forward.13}
  #allocation0 [shape = 'u32[]', space=smem, size = 0x4, offset = 0x4, fixed_abs, tag = 'smem constant byte address 0x4 - core index']
  #allocation1 [shape = 'u32[144,128]{1,0:T(1,128)}', space=vmem, size = 0x12000, scoped, tag = 'internal scratch']
  %s0 = inlined_call_operand.vmem [shape: bf16[128,128], index: 0, kind: input, shape index: {}]
  %s1 = inlined_call_operand.vmem [shape: bf16[128,128], index: 1, kind: input, shape index: {}]
  %s2 = inlined_call_operand.vmem [shape: bf16[128,128], index: 2, kind: output, shape index: {}]
  %s3 = sld [smem:[#allocation0]]
  $region41: #{decoder_forward.13} parent=0
    _
  %s5 = ssub.s32 1, %s3
  %s6 = scalar_select 0, %s5, %s3
  loop: start=0, step=1, limit=4
  $region2: #{decoder_forward.13} parent=0 // loop_pre_header
    _
  $region3: #{decoder_forward.13} parent=0 // loop_header
    %s8 = sphi 0, %s12
    %p9 = scmp.ge.s32.totalorder %s8, 4
    %s18 = sphi 0, %s20
    %s21 = sphi 0, %s18
    %s22 = sphi 0, %s21
    %s38 = sphi 0, %s22
    %s42 = sphi 0, %s42
    %s44 = sphi 0, %s42
    %s45 = sphi 0, %s44
    %s59 = sphi 0, %s45
    %s65 = sphi 0, %s67
    %s68 = sphi 0, %s65
    %s69 = sphi 0, %s68
    %s85 = sphi 0, %s69
  $region4: #{decoder_forward.13} parent=0 // loop_header_branch
    %11 = sbr.rel (%p9) target = $region8
  $region5: #{decoder_forward.13} parent=0 // loop_body
    %s13 = ssub.s32 %s8, 1
    %s14 = ssub.s32 %s8, 2
    %s15 = sadd.s32 %s8, 1
    %s16 = ssub.s32 %s8, %s15
    %p17 = scmp.eq.s32.totalorder %s16, 0
    %s19 = sadd.s32 %s18, 1
    %s20 = scalar_select %p17, %s18, %s19
    %p23 = pneg %p17
    %p24 = scmp.eq.s32.totalorder %s8, 1
    %p25 = por %p23, %p24
    %p26 = scmp.ne.s32.totalorder %s18, %s21
    %p27 = scmp.eq.s32.totalorder %s8, 0
    %p28 = por %p26, %p27
    %p29 = scmp.ne.s32.totalorder %s18, %s21
    %p30 = scmp.eq.s32.totalorder %s13, 1
    %p31 = por %p29, %p30
    %p32 = scmp.ne.s32.totalorder %s21, %s22
    %p33 = scmp.eq.s32.totalorder %s13, 0
    %p34 = por %p32, %p33
    %p35 = scmp.ne.s32.totalorder %s21, %s22
    %p36 = scmp.eq.s32.totalorder %s14, 1
    %p37 = por %p35, %p36
    %p39 = scmp.ne.s32.totalorder %s22, %s38
    %p40 = scmp.eq.s32.totalorder %s14, 0
    %p41 = por %p39, %p40
    %s43 = sadd.s32 %s42, 1
    %p46 = scmp.eq.s32.totalorder %s8, 1
    %p47 = scmp.ne.s32.totalorder %s42, %s44
    %p48 = scmp.eq.s32.totalorder %s8, 0
    %p49 = por %p47, %p48
    %p50 = scmp.ne.s32.totalorder %s42, %s44
    %p51 = scmp.eq.s32.totalorder %s13, 1
    %p52 = por %p50, %p51
    %p53 = scmp.ne.s32.totalorder %s44, %s45
    %p54 = scmp.eq.s32.totalorder %s13, 0
    %p55 = por %p53, %p54
    %p56 = scmp.ne.s32.totalorder %s44, %s45
    %p57 = scmp.eq.s32.totalorder %s14, 1
    %p58 = por %p56, %p57
    %p60 = scmp.ne.s32.totalorder %s45, %s59
    %p61 = scmp.eq.s32.totalorder %s14, 0
    %p62 = por %p60, %p61
    %s63 = ssub.s32 %s8, %s15
    %p64 = scmp.eq.s32.totalorder %s63, 0
    %s66 = sadd.s32 %s65, 1
    %s67 = scalar_select %p64, %s65, %s66
    %p70 = pneg %p64
    %p71 = scmp.eq.s32.totalorder %s8, 1
    %p72 = por %p70, %p71
    %p73 = scmp.ne.s32.totalorder %s65, %s68
    %p74 = scmp.eq.s32.totalorder %s8, 0
    %p75 = por %p73, %p74
    %p76 = scmp.ne.s32.totalorder %s65, %s68
    %p77 = scmp.eq.s32.totalorder %s13, 1
    %p78 = por %p76, %p77
    %p79 = scmp.ne.s32.totalorder %s68, %s69
    %p80 = scmp.eq.s32.totalorder %s13, 0
    %p81 = por %p79, %p80
    %p82 = scmp.ne.s32.totalorder %s68, %s69
    %p83 = scmp.eq.s32.totalorder %s14, 1
    %p84 = por %p82, %p83
    %p86 = scmp.ne.s32.totalorder %s69, %s85
    %p87 = scmp.eq.s32.totalorder %s14, 0
    %p88 = por %p86, %p87
    %p89 = scmp.le.s32.totalorder 1, %s8
    %p90 = scmp.lt.s32.totalorder %s8, 3
    %p91 = pnand %p89, %p90
    %p92 = pneg %p91
    // Predicated region
    $region9: #{decoder_forward.13} parent=5 // pred_check
      _
    $region10: #{decoder_forward.13} parent=5 // pred_check_branch
      %94 = sbr.rel (%p91) target = $region12
    $region11: #{decoder_forward.13} parent=5 // pred_region
      %s95 = ssub.s32 %s8, 1
      // Predicated region
      $region13: #{decoder_forward.13} parent=11 // pred_check
        %p96 = pneg %p55
      $region14: #{decoder_forward.13} parent=11 // pred_check_branch
        %98 = sbr.rel (%p96) target = $region16
      $region15: #{decoder_forward.13} parent=11 // pred_region
        _
      $region16: #{decoder_forward.13} parent=11 // pred_fallthru
        _
    $region12: #{decoder_forward.13} parent=5 // pred_fallthru
      _
    %p99 = scmp.lt.s32.totalorder %s8, 2
    // Predicated region
    $region17: #{decoder_forward.13} parent=5 // pred_check
      %p100 = pneg %p99
    $region18: #{decoder_forward.13} parent=5 // pred_check_branch
      %102 = sbr.rel (%p100) target = $region20
    $region19: #{decoder_forward.13} parent=5 // pred_region
      // Predicated region
      $region21: #{decoder_forward.13} parent=19 // pred_check
        %p103 = pneg %p28
      $region22: #{decoder_forward.13} parent=19 // pred_check_branch
        %105 = sbr.rel (%p103) target = $region24
      $region23: #{decoder_forward.13} parent=19 // pred_region
        %s106 = smul.u32 8, %s8
        %p107 = scmp.lt.s32.totalorder %s106, 15
        %s108 = scalar_select %p107, %s106, 15
        %s109 = smul.addr %s108, 4
        %s110 = scalar_lea.vmem %s0, %s109
        %s111 = smul.u32 8, %s8
      $region24: #{decoder_forward.13} parent=19 // pred_fallthru
        _
    $region20: #{decoder_forward.13} parent=5 // pred_fallthru
      _
    %p112 = scmp.le.s32.totalorder 1, %s8
    %p113 = scmp.lt.s32.totalorder %s8, 3
    %p114 = pnand %p112, %p113
    %p115 = pneg %p114
    // Predicated region
    $region25: #{decoder_forward.13} parent=5 // pred_check
      _
    $region26: #{decoder_forward.13} parent=5 // pred_check_branch
      %117 = sbr.rel (%p114) target = $region28
    $region27: #{decoder_forward.13} parent=5 // pred_region
      %s118 = ssub.s32 %s8, 1
      %s119 = smul.u32 8, %s13
      %p120 = scmp.lt.s32.totalorder %s119, 15
      %s121 = scalar_select %p120, %s119, 15
      %s122 = smul.addr %s121, 4
      %s123 = scalar_lea.vmem %s0, %s122
      %p124 = pneg %p34
      %p125 = pneg %p31
      %p126 = pneg %p55
      %p127 = pneg %p52
      %p128 = pneg %p81
      %p129 = pneg %p78
      %s130 = smul.u32 8, %s13
      %p131 = scmp.lt.s32.totalorder %s130, 15
      %s132 = scalar_select %p131, %s130, 15
      %s133 = smul.addr %s132, 4
      %s134 = scalar_lea.vmem %s2, %s133
      %s135 = smul.u32 8, %s13
      %p136 = scmp.lt.s32.totalorder %s135, 15
      %s137 = scalar_select %p136, %s135, 15
      %s138 = smul.addr %s137, 4
      %s139 = scalar_lea.vmem %s0, %s138
      %s140 = smul.u32 8, %s13
      %s141 = smul.u32 8, %s13
      %p142 = scmp.lt.s32.totalorder %s141, 15
      %s143 = scalar_select %p142, %s141, 15
      %s144 = smul.addr %s143, 4
      %s145 = scalar_lea.vmem %s2, %s144
      %s146 = smul.u32 8, %s13
      %v148 = vld [vmem:[%s139] sm:$0xf]
      %v149 = vld [vmem:[%s139 + $0x4] sm:$0xf]
      %v150 = vld [vmem:[%s139 + $0x8] sm:$0xf]
      %v151 = vld [vmem:[%s139 + $0xc] sm:$0xf]
      %v152 = vld [vmem:[%s139 + $0x10] sm:$0xf]
      %v153 = vld [vmem:[%s139 + $0x14] sm:$0xf]
      %v154 = vld [vmem:[%s139 + $0x18] sm:$0xf]
      %v155 = vld [vmem:[%s139 + $0x1c] sm:$0xf]
      %v156 = vld [vmem:[%s1] sm:$0xf]
      %v157 = vld [vmem:[%s1 + $0x4] sm:$0xf]
      %v158 = vld [vmem:[%s1 + $0x8] sm:$0xf]
      %v159 = vld [vmem:[%s1 + $0xc] sm:$0xf]
      %v160 = vld [vmem:[%s1 + $0x10] sm:$0xf]
      %v161 = vld [vmem:[%s1 + $0x14] sm:$0xf]
      %v162 = vld [vmem:[%s1 + $0x18] sm:$0xf]
      %v163 = vld [vmem:[%s1 + $0x1c] sm:$0xf]
      %v164 = vld [vmem:[%s1 + $0x20] sm:$0xf]
      %v165 = vld [vmem:[%s1 + $0x24] sm:$0xf]
      %v166 = vld [vmem:[%s1 + $0x28] sm:$0xf]
      %v167 = vld [vmem:[%s1 + $0x2c] sm:$0xf]
      %v168 = vld [vmem:[%s1 + $0x30] sm:$0xf]
      %v169 = vld [vmem:[%s1 + $0x34] sm:$0xf]
      %v170 = vld [vmem:[%s1 + $0x38] sm:$0xf]
      %v171 = vld [vmem:[%s1 + $0x3c] sm:$0xf]
      %v180 = vunpack.c.l.b16 %v148
      %v181 = vunpack.c.l.b16 %v149
      %v182 = vunpack.c.l.b16 %v150
      %v183 = vunpack.c.l.b16 %v151
      %v184 = vunpack.c.l.b16 %v152
      %v185 = vunpack.c.l.b16 %v153
      %v186 = vunpack.c.l.b16 %v154
      %v187 = vunpack.c.l.b16 %v155
      %v188 = vpack.c.b16 %v181, %v180
      %v189 = vpack.c.b16 %v183, %v182
      %v190 = vpack.c.b16 %v185, %v184
      %v191 = vpack.c.b16 %v187, %v186
      %v212 = vunpack.c.l.b16 %v156
      %v213 = vunpack.c.l.b16 %v157
      %v214 = vunpack.c.l.b16 %v158
      %v215 = vunpack.c.l.b16 %v159
      %v216 = vunpack.c.l.b16 %v160
      %v217 = vunpack.c.l.b16 %v161
      %v218 = vunpack.c.l.b16 %v162
      %v219 = vunpack.c.l.b16 %v163
      %v220 = vunpack.c.l.b16 %v164
      %v221 = vunpack.c.l.b16 %v165
      %v222 = vunpack.c.l.b16 %v166
      %v223 = vunpack.c.l.b16 %v167
      %v224 = vunpack.c.l.b16 %v168
      %v225 = vunpack.c.l.b16 %v169
      %v226 = vunpack.c.l.b16 %v170
      %v227 = vunpack.c.l.b16 %v171
      %v228 = vpack.c.b16 %v213, %v212
      %v229 = vpack.c.b16 %v215, %v214
      %v230 = vpack.c.b16 %v217, %v216
      %v231 = vpack.c.b16 %v219, %v218
      %v232 = vpack.c.b16 %v221, %v220
      %v233 = vpack.c.b16 %v223, %v222
      %v234 = vpack.c.b16 %v225, %v224
      %v235 = vpack.c.b16 %v227, %v226
      %244 = vmatprep.subr.bf16.mxu0 0
      %245 = vmatpush1.bf16.msra.mxu0 %v228
      %246 = vmatprep.subr.bf16.mxu0 0
      %247 = vmatpush1.bf16.msra.mxu0 %v229
      %248 = vmatprep.subr.bf16.mxu0 0
      %249 = vmatpush1.bf16.msra.mxu0 %v230
      %250 = vmatprep.subr.bf16.mxu0 0
      %251 = vmatpush1.bf16.msra.mxu0 %v231
      %252 = vmatprep.subr.bf16.mxu0 0
      %253 = vmatpush1.bf16.msra.mxu0 %v232
      %254 = vmatprep.subr.bf16.mxu0 0
      %255 = vmatpush1.bf16.msra.mxu0 %v233
      %256 = vmatprep.subr.bf16.mxu0 0
      %257 = vmatpush1.bf16.msra.mxu0 %v234
      %258 = vmatprep.subr.bf16.mxu0 0
      %259 = vmatpush1.bf16.msra.mxu0 %v235
      %260 = vmatprep.subr.bf16.mxu0 0
      %261 = vmatpush1.bf16.msra.mxu0 0
      %262 = vmatprep.subr.bf16.mxu0 0
      %263 = vmatpush1.bf16.msra.mxu0 0
      %264 = vmatprep.subr.bf16.mxu0 0
      %265 = vmatpush1.bf16.msra.mxu0 0
      %266 = vmatprep.subr.bf16.mxu0 0
      %267 = vmatpush1.bf16.msra.mxu0 0
      %268 = vmatprep.subr.bf16.mxu0 0
      %269 = vmatpush1.bf16.msra.mxu0 0
      %270 = vmatprep.subr.bf16.mxu0 0
      %271 = vmatpush1.bf16.msra.mxu0 0
      %272 = vmatprep.subr.bf16.mxu0 0
      %273 = vmatpush1.bf16.msra.mxu0 0
      %274 = vmatprep.subr.bf16.mxu0 0
      %275 = vmatpush1.bf16.msra.mxu0 0
      %276 = vmatprep.mubr.bf16.mxu0 0
      %277 = vmatmul.mubr.bf16.gmra.mrb[0].mxu0 %v188
      %v278 = vpop.f32.mrb[0].mxu0
      %v279 = vadd.f32 0.0, %v278
      %v280 = vpop.f32.mrb[0].mxu0
      %v281 = vpop.f32.mrb[0].mxu0
      %v282 = vadd.f32 0.0, %v281
      %v283 = vpop.f32.mrb[0].mxu0
      %284 = vmatprep.mubr.bf16.mxu0 0
      %285 = vmatmul.mubr.bf16.gmra.mrb[0].mxu0 %v189
      %v286 = vpop.f32.mrb[0].mxu0
      %v287 = vadd.f32 0.0, %v286
      %v288 = vpop.f32.mrb[0].mxu0
      %v289 = vpop.f32.mrb[0].mxu0
      %v290 = vadd.f32 0.0, %v289
      %v291 = vpop.f32.mrb[0].mxu0
      %292 = vmatprep.mubr.bf16.mxu0 0
      %293 = vmatmul.mubr.bf16.gmra.mrb[0].mxu0 %v190
      %v294 = vpop.f32.mrb[0].mxu0
      %v295 = vadd.f32 0.0, %v294
      %v296 = vpop.f32.mrb[0].mxu0
      %v297 = vpop.f32.mrb[0].mxu0
      %v298 = vadd.f32 0.0, %v297
      %v299 = vpop.f32.mrb[0].mxu0
      %300 = vmatprep.mubr.bf16.mxu0 0
      %301 = vmatmul.mubr.bf16.gmra.mrb[0].mxu0 %v191
      %v302 = vpop.f32.mrb[0].mxu0
      %v303 = vadd.f32 0.0, %v302
      %v304 = vpop.f32.mrb[0].mxu0
      %v305 = vpop.f32.mrb[0].mxu0
      %v306 = vadd.f32 0.0, %v305
      %v307 = vpop.f32.mrb[0].mxu0
      %308 = vdwg.mxu0
      %v309 = vtanh.pop %v279
      %v310 = vtanh.pop %v282
      %v311 = vtanh.pop %v287
      %v312 = vtanh.pop %v290
      %v313 = vtanh.pop %v295
      %v314 = vtanh.pop %v298
      %v315 = vtanh.pop %v303
      %v316 = vtanh.pop %v306
      %v317 = vpack.c.bf16 %v310, %v309
      %v318 = vpack.c.bf16 %v312, %v311
      %v319 = vpack.c.bf16 %v314, %v313
      %v320 = vpack.c.bf16 %v316, %v315
      %v325 = vunpack.c.l.b16 %v317
      %v326 = vunpack.c.h.b16 %v317
      %v327 = vunpack.c.l.b16 %v318
      %v328 = vunpack.c.h.b16 %v318
      %v329 = vunpack.c.l.b16 %v319
      %v330 = vunpack.c.h.b16 %v319
      %v331 = vunpack.c.l.b16 %v320
      %v332 = vunpack.c.h.b16 %v320
      %v333 = vpack.c.b16 %v325, %v325
      %v334 = vpack.c.b16 %v326, %v326
      %v335 = vpack.c.b16 %v327, %v327
      %v336 = vpack.c.b16 %v328, %v328
      %v337 = vpack.c.b16 %v329, %v329
      %v338 = vpack.c.b16 %v330, %v330
      %v339 = vpack.c.b16 %v331, %v331
      %v340 = vpack.c.b16 %v332, %v332
      %349 = vst [vmem:[%s145] sm:$0xf] %v333
      %350 = vst [vmem:[%s145 + $0x4] sm:$0xf] %v334
      %351 = vst [vmem:[%s145 + $0x8] sm:$0xf] %v335
      %352 = vst [vmem:[%s145 + $0xc] sm:$0xf] %v336
      %353 = vst [vmem:[%s145 + $0x10] sm:$0xf] %v337
      %354 = vst [vmem:[%s145 + $0x14] sm:$0xf] %v338
      %355 = vst [vmem:[%s145 + $0x18] sm:$0xf] %v339
      %356 = vst [vmem:[%s145 + $0x1c] sm:$0xf] %v340
      %s357 = smul.u32 8, %s13
      %p358 = scmp.lt.s32.totalorder %s357, 15
      %s359 = scalar_select %p358, %s357, 15
      %s360 = smul.addr %s359, 4
      %s361 = scalar_lea.vmem %s2, %s360
      // Predicated region
      $region29: #{decoder_forward.13} parent=27 // pred_check
        %p362 = pneg %p78
      $region30: #{decoder_forward.13} parent=27 // pred_check_branch
        %364 = sbr.rel (%p362) target = $region32
      $region31: #{decoder_forward.13} parent=27 // pred_region
        %s365 = smul.u32 8, %s13
      $region32: #{decoder_forward.13} parent=27 // pred_fallthru
        _
    $region28: #{decoder_forward.13} parent=5 // pred_fallthru
      _
    %p366 = scmp.le.s32.totalorder 2, %s8
    // Predicated region
    $region33: #{decoder_forward.13} parent=5 // pred_check
      %p367 = pneg %p366
    $region34: #{decoder_forward.13} parent=5 // pred_check_branch
      %369 = sbr.rel (%p367) target = $region36
    $region35: #{decoder_forward.13} parent=5 // pred_region
      %s370 = ssub.s32 %s8, 2
      // Predicated region
      $region37: #{decoder_forward.13} parent=35 // pred_check
        %p371 = pneg %p84
      $region38: #{decoder_forward.13} parent=35 // pred_check_branch
        %373 = sbr.rel (%p371) target = $region40
      $region39: #{decoder_forward.13} parent=35 // pred_region
        %s374 = smul.u32 8, %s14
        %p375 = scmp.lt.s32.totalorder %s374, 15
        %s376 = scalar_select %p375, %s374, 15
        %s377 = smul.addr %s376, 4
        %s378 = scalar_lea.vmem %s2, %s377
      $region40: #{decoder_forward.13} parent=35 // pred_fallthru
        _
    $region36: #{decoder_forward.13} parent=5 // pred_fallthru
      _
  $region6: #{decoder_forward.13} parent=0 // loop_footer
    %s12 = sadd.s32 1, %s8
  $region7: #{decoder_forward.13} parent=0 // loop_footer_branch
    %7 = sbr.rel target = $region3
  $region8: #{decoder_forward.13} parent=0 // loop_exit
    _

</llo_original>
